<compile_context>
chip_gen: v7x
topology: tpu7x:2x2x1
jax: 0.10.0
libtpu: 0.0.40
codegen_flags: <defaults>
</compile_context>

<pallas_src>
import functools

import jax
import jax.numpy as jnp
from jax.experimental import pallas as pl
from jax.experimental.pallas import tpu as pltpu


# ---------------------------------------------------------------------------
# Kernel
# ---------------------------------------------------------------------------
def _layernorm(y, g, b, eps=1e-5):
    # y: (M, E) f32, g/b: (1, E); PyTorch LayerNorm (biased variance, eps=1e-5)
    mu = jnp.mean(y, axis=-1, keepdims=True)
    d = y - mu
    var = jnp.mean(d * d, axis=-1, keepdims=True)
    return d * jax.lax.rsqrt(var + eps) * g + b


def _encoder_kernel(x_ref, pos_ref, mask_ref,
                    wq_ref, wk_ref, wv_ref,
                    bq_ref, bk_ref, bv_ref,
                    wo_ref, bo_ref,
                    ln1_g_ref, ln1_b_ref,
                    ff1_w_ref, ff1_b_ref,
                    ff2_w_ref, ff2_b_ref,
                    ln2_g_ref, ln2_b_ref,
                    o_ref, act_ref, *, heads):
    layer = pl.program_id(1)
    TB, L, E = act_ref.shape
    hd = E // heads
    scale = 1.0 / float(hd) ** 0.5

    # Layer 0: fuse the positional-embedding add (no standalone kernel / extra HBM round trip).
    @pl.when(layer == 0)
    def _():
        act_ref[...] = x_ref[...] + pos_ref[...]      # pos (TB,1,E) broadcasts over L

    x2 = act_ref[...].reshape(TB * L, E)              # f32 residual stream
    xb = x2.astype(jnp.bfloat16)                      # bf16 MXU operands, f32 accumulate

    # ---- multi-head self attention (q = k = v = x); full-E-width projections on the MXU ----
    q2 = (jnp.dot(xb, wq_ref[...], preferred_element_type=jnp.float32) + bq_ref[...]) * scale
    k2 = jnp.dot(xb, wk_ref[...], preferred_element_type=jnp.float32) + bk_ref[...]
    v2 = jnp.dot(xb, wv_ref[...], preferred_element_type=jnp.float32) + bv_ref[...]

    mask_b = jnp.broadcast_to(mask_ref[...][None, :, :], (TB, L, L))  # hoisted out of head loop
    ctx = []
    for h in range(heads):                            # static unroll; score/context are hd-wide by nature
        sl = slice(h * hd, (h + 1) * hd)
        qh = q2[:, sl].astype(jnp.bfloat16).reshape(TB, L, hd)
        kh = k2[:, sl].astype(jnp.bfloat16).reshape(TB, L, hd)
        vh = v2[:, sl].astype(jnp.bfloat16).reshape(TB, L, hd)
        s = jnp.einsum("bld,bmd->blm", qh, kh, preferred_element_type=jnp.float32)
        s = s + mask_b
        s = s - jnp.max(s, axis=-1, keepdims=True)
        p = jnp.exp(s)
        p = p * pl.reciprocal(jnp.sum(p, axis=-1, keepdims=True), approx=True)
        ah = jnp.einsum("blm,bmd->bld", p.astype(jnp.bfloat16), vh,
                        preferred_element_type=jnp.float32)
        ctx.append(ah.reshape(TB * L, hd))
    # concat heads -> single full-width output projection (no per-head accumulate into zeros)
    a2 = jnp.concatenate(ctx, axis=-1).astype(jnp.bfloat16)
    attn = jnp.dot(a2, wo_ref[...], preferred_element_type=jnp.float32) + bo_ref[...]

    # ---- residual + LayerNorm1 (dropout = identity), f32 elementwise ----
    y = _layernorm(attn + x2, ln1_g_ref[...], ln1_b_ref[...])

    # ---- feed forward: Linear -> ReLU -> Linear (bf16 MXU inputs, f32 accumulate) ----
    hidden = jnp.maximum(
        jnp.dot(y.astype(jnp.bfloat16), ff1_w_ref[...],
                preferred_element_type=jnp.float32) + ff1_b_ref[...], 0.0)
    ff = jnp.dot(hidden.astype(jnp.bfloat16), ff2_w_ref[...],
                 preferred_element_type=jnp.float32) + ff2_b_ref[...]

    # ---- residual + LayerNorm2 (dropout = identity) ----
    z = _layernorm(ff + y, ln2_g_ref[...], ln2_b_ref[...])
    act_ref[...] = z.reshape(TB, L, E)                # carry activation to the next layer step

    @pl.when(layer == pl.num_programs(1) - 1)
    def _():
        o_ref[...] = act_ref[...].astype(o_ref.dtype)


# ---------------------------------------------------------------------------
# Parameter init (deterministic, matches PyTorch module shapes), packed for the kernel:
# lane-dense, pre-transposed, bf16 weight matrices stacked along a leading layer axis.
# ---------------------------------------------------------------------------
def init_encoder_params(key, feature_num, heads, forward_expansion, num_layers, max_length):
    E = feature_num

    def nrm(k, shape, s=0.05):
        return s * jax.random.normal(k, shape, jnp.float32)

    keys = jax.random.split(key, 1 + num_layers)
    per_layer = {n: [] for n in ("wq", "wk", "wv", "bq", "bk", "bv", "wo", "bo",
                                 "ln1_g", "ln1_b", "ff1_w", "ff1_b", "ff2_w", "ff2_b",
                                 "ln2_g", "ln2_b")}
    for li in range(num_layers):
        lk = jax.random.split(keys[1 + li], 8)
        in_w = nrm(lk[0], (3 * E, E))                 # nn.MultiheadAttention.in_proj_weight
        in_b = nrm(lk[1], (3 * E,))                   # in_proj_bias
        out_w = nrm(lk[2], (E, E))                    # out_proj.weight
        out_b = nrm(lk[3], (E,))                      # out_proj.bias
        ff1_w = nrm(lk[4], (forward_expansion * E, E))
        ff1_b = nrm(lk[5], (forward_expansion * E,))
        ff2_w = nrm(lk[6], (E, forward_expansion * E))
        ff2_b = nrm(lk[7], (E,))

        per_layer["wq"].append(in_w[:E].T.astype(jnp.bfloat16))
        per_layer["wk"].append(in_w[E:2 * E].T.astype(jnp.bfloat16))
        per_layer["wv"].append(in_w[2 * E:].T.astype(jnp.bfloat16))
        per_layer["bq"].append(in_b[:E][None, :])
        per_layer["bk"].append(in_b[E:2 * E][None, :])
        per_layer["bv"].append(in_b[2 * E:][None, :])
        per_layer["wo"].append(out_w.T.astype(jnp.bfloat16))
        per_layer["bo"].append(out_b[None, :])
        per_layer["ln1_g"].append(jnp.ones((1, E), jnp.float32))
        per_layer["ln1_b"].append(jnp.zeros((1, E), jnp.float32))
        per_layer["ff1_w"].append(ff1_w.T.astype(jnp.bfloat16))
        per_layer["ff1_b"].append(ff1_b[None, :])
        per_layer["ff2_w"].append(ff2_w.T.astype(jnp.bfloat16))
        per_layer["ff2_b"].append(ff2_b[None, :])
        per_layer["ln2_g"].append(jnp.ones((1, E), jnp.float32))
        per_layer["ln2_b"].append(jnp.zeros((1, E), jnp.float32))

    params = {"pos_emb": nrm(keys[0], (max_length, E), 1.0)}   # nn.Embedding default ~ N(0,1)
    for k, v in per_layer.items():
        params[k] = jnp.stack(v, axis=0)              # (num_layers, ...)
    return params


# ---------------------------------------------------------------------------
# Wrapper
# ---------------------------------------------------------------------------
def _choose_batch_tile(B, L, E, ff_mult, heads, budget_bytes=8 << 20):
    # Crude per-(TB*L)-row f32 footprint: residual stream / q / k / v / context / y + ff hidden
    # + per-head scores.  Budget kept well under VMEM scoped limits even on v7x (64 MiB VMEM).
    per_row = 4 * (6 * E + ff_mult * E + heads * L)
    tb = 1
    for cand in range(1, B + 1):
        if B % cand == 0 and cand * L * per_row <= budget_bytes:
            tb = cand
    return tb


_WEIGHT_NAMES = ("wq", "wk", "wv", "bq", "bk", "bv", "wo", "bo",
                 "ln1_g", "ln1_b", "ff1_w", "ff1_b", "ff2_w", "ff2_b",
                 "ln2_g", "ln2_b")


def encoder_forward(x, mask, params, heads):
    D0, D1, E = x.shape
    assert E % heads == 0, "feature_num must be divisible by heads"
    L, B = D0, D1                                  # attended length = dim 0, attention batch = dim 1
    num_layers = params["wq"].shape[0]
    ff_mult = params["ff1_w"].shape[-1] // E

    # glue (done ONCE, not per layer): pos-table slice, f32 cast, single transpose in / out
    pos = params["pos_emb"][:B][:, None, :].astype(jnp.float32)     # (B, 1, E)
    xb = jnp.transpose(x.astype(jnp.float32), (1, 0, 2))            # (B, L, E) batch-major
    maskf = mask.astype(jnp.float32)                                # (L, L) additive attn_mask

    TB = _choose_batch_tile(B, L, E, ff_mult, heads)
    grid = (B // TB, num_layers)

    act_map = lambda b, l: (b, 0, 0)               # activation blocks: constant across layers
    const_map = lambda b, l: (0, 0)                # mask: single resident block
    w_map = lambda b, l: (l, 0, 0)                 # per-layer weight slice (pipelined DMA)

    in_specs = [
        pl.BlockSpec((TB, L, E), act_map),         # x
        pl.BlockSpec((TB, 1, E), act_map),         # pos
        pl.BlockSpec((L, L), const_map),           # mask
    ]
    for name in _WEIGHT_NAMES:
        s = params[name].shape
        in_specs.append(pl.BlockSpec((None, s[1], s[2]), w_map))

    kernel = functools.partial(_encoder_kernel, heads=heads)
    out = pl.pallas_call(
        kernel,
        out_shape=jax.ShapeDtypeStruct((B, L, E), jnp.float32),
        grid_spec=pltpu.PrefetchScalarGridSpec(
            num_scalar_prefetch=0,
            grid=grid,
            in_specs=in_specs,
            out_specs=pl.BlockSpec((TB, L, E), act_map),
            scratch_shapes=[pltpu.VMEM((TB, L, E), jnp.float32)],   # activation carried over layers
        ),
        compiler_params=pltpu.CompilerParams(
            dimension_semantics=("parallel", "arbitrary")),
    )(xb, pos, maskf, *[params[n] for n in _WEIGHT_NAMES])
    return jnp.transpose(out, (1, 0, 2))            # back to (N, seq_length, E)


# ---------------------------------------------------------------------------
if __name__ == "__main__":
    key = jax.random.PRNGKey(0)

    # Small shapes consistent with the module: x.shape = (N, seq_length, feature_num)
    D0, D1, E = 8, 4, 32
    heads = 4
    forward_expansion = 4
    num_layers = 2
    max_length = 16

    x = jax.random.normal(jax.random.fold_in(key, 100), (D0, D1, E), jnp.float32)
    # float attn_mask over the attended axis (dim 0 of x -> length D0); zeros = no masking
    mask = jnp.zeros((D0, D0), jnp.float32)

    params = init_encoder_params(jax.random.fold_in(key, 1),
                                 E, heads, forward_expansion, num_layers, max_length)

    out = encoder_forward(x, mask, params, heads)
    out = jax.block_until_ready(out)
    assert out.shape == (D0, D1, E) and out.dtype == jnp.float32
    assert bool(jnp.all(jnp.isfinite(out)))
    print("KERNEL_OK")
</pallas_src>

<mosaic_0001>
module attributes {stable_mosaic.version = 11 : i64} {
  func.func @_encoder_kernel(%arg0: i32, %arg1: i32, %arg2: memref<4x8x32xf32, #tpu.memory_space<vmem>>, %arg3: memref<4x1x32xf32, #tpu.memory_space<vmem>>, %arg4: memref<8x8xf32, #tpu.memory_space<vmem>>, %arg5: memref<1x32x32xbf16, #tpu.memory_space<vmem>>, %arg6: memref<1x32x32xbf16, #tpu.memory_space<vmem>>, %arg7: memref<1x32x32xbf16, #tpu.memory_space<vmem>>, %arg8: memref<1x1x32xf32, #tpu.memory_space<vmem>>, %arg9: memref<1x1x32xf32, #tpu.memory_space<vmem>>, %arg10: memref<1x1x32xf32, #tpu.memory_space<vmem>>, %arg11: memref<1x32x32xbf16, #tpu.memory_space<vmem>>, %arg12: memref<1x1x32xf32, #tpu.memory_space<vmem>>, %arg13: memref<1x1x32xf32, #tpu.memory_space<vmem>>, %arg14: memref<1x1x32xf32, #tpu.memory_space<vmem>>, %arg15: memref<1x32x128xbf16, #tpu.memory_space<vmem>>, %arg16: memref<1x1x128xf32, #tpu.memory_space<vmem>>, %arg17: memref<1x128x32xbf16, #tpu.memory_space<vmem>>, %arg18: memref<1x1x32xf32, #tpu.memory_space<vmem>>, %arg19: memref<1x1x32xf32, #tpu.memory_space<vmem>>, %arg20: memref<1x1x32xf32, #tpu.memory_space<vmem>>, %arg21: memref<4x8x32xf32, #tpu.memory_space<vmem>>, %arg22: memref<4x8x32xf32, #tpu.memory_space<vmem>>) attributes {dimension_semantics = [#tpu.dimension_semantics<parallel>, #tpu.dimension_semantics<arbitrary>], iteration_bounds = array<i64: 1, 2>, scalar_prefetch = 0 : i64, scratch_operands = 1 : i64, tpu.core_type = #tpu.core_type<tc>, window_params = [{transform_indices = @transform_0, window_bounds = array<i64: 4, 8, 32>}, {transform_indices = @transform_1, window_bounds = array<i64: 4, 1, 32>}, {pipeline_mode = #tpu.pipeline_mode<synchronous>, transform_indices = @transform_2, window_bounds = array<i64: 8, 8>}, {transform_indices = @transform_3, window_bounds = array<i64: 1, 32, 32>}, {transform_indices = @transform_4, window_bounds = array<i64: 1, 32, 32>}, {transform_indices = @transform_5, window_bounds = array<i64: 1, 32, 32>}, {transform_indices = @transform_6, window_bounds = array<i64: 1, 1, 32>}, {transform_indices = @transform_7, window_bounds = array<i64: 1, 1, 32>}, {transform_indices = @transform_8, window_bounds = array<i64: 1, 1, 32>}, {transform_indices = @transform_9, window_bounds = array<i64: 1, 32, 32>}, {transform_indices = @transform_10, window_bounds = array<i64: 1, 1, 32>}, {transform_indices = @transform_11, window_bounds = array<i64: 1, 1, 32>}, {transform_indices = @transform_12, window_bounds = array<i64: 1, 1, 32>}, {transform_indices = @transform_13, window_bounds = array<i64: 1, 32, 128>}, {transform_indices = @transform_14, window_bounds = array<i64: 1, 1, 128>}, {transform_indices = @transform_15, window_bounds = array<i64: 1, 128, 32>}, {transform_indices = @transform_16, window_bounds = array<i64: 1, 1, 32>}, {transform_indices = @transform_17, window_bounds = array<i64: 1, 1, 32>}, {transform_indices = @transform_18, window_bounds = array<i64: 1, 1, 32>}, {transform_indices = @transform_19, window_bounds = array<i64: 4, 8, 32>}]} {
    %c0_i32 = arith.constant 0 : i32
    %0 = arith.cmpi eq, %arg1, %c0_i32 : i32
    %1 = arith.extui %0 : i1 to i32
    %c0_i32_0 = arith.constant 0 : i32
    %2 = arith.cmpi ne, %1, %c0_i32_0 : i32
    scf.if %2 {
      %c0_90 = arith.constant 0 : index
      %c0_91 = arith.constant 0 : index
      %c0_92 = arith.constant 0 : index
      %211 = vector.load %arg2[%c0_90, %c0_91, %c0_92] : memref<4x8x32xf32, #tpu.memory_space<vmem>>, vector<4x8x32xf32>
      %c0_93 = arith.constant 0 : index
      %c0_94 = arith.constant 0 : index
      %c0_95 = arith.constant 0 : index
      %212 = vector.load %arg3[%c0_93, %c0_94, %c0_95] : memref<4x1x32xf32, #tpu.memory_space<vmem>>, vector<4x1x32xf32>
      %213 = vector.broadcast %212 : vector<4x1x32xf32> to vector<4x8x32xf32>
      %214 = arith.addf %211, %213 : vector<4x8x32xf32>
      %c0_96 = arith.constant 0 : index
      %c0_97 = arith.constant 0 : index
      %c0_98 = arith.constant 0 : index
      %215 = vector.load %arg22[%c0_96, %c0_97, %c0_98] : memref<4x8x32xf32, #tpu.memory_space<vmem>>, vector<4x8x32xf32>
      tpu.vector_store %arg22[%c0_96, %c0_97, %c0_98], %214 {strides = array<i32>} : memref<4x8x32xf32, #tpu.memory_space<vmem>>, vector<4x8x32xf32>,
    } else {
    }
    %c0 = arith.constant 0 : index
    %c0_1 = arith.constant 0 : index
    %c0_2 = arith.constant 0 : index
    %3 = vector.load %arg22[%c0, %c0_1, %c0_2] : memref<4x8x32xf32, #tpu.memory_space<vmem>>, vector<4x8x32xf32>
    %4 = vector.shape_cast %3 : vector<4x8x32xf32> to vector<32x32xf32>
    %5 = arith.truncf %4 : vector<32x32xf32> to vector<32x32xbf16>
    %c0_3 = arith.constant 0 : index
    %c0_4 = arith.constant 0 : index
    %c0_5 = arith.constant 0 : index
    %6 = vector.load %arg5[%c0_3, %c0_4, %c0_5] : memref<1x32x32xbf16, #tpu.memory_space<vmem>>, vector<1x32x32xbf16>
    %7 = vector.shape_cast %6 : vector<1x32x32xbf16> to vector<32x32xbf16>
    %cst = arith.constant dense<0.000000e+00> : vector<32x32xf32>
    %8 = tpu.matmul %5, %7, %cst {dimension_numbers = #tpu.dot_dimension_numbers<[1], [0], [0], [1], [0, 0, 1, 1], [], []>} : vector<32x32xbf16>, vector<32x32xbf16>, vector<32x32xf32> -> vector<32x32xf32>
    %c0_6 = arith.constant 0 : index
    %c0_7 = arith.constant 0 : index
    %c0_8 = arith.constant 0 : index
    %9 = vector.load %arg8[%c0_6, %c0_7, %c0_8] : memref<1x1x32xf32, #tpu.memory_space<vmem>>, vector<1x1x32xf32>
    %10 = vector.shape_cast %9 : vector<1x1x32xf32> to vector<1x32xf32>
    %11 = vector.broadcast %10 : vector<1x32xf32> to vector<32x32xf32>
    %12 = arith.addf %8, %11 : vector<32x32xf32>
    %cst_9 = arith.constant 0.353553385 : f32
    %13 = vector.broadcast %cst_9 : f32 to vector<32x32xf32>
    %14 = arith.mulf %12, %13 : vector<32x32xf32>
    %c0_10 = arith.constant 0 : index
    %c0_11 = arith.constant 0 : index
    %c0_12 = arith.constant 0 : index
    %15 = vector.load %arg6[%c0_10, %c0_11, %c0_12] : memref<1x32x32xbf16, #tpu.memory_space<vmem>>, vector<1x32x32xbf16>
    %16 = vector.shape_cast %15 : vector<1x32x32xbf16> to vector<32x32xbf16>
    %cst_13 = arith.constant dense<0.000000e+00> : vector<32x32xf32>
    %17 = tpu.matmul %5, %16, %cst_13 {dimension_numbers = #tpu.dot_dimension_numbers<[1], [0], [0], [1], [0, 0, 1, 1], [], []>} : vector<32x32xbf16>, vector<32x32xbf16>, vector<32x32xf32> -> vector<32x32xf32>
    %c0_14 = arith.constant 0 : index
    %c0_15 = arith.constant 0 : index
    %c0_16 = arith.constant 0 : index
    %18 = vector.load %arg9[%c0_14, %c0_15, %c0_16] : memref<1x1x32xf32, #tpu.memory_space<vmem>>, vector<1x1x32xf32>
    %19 = vector.shape_cast %18 : vector<1x1x32xf32> to vector<1x32xf32>
    %20 = vector.broadcast %19 : vector<1x32xf32> to vector<32x32xf32>
    %21 = arith.addf %17, %20 : vector<32x32xf32>
    %c0_17 = arith.constant 0 : index
    %c0_18 = arith.constant 0 : index
    %c0_19 = arith.constant 0 : index
    %22 = vector.load %arg7[%c0_17, %c0_18, %c0_19] : memref<1x32x32xbf16, #tpu.memory_space<vmem>>, vector<1x32x32xbf16>
    %23 = vector.shape_cast %22 : vector<1x32x32xbf16> to vector<32x32xbf16>
    %cst_20 = arith.constant dense<0.000000e+00> : vector<32x32xf32>
    %24 = tpu.matmul %5, %23, %cst_20 {dimension_numbers = #tpu.dot_dimension_numbers<[1], [0], [0], [1], [0, 0, 1, 1], [], []>} : vector<32x32xbf16>, vector<32x32xbf16>, vector<32x32xf32> -> vector<32x32xf32>
    %c0_21 = arith.constant 0 : index
    %c0_22 = arith.constant 0 : index
    %c0_23 = arith.constant 0 : index
    %25 = vector.load %arg10[%c0_21, %c0_22, %c0_23] : memref<1x1x32xf32, #tpu.memory_space<vmem>>, vector<1x1x32xf32>
    %26 = vector.shape_cast %25 : vector<1x1x32xf32> to vector<1x32xf32>
    %27 = vector.broadcast %26 : vector<1x32xf32> to vector<32x32xf32>
    %28 = arith.addf %24, %27 : vector<32x32xf32>
    %c0_24 = arith.constant 0 : index
    %c0_25 = arith.constant 0 : index
    %29 = vector.load %arg4[%c0_24, %c0_25] : memref<8x8xf32, #tpu.memory_space<vmem>>, vector<8x8xf32>
    %30 = vector.shape_cast %29 : vector<8x8xf32> to vector<1x8x8xf32>
    %31 = vector.shape_cast %30 : vector<1x8x8xf32> to vector<1x8x8xf32>
    %32 = vector.broadcast %31 : vector<1x8x8xf32> to vector<4x8x8xf32>
    %33 = vector.extract_strided_slice %14 {offsets = [0, 0], sizes = [32, 8], strides = [1, 1]} : vector<32x32xf32> to vector<32x8xf32>
    %34 = arith.truncf %33 : vector<32x8xf32> to vector<32x8xbf16>
    %35 = vector.shape_cast %34 : vector<32x8xbf16> to vector<4x8x8xbf16>
    %36 = vector.extract_strided_slice %21 {offsets = [0, 0], sizes = [32, 8], strides = [1, 1]} : vector<32x32xf32> to vector<32x8xf32>
    %37 = arith.truncf %36 : vector<32x8xf32> to vector<32x8xbf16>
    %38 = vector.shape_cast %37 : vector<32x8xbf16> to vector<4x8x8xbf16>
    %39 = vector.extract_strided_slice %28 {offsets = [0, 0], sizes = [32, 8], strides = [1, 1]} : vector<32x32xf32> to vector<32x8xf32>
    %40 = arith.truncf %39 : vector<32x8xf32> to vector<32x8xbf16>
    %41 = vector.shape_cast %40 : vector<32x8xbf16> to vector<4x8x8xbf16>
    "tpu.trace_start"() <{level = 10 : i32, message = "bld,bmd->blm"}> : () -> ()
    %cst_26 = arith.constant dense<0.000000e+00> : vector<4x8x8xf32>
    %42 = tpu.matmul %35, %38, %cst_26 {dimension_numbers = #tpu.dot_dimension_numbers<[2], [2], [1], [1], [0, 0, 0, 1, 1, 1], [0], [0]>} : vector<4x8x8xbf16>, vector<4x8x8xbf16>, vector<4x8x8xf32> -> vector<4x8x8xf32>
    "tpu.trace_stop"() : () -> ()
    %43 = arith.addf %42, %32 : vector<4x8x8xf32>
    %cst_27 = arith.constant dense<0xFF800000> : vector<4x8xf32>
    %44 = vector.multi_reduction <maximumf>, %43, %cst_27 [2] : vector<4x8x8xf32> to vector<4x8xf32>
    %45 = vector.shape_cast %44 : vector<4x8xf32> to vector<4x8x1xf32>
    %46 = vector.broadcast %45 : vector<4x8x1xf32> to vector<4x8x8xf32>
    %47 = arith.subf %43, %46 : vector<4x8x8xf32>
    %48 = math.exp %47 : vector<4x8x8xf32>
    %cst_28 = arith.constant dense<0.000000e+00> : vector<4x8xf32>
    %49 = vector.multi_reduction <add>, %48, %cst_28 [2] : vector<4x8x8xf32> to vector<4x8xf32>
    %50 = vector.shape_cast %49 : vector<4x8xf32> to vector<4x8x1xf32>
    %51 = tpu.reciprocal %50 {approx = true} : vector<4x8x1xf32> -> vector<4x8x1xf32>
    %52 = vector.broadcast %51 : vector<4x8x1xf32> to vector<4x8x8xf32>
    %53 = arith.mulf %48, %52 : vector<4x8x8xf32>
    %54 = arith.truncf %53 : vector<4x8x8xf32> to vector<4x8x8xbf16>
    "tpu.trace_start"() <{level = 10 : i32, message = "blm,bmd->bld"}> : () -> ()
    %cst_29 = arith.constant dense<0.000000e+00> : vector<4x8x8xf32>
    %55 = tpu.matmul %54, %41, %cst_29 {dimension_numbers = #tpu.dot_dimension_numbers<[2], [1], [1], [2], [0, 0, 0, 1, 1, 2], [0], [0]>} : vector<4x8x8xbf16>, vector<4x8x8xbf16>, vector<4x8x8xf32> -> vector<4x8x8xf32>
    "tpu.trace_stop"() : () -> ()
    %56 = vector.shape_cast %55 : vector<4x8x8xf32> to vector<32x8xf32>
    %57 = vector.extract_strided_slice %14 {offsets = [0, 8], sizes = [32, 8], strides = [1, 1]} : vector<32x32xf32> to vector<32x8xf32>
    %58 = arith.truncf %57 : vector<32x8xf32> to vector<32x8xbf16>
    %59 = vector.shape_cast %58 : vector<32x8xbf16> to vector<4x8x8xbf16>
    %60 = vector.extract_strided_slice %21 {offsets = [0, 8], sizes = [32, 8], strides = [1, 1]} : vector<32x32xf32> to vector<32x8xf32>
    %61 = arith.truncf %60 : vector<32x8xf32> to vector<32x8xbf16>
    %62 = vector.shape_cast %61 : vector<32x8xbf16> to vector<4x8x8xbf16>
    %63 = vector.extract_strided_slice %28 {offsets = [0, 8], sizes = [32, 8], strides = [1, 1]} : vector<32x32xf32> to vector<32x8xf32>
    %64 = arith.truncf %63 : vector<32x8xf32> to vector<32x8xbf16>
    %65 = vector.shape_cast %64 : vector<32x8xbf16> to vector<4x8x8xbf16>
    "tpu.trace_start"() <{level = 10 : i32, message = "bld,bmd->blm"}> : () -> ()
    %cst_30 = arith.constant dense<0.000000e+00> : vector<4x8x8xf32>
    %66 = tpu.matmul %59, %62, %cst_30 {dimension_numbers = #tpu.dot_dimension_numbers<[2], [2], [1], [1], [0, 0, 0, 1, 1, 1], [0], [0]>} : vector<4x8x8xbf16>, vector<4x8x8xbf16>, vector<4x8x8xf32> -> vector<4x8x8xf32>
    "tpu.trace_stop"() : () -> ()
    %67 = arith.addf %66, %32 : vector<4x8x8xf32>
    %cst_31 = arith.constant dense<0xFF800000> : vector<4x8xf32>
    %68 = vector.multi_reduction <maximumf>, %67, %cst_31 [2] : vector<4x8x8xf32> to vector<4x8xf32>
    %69 = vector.shape_cast %68 : vector<4x8xf32> to vector<4x8x1xf32>
    %70 = vector.broadcast %69 : vector<4x8x1xf32> to vector<4x8x8xf32>
    %71 = arith.subf %67, %70 : vector<4x8x8xf32>
    %72 = math.exp %71 : vector<4x8x8xf32>
    %cst_32 = arith.constant dense<0.000000e+00> : vector<4x8xf32>
    %73 = vector.multi_reduction <add>, %72, %cst_32 [2] : vector<4x8x8xf32> to vector<4x8xf32>
    %74 = vector.shape_cast %73 : vector<4x8xf32> to vector<4x8x1xf32>
    %75 = tpu.reciprocal %74 {approx = true} : vector<4x8x1xf32> -> vector<4x8x1xf32>
    %76 = vector.broadcast %75 : vector<4x8x1xf32> to vector<4x8x8xf32>
    %77 = arith.mulf %72, %76 : vector<4x8x8xf32>
    %78 = arith.truncf %77 : vector<4x8x8xf32> to vector<4x8x8xbf16>
    "tpu.trace_start"() <{level = 10 : i32, message = "blm,bmd->bld"}> : () -> ()
    %cst_33 = arith.constant dense<0.000000e+00> : vector<4x8x8xf32>
    %79 = tpu.matmul %78, %65, %cst_33 {dimension_numbers = #tpu.dot_dimension_numbers<[2], [1], [1], [2], [0, 0, 0, 1, 1, 2], [0], [0]>} : vector<4x8x8xbf16>, vector<4x8x8xbf16>, vector<4x8x8xf32> -> vector<4x8x8xf32>
    "tpu.trace_stop"() : () -> ()
    %80 = vector.shape_cast %79 : vector<4x8x8xf32> to vector<32x8xf32>
    %81 = vector.extract_strided_slice %14 {offsets = [0, 16], sizes = [32, 8], strides = [1, 1]} : vector<32x32xf32> to vector<32x8xf32>
    %82 = arith.truncf %81 : vector<32x8xf32> to vector<32x8xbf16>
    %83 = vector.shape_cast %82 : vector<32x8xbf16> to vector<4x8x8xbf16>
    %84 = vector.extract_strided_slice %21 {offsets = [0, 16], sizes = [32, 8], strides = [1, 1]} : vector<32x32xf32> to vector<32x8xf32>
    %85 = arith.truncf %84 : vector<32x8xf32> to vector<32x8xbf16>
    %86 = vector.shape_cast %85 : vector<32x8xbf16> to vector<4x8x8xbf16>
    %87 = vector.extract_strided_slice %28 {offsets = [0, 16], sizes = [32, 8], strides = [1, 1]} : vector<32x32xf32> to vector<32x8xf32>
    %88 = arith.truncf %87 : vector<32x8xf32> to vector<32x8xbf16>
    %89 = vector.shape_cast %88 : vector<32x8xbf16> to vector<4x8x8xbf16>
    "tpu.trace_start"() <{level = 10 : i32, message = "bld,bmd->blm"}> : () -> ()
    %cst_34 = arith.constant dense<0.000000e+00> : vector<4x8x8xf32>
    %90 = tpu.matmul %83, %86, %cst_34 {dimension_numbers = #tpu.dot_dimension_numbers<[2], [2], [1], [1], [0, 0, 0, 1, 1, 1], [0], [0]>} : vector<4x8x8xbf16>, vector<4x8x8xbf16>, vector<4x8x8xf32> -> vector<4x8x8xf32>
    "tpu.trace_stop"() : () -> ()
    %91 = arith.addf %90, %32 : vector<4x8x8xf32>
    %cst_35 = arith.constant dense<0xFF800000> : vector<4x8xf32>
    %92 = vector.multi_reduction <maximumf>, %91, %cst_35 [2] : vector<4x8x8xf32> to vector<4x8xf32>
    %93 = vector.shape_cast %92 : vector<4x8xf32> to vector<4x8x1xf32>
    %94 = vector.broadcast %93 : vector<4x8x1xf32> to vector<4x8x8xf32>
    %95 = arith.subf %91, %94 : vector<4x8x8xf32>
    %96 = math.exp %95 : vector<4x8x8xf32>
    %cst_36 = arith.constant dense<0.000000e+00> : vector<4x8xf32>
    %97 = vector.multi_reduction <add>, %96, %cst_36 [2] : vector<4x8x8xf32> to vector<4x8xf32>
    %98 = vector.shape_cast %97 : vector<4x8xf32> to vector<4x8x1xf32>
    %99 = tpu.reciprocal %98 {approx = true} : vector<4x8x1xf32> -> vector<4x8x1xf32>
    %100 = vector.broadcast %99 : vector<4x8x1xf32> to vector<4x8x8xf32>
    %101 = arith.mulf %96, %100 : vector<4x8x8xf32>
    %102 = arith.truncf %101 : vector<4x8x8xf32> to vector<4x8x8xbf16>
    "tpu.trace_start"() <{level = 10 : i32, message = "blm,bmd->bld"}> : () -> ()
    %cst_37 = arith.constant dense<0.000000e+00> : vector<4x8x8xf32>
    %103 = tpu.matmul %102, %89, %cst_37 {dimension_numbers = #tpu.dot_dimension_numbers<[2], [1], [1], [2], [0, 0, 0, 1, 1, 2], [0], [0]>} : vector<4x8x8xbf16>, vector<4x8x8xbf16>, vector<4x8x8xf32> -> vector<4x8x8xf32>
    "tpu.trace_stop"() : () -> ()
    %104 = vector.shape_cast %103 : vector<4x8x8xf32> to vector<32x8xf32>
    %105 = vector.extract_strided_slice %14 {offsets = [0, 24], sizes = [32, 8], strides = [1, 1]} : vector<32x32xf32> to vector<32x8xf32>
    %106 = arith.truncf %105 : vector<32x8xf32> to vector<32x8xbf16>
    %107 = vector.shape_cast %106 : vector<32x8xbf16> to vector<4x8x8xbf16>
    %108 = vector.extract_strided_slice %21 {offsets = [0, 24], sizes = [32, 8], strides = [1, 1]} : vector<32x32xf32> to vector<32x8xf32>
    %109 = arith.truncf %108 : vector<32x8xf32> to vector<32x8xbf16>
    %110 = vector.shape_cast %109 : vector<32x8xbf16> to vector<4x8x8xbf16>
    %111 = vector.extract_strided_slice %28 {offsets = [0, 24], sizes = [32, 8], strides = [1, 1]} : vector<32x32xf32> to vector<32x8xf32>
    %112 = arith.truncf %111 : vector<32x8xf32> to vector<32x8xbf16>
    %113 = vector.shape_cast %112 : vector<32x8xbf16> to vector<4x8x8xbf16>
    "tpu.trace_start"() <{level = 10 : i32, message = "bld,bmd->blm"}> : () -> ()
    %cst_38 = arith.constant dense<0.000000e+00> : vector<4x8x8xf32>
    %114 = tpu.matmul %107, %110, %cst_38 {dimension_numbers = #tpu.dot_dimension_numbers<[2], [2], [1], [1], [0, 0, 0, 1, 1, 1], [0], [0]>} : vector<4x8x8xbf16>, vector<4x8x8xbf16>, vector<4x8x8xf32> -> vector<4x8x8xf32>
    "tpu.trace_stop"() : () -> ()
    %115 = arith.addf %114, %32 : vector<4x8x8xf32>
    %cst_39 = arith.constant dense<0xFF800000> : vector<4x8xf32>
    %116 = vector.multi_reduction <maximumf>, %115, %cst_39 [2] : vector<4x8x8xf32> to vector<4x8xf32>
    %117 = vector.shape_cast %116 : vector<4x8xf32> to vector<4x8x1xf32>
    %118 = vector.broadcast %117 : vector<4x8x1xf32> to vector<4x8x8xf32>
    %119 = arith.subf %115, %118 : vector<4x8x8xf32>
    %120 = math.exp %119 : vector<4x8x8xf32>
    %cst_40 = arith.constant dense<0.000000e+00> : vector<4x8xf32>
    %121 = vector.multi_reduction <add>, %120, %cst_40 [2] : vector<4x8x8xf32> to vector<4x8xf32>
    %122 = vector.shape_cast %121 : vector<4x8xf32> to vector<4x8x1xf32>
    %123 = tpu.reciprocal %122 {approx = true} : vector<4x8x1xf32> -> vector<4x8x1xf32>
    %124 = vector.broadcast %123 : vector<4x8x1xf32> to vector<4x8x8xf32>
    %125 = arith.mulf %120, %124 : vector<4x8x8xf32>
    %126 = arith.truncf %125 : vector<4x8x8xf32> to vector<4x8x8xbf16>
    "tpu.trace_start"() <{level = 10 : i32, message = "blm,bmd->bld"}> : () -> ()
    %cst_41 = arith.constant dense<0.000000e+00> : vector<4x8x8xf32>
    %127 = tpu.matmul %126, %113, %cst_41 {dimension_numbers = #tpu.dot_dimension_numbers<[2], [1], [1], [2], [0, 0, 0, 1, 1, 2], [0], [0]>} : vector<4x8x8xbf16>, vector<4x8x8xbf16>, vector<4x8x8xf32> -> vector<4x8x8xf32>
    "tpu.trace_stop"() : () -> ()
    %128 = vector.shape_cast %127 : vector<4x8x8xf32> to vector<32x8xf32>
    %129 = tpu.concatenate %56, %80, %104, %128 in 1 : vector<32x8xf32>, vector<32x8xf32>, vector<32x8xf32>, vector<32x8xf32> -> vector<32x32xf32>
    %130 = arith.truncf %129 : vector<32x32xf32> to vector<32x32xbf16>
    %c0_42 = arith.constant 0 : index
    %c0_43 = arith.constant 0 : index
    %c0_44 = arith.constant 0 : index
    %131 = vector.load %arg11[%c0_42, %c0_43, %c0_44] : memref<1x32x32xbf16, #tpu.memory_space<vmem>>, vector<1x32x32xbf16>
    %132 = vector.shape_cast %131 : vector<1x32x32xbf16> to vector<32x32xbf16>
    %cst_45 = arith.constant dense<0.000000e+00> : vector<32x32xf32>
    %133 = tpu.matmul %130, %132, %cst_45 {dimension_numbers = #tpu.dot_dimension_numbers<[1], [0], [0], [1], [0, 0, 1, 1], [], []>} : vector<32x32xbf16>, vector<32x32xbf16>, vector<32x32xf32> -> vector<32x32xf32>
    %c0_46 = arith.constant 0 : index
    %c0_47 = arith.constant 0 : index
    %c0_48 = arith.constant 0 : index
    %134 = vector.load %arg12[%c0_46, %c0_47, %c0_48] : memref<1x1x32xf32, #tpu.memory_space<vmem>>, vector<1x1x32xf32>
    %135 = vector.shape_cast %134 : vector<1x1x32xf32> to vector<1x32xf32>
    %136 = vector.broadcast %135 : vector<1x32xf32> to vector<32x32xf32>
    %137 = arith.addf %133, %136 : vector<32x32xf32>
    %138 = arith.addf %137, %4 : vector<32x32xf32>
    %c0_49 = arith.constant 0 : index
    %c0_50 = arith.constant 0 : index
    %c0_51 = arith.constant 0 : index
    %139 = vector.load %arg13[%c0_49, %c0_50, %c0_51] : memref<1x1x32xf32, #tpu.memory_space<vmem>>, vector<1x1x32xf32>
    %140 = vector.shape_cast %139 : vector<1x1x32xf32> to vector<1x32xf32>
    %c0_52 = arith.constant 0 : index
    %c0_53 = arith.constant 0 : index
    %c0_54 = arith.constant 0 : index
    %141 = vector.load %arg14[%c0_52, %c0_53, %c0_54] : memref<1x1x32xf32, #tpu.memory_space<vmem>>, vector<1x1x32xf32>
    %142 = vector.shape_cast %141 : vector<1x1x32xf32> to vector<1x32xf32>
    %cst_55 = arith.constant dense<0.000000e+00> : vector<32xf32>
    %143 = vector.multi_reduction <add>, %138, %cst_55 [1] : vector<32x32xf32> to vector<32xf32>
    %144 = vector.shape_cast %143 : vector<32xf32> to vector<32x1xf32>
    %cst_56 = arith.constant 3.200000e+01 : f32
    %145 = vector.broadcast %cst_56 : f32 to vector<32x1xf32>
    %146 = arith.divf %144, %145 : vector<32x1xf32>
    %147 = vector.broadcast %146 : vector<32x1xf32> to vector<32x32xf32>
    %148 = arith.subf %138, %147 : vector<32x32xf32>
    %149 = arith.mulf %148, %148 : vector<32x32xf32>
    %cst_57 = arith.constant dense<0.000000e+00> : vector<32xf32>
    %150 = vector.multi_reduction <add>, %149, %cst_57 [1] : vector<32x32xf32> to vector<32xf32>
    %151 = vector.shape_cast %150 : vector<32xf32> to vector<32x1xf32>
    %cst_58 = arith.constant 3.200000e+01 : f32
    %152 = vector.broadcast %cst_58 : f32 to vector<32x1xf32>
    %153 = arith.divf %151, %152 : vector<32x1xf32>
    %cst_59 = arith.constant 9.99999974E-6 : f32
    %154 = vector.broadcast %cst_59 : f32 to vector<32x1xf32>
    %155 = arith.addf %153, %154 : vector<32x1xf32>
    %156 = math.rsqrt %155 : vector<32x1xf32>
    %157 = vector.broadcast %156 : vector<32x1xf32> to vector<32x32xf32>
    %158 = arith.mulf %148, %157 : vector<32x32xf32>
    %159 = vector.broadcast %140 : vector<1x32xf32> to vector<32x32xf32>
    %160 = arith.mulf %158, %159 : vector<32x32xf32>
    %161 = vector.broadcast %142 : vector<1x32xf32> to vector<32x32xf32>
    %162 = arith.addf %160, %161 : vector<32x32xf32>
    %163 = arith.truncf %162 : vector<32x32xf32> to vector<32x32xbf16>
    %c0_60 = arith.constant 0 : index
    %c0_61 = arith.constant 0 : index
    %c0_62 = arith.constant 0 : index
    %164 = vector.load %arg15[%c0_60, %c0_61, %c0_62] : memref<1x32x128xbf16, #tpu.memory_space<vmem>>, vector<1x32x128xbf16>
    %165 = vector.shape_cast %164 : vector<1x32x128xbf16> to vector<32x128xbf16>
    %cst_63 = arith.constant dense<0.000000e+00> : vector<32x128xf32>
    %166 = tpu.matmul %163, %165, %cst_63 {dimension_numbers = #tpu.dot_dimension_numbers<[1], [0], [0], [1], [0, 0, 1, 1], [], []>} : vector<32x32xbf16>, vector<32x128xbf16>, vector<32x128xf32> -> vector<32x128xf32>
    %c0_64 = arith.constant 0 : index
    %c0_65 = arith.constant 0 : index
    %c0_66 = arith.constant 0 : index
    %167 = vector.load %arg16[%c0_64, %c0_65, %c0_66] : memref<1x1x128xf32, #tpu.memory_space<vmem>>, vector<1x1x128xf32>
    %168 = vector.shape_cast %167 : vector<1x1x128xf32> to vector<1x128xf32>
    %169 = vector.broadcast %168 : vector<1x128xf32> to vector<32x128xf32>
    %170 = arith.addf %166, %169 : vector<32x128xf32>
    %cst_67 = arith.constant 0.000000e+00 : f32
    %171 = vector.broadcast %cst_67 : f32 to vector<32x128xf32>
    %172 = arith.maximumf %170, %171 : vector<32x128xf32>
    %173 = arith.truncf %172 : vector<32x128xf32> to vector<32x128xbf16>
    %c0_68 = arith.constant 0 : index
    %c0_69 = arith.constant 0 : index
    %c0_70 = arith.constant 0 : index
    %174 = vector.load %arg17[%c0_68, %c0_69, %c0_70] : memref<1x128x32xbf16, #tpu.memory_space<vmem>>, vector<1x128x32xbf16>
    %175 = vector.shape_cast %174 : vector<1x128x32xbf16> to vector<128x32xbf16>
    %cst_71 = arith.constant dense<0.000000e+00> : vector<32x32xf32>
    %176 = tpu.matmul %173, %175, %cst_71 {dimension_numbers = #tpu.dot_dimension_numbers<[1], [0], [0], [1], [0, 0, 1, 1], [], []>} : vector<32x128xbf16>, vector<128x32xbf16>, vector<32x32xf32> -> vector<32x32xf32>
    %c0_72 = arith.constant 0 : index
    %c0_73 = arith.constant 0 : index
    %c0_74 = arith.constant 0 : index
    %177 = vector.load %arg18[%c0_72, %c0_73, %c0_74] : memref<1x1x32xf32, #tpu.memory_space<vmem>>, vector<1x1x32xf32>
    %178 = vector.shape_cast %177 : vector<1x1x32xf32> to vector<1x32xf32>
    %179 = vector.broadcast %178 : vector<1x32xf32> to vector<32x32xf32>
    %180 = arith.addf %176, %179 : vector<32x32xf32>
    %181 = arith.addf %180, %162 : vector<32x32xf32>
    %c0_75 = arith.constant 0 : index
    %c0_76 = arith.constant 0 : index
    %c0_77 = arith.constant 0 : index
    %182 = vector.load %arg19[%c0_75, %c0_76, %c0_77] : memref<1x1x32xf32, #tpu.memory_space<vmem>>, vector<1x1x32xf32>
    %183 = vector.shape_cast %182 : vector<1x1x32xf32> to vector<1x32xf32>
    %c0_78 = arith.constant 0 : index
    %c0_79 = arith.constant 0 : index
    %c0_80 = arith.constant 0 : index
    %184 = vector.load %arg20[%c0_78, %c0_79, %c0_80] : memref<1x1x32xf32, #tpu.memory_space<vmem>>, vector<1x1x32xf32>
    %185 = vector.shape_cast %184 : vector<1x1x32xf32> to vector<1x32xf32>
    %cst_81 = arith.constant dense<0.000000e+00> : vector<32xf32>
    %186 = vector.multi_reduction <add>, %181, %cst_81 [1] : vector<32x32xf32> to vector<32xf32>
    %187 = vector.shape_cast %186 : vector<32xf32> to vector<32x1xf32>
    %cst_82 = arith.constant 3.200000e+01 : f32
    %188 = vector.broadcast %cst_82 : f32 to vector<32x1xf32>
    %189 = arith.divf %187, %188 : vector<32x1xf32>
    %190 = vector.broadcast %189 : vector<32x1xf32> to vector<32x32xf32>
    %191 = arith.subf %181, %190 : vector<32x32xf32>
    %192 = arith.mulf %191, %191 : vector<32x32xf32>
    %cst_83 = arith.constant dense<0.000000e+00> : vector<32xf32>
    %193 = vector.multi_reduction <add>, %192, %cst_83 [1] : vector<32x32xf32> to vector<32xf32>
    %194 = vector.shape_cast %193 : vector<32xf32> to vector<32x1xf32>
    %cst_84 = arith.constant 3.200000e+01 : f32
    %195 = vector.broadcast %cst_84 : f32 to vector<32x1xf32>
    %196 = arith.divf %194, %195 : vector<32x1xf32>
    %cst_85 = arith.constant 9.99999974E-6 : f32
    %197 = vector.broadcast %cst_85 : f32 to vector<32x1xf32>
    %198 = arith.addf %196, %197 : vector<32x1xf32>
    %199 = math.rsqrt %198 : vector<32x1xf32>
    %200 = vector.broadcast %199 : vector<32x1xf32> to vector<32x32xf32>
    %201 = arith.mulf %191, %200 : vector<32x32xf32>
    %202 = vector.broadcast %183 : vector<1x32xf32> to vector<32x32xf32>
    %203 = arith.mulf %201, %202 : vector<32x32xf32>
    %204 = vector.broadcast %185 : vector<1x32xf32> to vector<32x32xf32>
    %205 = arith.addf %203, %204 : vector<32x32xf32>
    %206 = vector.shape_cast %205 : vector<32x32xf32> to vector<4x8x32xf32>
    %c0_86 = arith.constant 0 : index
    %c0_87 = arith.constant 0 : index
    %c0_88 = arith.constant 0 : index
    %207 = vector.load %arg22[%c0_86, %c0_87, %c0_88] : memref<4x8x32xf32, #tpu.memory_space<vmem>>, vector<4x8x32xf32>
    tpu.vector_store %arg22[%c0_86, %c0_87, %c0_88], %206 {strides = array<i32>} : memref<4x8x32xf32, #tpu.memory_space<vmem>>, vector<4x8x32xf32>,
    %c1_i32 = arith.constant 1 : i32
    %208 = arith.cmpi eq, %arg1, %c1_i32 : i32
    %209 = arith.extui %208 : i1 to i32
    %c0_i32_89 = arith.constant 0 : i32
    %210 = arith.cmpi ne, %209, %c0_i32_89 : i32
    scf.if %210 {
      %c0_90 = arith.constant 0 : index
      %c0_91 = arith.constant 0 : index
      %c0_92 = arith.constant 0 : index
      %211 = vector.load %arg22[%c0_90, %c0_91, %c0_92] : memref<4x8x32xf32, #tpu.memory_space<vmem>>, vector<4x8x32xf32>
      %c0_93 = arith.constant 0 : index
      %c0_94 = arith.constant 0 : index
      %c0_95 = arith.constant 0 : index
      %212 = vector.load %arg21[%c0_93, %c0_94, %c0_95] : memref<4x8x32xf32, #tpu.memory_space<vmem>>, vector<4x8x32xf32>
      tpu.vector_store %arg21[%c0_93, %c0_94, %c0_95], %211 {strides = array<i32>} : memref<4x8x32xf32, #tpu.memory_space<vmem>>, vector<4x8x32xf32>,
    } else {
    }
    return
  }
  func.func @transform_0(%arg0: i32, %arg1: i32) -> (i32, i32, i32) {
    %c0_i32 = arith.constant 0 : i32
    %c0_i32_0 = arith.constant 0 : i32
    %c0_i32_1 = arith.constant 0 : i32
    return %arg0, %c0_i32, %c0_i32_0 : i32, i32, i32
  }
  func.func @transform_1(%arg0: i32, %arg1: i32) -> (i32, i32, i32) {
    %c0_i32 = arith.constant 0 : i32
    %c0_i32_0 = arith.constant 0 : i32
    %c0_i32_1 = arith.constant 0 : i32
    return %arg0, %c0_i32, %c0_i32_0 : i32, i32, i32
  }
  func.func @transform_2(%arg0: i32, %arg1: i32) -> (i32, i32) {
    %c0_i32 = arith.constant 0 : i32
    %c0_i32_0 = arith.constant 0 : i32
    %c0_i32_1 = arith.constant 0 : i32
    return %c0_i32, %c0_i32_0 : i32, i32
  }
  func.func @transform_3(%arg0: i32, %arg1: i32) -> (i32, i32, i32) {
    %c0_i32 = arith.constant 0 : i32
    %c0_i32_0 = arith.constant 0 : i32
    %c0_i32_1 = arith.constant 0 : i32
    return %arg1, %c0_i32, %c0_i32_0 : i32, i32, i32
  }
  func.func @transform_4(%arg0: i32, %arg1: i32) -> (i32, i32, i32) {
    %c0_i32 = arith.constant 0 : i32
    %c0_i32_0 = arith.constant 0 : i32
    %c0_i32_1 = arith.constant 0 : i32
    return %arg1, %c0_i32, %c0_i32_0 : i32, i32, i32
  }
  func.func @transform_5(%arg0: i32, %arg1: i32) -> (i32, i32, i32) {
    %c0_i32 = arith.constant 0 : i32
    %c0_i32_0 = arith.constant 0 : i32
    %c0_i32_1 = arith.constant 0 : i32
    return %arg1, %c0_i32, %c0_i32_0 : i32, i32, i32
  }
  func.func @transform_6(%arg0: i32, %arg1: i32) -> (i32, i32, i32) {
    %c0_i32 = arith.constant 0 : i32
    %c0_i32_0 = arith.constant 0 : i32
    %c0_i32_1 = arith.constant 0 : i32
    return %arg1, %c0_i32, %c0_i32_0 : i32, i32, i32
  }
  func.func @transform_7(%arg0: i32, %arg1: i32) -> (i32, i32, i32) {
    %c0_i32 = arith.constant 0 : i32
    %c0_i32_0 = arith.constant 0 : i32
    %c0_i32_1 = arith.constant 0 : i32
    return %arg1, %c0_i32, %c0_i32_0 : i32, i32, i32
  }
  func.func @transform_8(%arg0: i32, %arg1: i32) -> (i32, i32, i32) {
    %c0_i32 = arith.constant 0 : i32
    %c0_i32_0 = arith.constant 0 : i32
    %c0_i32_1 = arith.constant 0 : i32
    return %arg1, %c0_i32, %c0_i32_0 : i32, i32, i32
  }
  func.func @transform_9(%arg0: i32, %arg1: i32) -> (i32, i32, i32) {
    %c0_i32 = arith.constant 0 : i32
    %c0_i32_0 = arith.constant 0 : i32
    %c0_i32_1 = arith.constant 0 : i32
    return %arg1, %c0_i32, %c0_i32_0 : i32, i32, i32
  }
  func.func @transform_10(%arg0: i32, %arg1: i32) -> (i32, i32, i32) {
    %c0_i32 = arith.constant 0 : i32
    %c0_i32_0 = arith.constant 0 : i32
    %c0_i32_1 = arith.constant 0 : i32
    return %arg1, %c0_i32, %c0_i32_0 : i32, i32, i32
  }
  func.func @transform_11(%arg0: i32, %arg1: i32) -> (i32, i32, i32) {
    %c0_i32 = arith.constant 0 : i32
    %c0_i32_0 = arith.constant 0 : i32
    %c0_i32_1 = arith.constant 0 : i32
    return %arg1, %c0_i32, %c0_i32_0 : i32, i32, i32
  }
  func.func @transform_12(%arg0: i32, %arg1: i32) -> (i32, i32, i32) {
    %c0_i32 = arith.constant 0 : i32
    %c0_i32_0 = arith.constant 0 : i32
    %c0_i32_1 = arith.constant 0 : i32
    return %arg1, %c0_i32, %c0_i32_0 : i32, i32, i32
  }
  func.func @transform_13(%arg0: i32, %arg1: i32) -> (i32, i32, i32) {
    %c0_i32 = arith.constant 0 : i32
    %c0_i32_0 = arith.constant 0 : i32
    %c0_i32_1 = arith.constant 0 : i32
    return %arg1, %c0_i32, %c0_i32_0 : i32, i32, i32
  }
  func.func @transform_14(%arg0: i32, %arg1: i32) -> (i32, i32, i32) {
    %c0_i32 = arith.constant 0 : i32
    %c0_i32_0 = arith.constant 0 : i32
    %c0_i32_1 = arith.constant 0 : i32
    return %arg1, %c0_i32, %c0_i32_0 : i32, i32, i32
  }
  func.func @transform_15(%arg0: i32, %arg1: i32) -> (i32, i32, i32) {
    %c0_i32 = arith.constant 0 : i32
    %c0_i32_0 = arith.constant 0 : i32
    %c0_i32_1 = arith.constant 0 : i32
    return %arg1, %c0_i32, %c0_i32_0 : i32, i32, i32
  }
  func.func @transform_16(%arg0: i32, %arg1: i32) -> (i32, i32, i32) {
    %c0_i32 = arith.constant 0 : i32
    %c0_i32_0 = arith.constant 0 : i32
    %c0_i32_1 = arith.constant 0 : i32
    return %arg1, %c0_i32, %c0_i32_0 : i32, i32, i32
  }
  func.func @transform_17(%arg0: i32, %arg1: i32) -> (i32, i32, i32) {
    %c0_i32 = arith.constant 0 : i32
    %c0_i32_0 = arith.constant 0 : i32
    %c0_i32_1 = arith.constant 0 : i32
    return %arg1, %c0_i32, %c0_i32_0 : i32, i32, i32
  }
  func.func @transform_18(%arg0: i32, %arg1: i32) -> (i32, i32, i32) {
    %c0_i32 = arith.constant 0 : i32
    %c0_i32_0 = arith.constant 0 : i32
    %c0_i32_1 = arith.constant 0 : i32
    return %arg1, %c0_i32, %c0_i32_0 : i32, i32, i32
  }
  func.func @transform_19(%arg0: i32, %arg1: i32) -> (i32, i32, i32) {
    %c0_i32 = arith.constant 0 : i32
    %c0_i32_0 = arith.constant 0 : i32
    %c0_i32_1 = arith.constant 0 : i32
    return %arg0, %c0_i32, %c0_i32_0 : i32, i32, i32
  }
}

</mosaic_0001>

<llo_original>
// kernel: tpu_custom_call.1
$region0: #{tpu_custom_call.1}
  #allocation0 [shape = 'u32[]', space=smem, size = 0x4, offset = 0x4, fixed_abs, tag = 'smem constant byte address 0x4 - core index']
  #allocation1 [shape = 'u32[144,128]{1,0:T(1,128)}', space=vmem, size = 0x12000, scoped, tag = 'internal scratch']
  #allocation2 [shape = 'f32[4,8,32]{2,1,0:T(8,128)}', space=vmem, size = 0x4000, scoped, tag = 'scratch operand']
  %s0 = inlined_call_operand.vmem [shape: f32[4,8,32], index: 0, kind: input, shape index: {}]
  %s1 = inlined_call_operand.hbm [shape: f32[4,1,32], index: 1, kind: input, shape index: {}]
  %s2 = inlined_call_operand.hbm [shape: f32[8,8], index: 2, kind: input, shape index: {}]
  %s3 = inlined_call_operand.vmem [shape: bf16[2,32,32], index: 3, kind: input, shape index: {}]
  %s4 = inlined_call_operand.vmem [shape: bf16[2,32,32], index: 4, kind: input, shape index: {}]
  %s5 = inlined_call_operand.vmem [shape: bf16[2,32,32], index: 5, kind: input, shape index: {}]
  %s6 = inlined_call_operand.vmem [shape: f32[2,1,32], index: 6, kind: input, shape index: {}]
  %s7 = inlined_call_operand.vmem [shape: f32[2,1,32], index: 7, kind: input, shape index: {}]
  %s8 = inlined_call_operand.vmem [shape: f32[2,1,32], index: 8, kind: input, shape index: {}]
  %s9 = inlined_call_operand.vmem [shape: bf16[2,32,32], index: 9, kind: input, shape index: {}]
  %s10 = inlined_call_operand.vmem [shape: f32[2,1,32], index: 10, kind: input, shape index: {}]
  %s11 = inlined_call_operand.vmem [shape: f32[2,1,32], index: 11, kind: input, shape index: {}]
  %s12 = inlined_call_operand.vmem [shape: f32[2,1,32], index: 12, kind: input, shape index: {}]
  %s13 = inlined_call_operand.hbm [shape: bf16[2,32,128], index: 13, kind: input, shape index: {}]
  %s14 = inlined_call_operand.vmem [shape: f32[2,1,128], index: 14, kind: input, shape index: {}]
  %s15 = inlined_call_operand.vmem [shape: bf16[2,128,32], index: 15, kind: input, shape index: {}]
  %s16 = inlined_call_operand.vmem [shape: f32[2,1,32], index: 16, kind: input, shape index: {}]
  %s17 = inlined_call_operand.vmem [shape: f32[2,1,32], index: 17, kind: input, shape index: {}]
  %s18 = inlined_call_operand.vmem [shape: f32[2,1,32], index: 18, kind: input, shape index: {}]
  %s19 = inlined_call_operand.hbm [shape: f32[4,8,32], index: 19, kind: output, shape index: {}]
  %s20 = sld [smem:[#allocation0]]
  $region129: #{tpu_custom_call.1} parent=0
    _
  %s22 = ssub.s32 1, %s20
  %s23 = scalar_select 0, %s22, %s20
  $region1: #{tpu_custom_call.1} parent=0
    #allocation3 [shape = 'u8[2048]{0}', space=vmem, size = 0x800, scoped, tag = 'input window, operand 1, single buffered']
    #allocation4 [shape = 's32[2]{0}', space=sflag, size = 0x8, scoped, tag = 'scoped memory for tpu_custom_call.1']
    #allocation5 [shape = 's32[2]{0}', space=sflag, size = 0x8, scoped, tag = 'scoped memory for tpu_custom_call.1']
    #allocation6 [shape = 'u8[4096]{0}', space=vmem, size = 0x1000, scoped, tag = 'input window, operand 2, single buffered']
    #allocation7 [shape = 's32[1]{0}', space=sflag, size = 0x4, scoped, tag = 'scoped memory for tpu_custom_call.1']
    #allocation8 [shape = 'u8[16384]{0}', space=vmem, size = 0x4000, scoped, tag = 'input window, operand 13']
    #allocation9 [shape = 'u8[16384]{0}', space=vmem, size = 0x4000, scoped, tag = 'output window, operand 0, single buffered']
    %24 = vsyncpa [#allocation4], 0
    %25 = vsyncpa [#allocation7], 0
    %26 = vsyncpa [#allocation5], 0
    loop: start=0, step=1, limit=4
    $region2: #{tpu_custom_call.1} parent=1 // loop_pre_header
      _
    $region3: #{tpu_custom_call.1} parent=1 // loop_header
      %s28 = sphi 0, %s32
      %p29 = scmp.ge.s32.totalorder %s28, 4
      %s35 = sphi 0, %s47
      %s36 = sphi 0, %s43
      %s37 = sphi 0, %s35
      %s38 = sphi 0, %s36
      %s39 = sphi 0, %s37
      %s40 = sphi 0, %s38
      %s50 = sphi 0, %s52
      %s53 = sphi 0, %s50
      %s54 = sphi 0, %s53
      %s70 = sphi 0, %s54
      %s76 = sphi 0, %s78
      %s79 = sphi 0, %s76
      %s80 = sphi 0, %s79
      %s96 = sphi 0, %s80
      %s100 = sphi 0, %s100
      %s102 = sphi 0, %s100
      %s103 = sphi 0, %s102
      %s117 = sphi 0, %s103
      %s123 = sphi 0, %s125
      %s126 = sphi 0, %s123
      %s127 = sphi 0, %s126
      %s143 = sphi 0, %s127
      %s149 = sphi 0, %s151
      %s152 = sphi 0, %s149
      %s153 = sphi 0, %s152
      %s169 = sphi 0, %s153
      %s175 = sphi 0, %s177
      %s178 = sphi 0, %s175
      %s179 = sphi 0, %s178
      %s195 = sphi 0, %s179
      %s201 = sphi 0, %s203
      %s204 = sphi 0, %s201
      %s205 = sphi 0, %s204
      %s221 = sphi 0, %s205
      %s227 = sphi 0, %s229
      %s230 = sphi 0, %s227
      %s231 = sphi 0, %s230
      %s247 = sphi 0, %s231
      %s253 = sphi 0, %s255
      %s256 = sphi 0, %s253
      %s257 = sphi 0, %s256
      %s273 = sphi 0, %s257
      %s279 = sphi 0, %s281
      %s282 = sphi 0, %s279
      %s283 = sphi 0, %s282
      %s299 = sphi 0, %s283
      %s305 = sphi 0, %s307
      %s308 = sphi 0, %s305
      %s309 = sphi 0, %s308
      %s325 = sphi 0, %s309
      %s331 = sphi 0, %s333
      %s334 = sphi 0, %s331
      %s335 = sphi 0, %s334
      %s351 = sphi 0, %s335
      %s357 = sphi 0, %s359
      %s360 = sphi 0, %s357
      %s361 = sphi 0, %s360
      %s377 = sphi 0, %s361
      %s383 = sphi 0, %s385
      %s386 = sphi 0, %s383
      %s387 = sphi 0, %s386
      %s403 = sphi 0, %s387
      %s409 = sphi 0, %s411
      %s412 = sphi 0, %s409
      %s413 = sphi 0, %s412
      %s429 = sphi 0, %s413
      %s435 = sphi 0, %s437
      %s438 = sphi 0, %s435
      %s439 = sphi 0, %s438
      %s455 = sphi 0, %s439
      %s461 = sphi 0, %s463
      %s464 = sphi 0, %s461
      %s465 = sphi 0, %s464
      %s481 = sphi 0, %s465
      %s487 = sphi 0, %s489
      %s490 = sphi 0, %s487
      %s491 = sphi 0, %s490
      %s507 = sphi 0, %s491
      %s513 = sphi 0, %s515
      %s516 = sphi 0, %s513
      %s517 = sphi 0, %s516
      %s533 = sphi 0, %s517
      %s539 = sphi 0, %s541
      %s542 = sphi 0, %s539
      %s543 = sphi 0, %s542
      %s559 = sphi 0, %s543
    $region4: #{tpu_custom_call.1} parent=1 // loop_header_branch
      %31 = sbr.rel (%p29) target = $region8
    $region5: #{tpu_custom_call.1} parent=1 // loop_body
      %s33 = ssub.s32 %s28, 1
      %s34 = ssub.s32 %s28, 2
      %s41 = sadd.s32 1, %s36
      %p42 = scmp.ge.s32.totalorder %s41, 2
      %s43 = scalar_select %p42, 0, %s41
      %s44 = sadd.s32 1, %s35
      %s45 = scalar_select %p42, %s44, %s35
      %p46 = scmp.ge.s32.totalorder %s45, 1
      %s47 = scalar_select %p46, 0, %s45
      %s48 = ssub.s32 %s35, %s47
      %p49 = scmp.eq.s32.totalorder %s48, 0
      %s51 = sadd.s32 %s50, 1
      %s52 = scalar_select %p49, %s50, %s51
      %p55 = pneg %p49
      %p56 = scmp.eq.s32.totalorder %s28, 1
      %p57 = por %p55, %p56
      %p58 = scmp.ne.s32.totalorder %s50, %s53
      %p59 = scmp.eq.s32.totalorder %s28, 0
      %p60 = por %p58, %p59
      %p61 = scmp.ne.s32.totalorder %s50, %s53
      %p62 = scmp.eq.s32.totalorder %s33, 1
      %p63 = por %p61, %p62
      %p64 = scmp.ne.s32.totalorder %s53, %s54
      %p65 = scmp.eq.s32.totalorder %s33, 0
      %p66 = por %p64, %p65
      %p67 = scmp.ne.s32.totalorder %s53, %s54
      %p68 = scmp.eq.s32.totalorder %s34, 1
      %p69 = por %p67, %p68
      %p71 = scmp.ne.s32.totalorder %s54, %s70
      %p72 = scmp.eq.s32.totalorder %s34, 0
      %p73 = por %p71, %p72
      %s74 = ssub.s32 %s35, %s47
      %p75 = scmp.eq.s32.totalorder %s74, 0
      %s77 = sadd.s32 %s76, 1
      %s78 = scalar_select %p75, %s76, %s77
      %p81 = pneg %p75
      %p82 = scmp.eq.s32.totalorder %s28, 1
      %p83 = por %p81, %p82
      %p84 = scmp.ne.s32.totalorder %s76, %s79
      %p85 = scmp.eq.s32.totalorder %s28, 0
      %p86 = por %p84, %p85
      %p87 = scmp.ne.s32.totalorder %s76, %s79
      %p88 = scmp.eq.s32.totalorder %s33, 1
      %p89 = por %p87, %p88
      %p90 = scmp.ne.s32.totalorder %s79, %s80
      %p91 = scmp.eq.s32.totalorder %s33, 0
      %p92 = por %p90, %p91
      %p93 = scmp.ne.s32.totalorder %s79, %s80
      %p94 = scmp.eq.s32.totalorder %s34, 1
      %p95 = por %p93, %p94
      %p97 = scmp.ne.s32.totalorder %s80, %s96
      %p98 = scmp.eq.s32.totalorder %s34, 0
      %p99 = por %p97, %p98
      %s101 = sadd.s32 %s100, 1
      %p104 = scmp.eq.s32.totalorder %s28, 1
      %p105 = scmp.ne.s32.totalorder %s100, %s102
      %p106 = scmp.eq.s32.totalorder %s28, 0
      %p107 = por %p105, %p106
      %p108 = scmp.ne.s32.totalorder %s100, %s102
      %p109 = scmp.eq.s32.totalorder %s33, 1
      %p110 = por %p108, %p109
      %p111 = scmp.ne.s32.totalorder %s102, %s103
      %p112 = scmp.eq.s32.totalorder %s33, 0
      %p113 = por %p111, %p112
      %p114 = scmp.ne.s32.totalorder %s102, %s103
      %p115 = scmp.eq.s32.totalorder %s34, 1
      %p116 = por %p114, %p115
      %p118 = scmp.ne.s32.totalorder %s103, %s117
      %p119 = scmp.eq.s32.totalorder %s34, 0
      %p120 = por %p118, %p119
      %s121 = ssub.s32 %s36, %s43
      %p122 = scmp.eq.s32.totalorder %s121, 0
      %s124 = sadd.s32 %s123, 1
      %s125 = scalar_select %p122, %s123, %s124
      %p128 = pneg %p122
      %p129 = scmp.eq.s32.totalorder %s28, 1
      %p130 = por %p128, %p129
      %p131 = scmp.ne.s32.totalorder %s123, %s126
      %p132 = scmp.eq.s32.totalorder %s28, 0
      %p133 = por %p131, %p132
      %p134 = scmp.ne.s32.totalorder %s123, %s126
      %p135 = scmp.eq.s32.totalorder %s33, 1
      %p136 = por %p134, %p135
      %p137 = scmp.ne.s32.totalorder %s126, %s127
      %p138 = scmp.eq.s32.totalorder %s33, 0
      %p139 = por %p137, %p138
      %p140 = scmp.ne.s32.totalorder %s126, %s127
      %p141 = scmp.eq.s32.totalorder %s34, 1
      %p142 = por %p140, %p141
      %p144 = scmp.ne.s32.totalorder %s127, %s143
      %p145 = scmp.eq.s32.totalorder %s34, 0
      %p146 = por %p144, %p145
      %s147 = ssub.s32 %s36, %s43
      %p148 = scmp.eq.s32.totalorder %s147, 0
      %s150 = sadd.s32 %s149, 1
      %s151 = scalar_select %p148, %s149, %s150
      %p154 = pneg %p148
      %p155 = scmp.eq.s32.totalorder %s28, 1
      %p156 = por %p154, %p155
      %p157 = scmp.ne.s32.totalorder %s149, %s152
      %p158 = scmp.eq.s32.totalorder %s28, 0
      %p159 = por %p157, %p158
      %p160 = scmp.ne.s32.totalorder %s149, %s152
      %p161 = scmp.eq.s32.totalorder %s33, 1
      %p162 = por %p160, %p161
      %p163 = scmp.ne.s32.totalorder %s152, %s153
      %p164 = scmp.eq.s32.totalorder %s33, 0
      %p165 = por %p163, %p164
      %p166 = scmp.ne.s32.totalorder %s152, %s153
      %p167 = scmp.eq.s32.totalorder %s34, 1
      %p168 = por %p166, %p167
      %p170 = scmp.ne.s32.totalorder %s153, %s169
      %p171 = scmp.eq.s32.totalorder %s34, 0
      %p172 = por %p170, %p171
      %s173 = ssub.s32 %s36, %s43
      %p174 = scmp.eq.s32.totalorder %s173, 0
      %s176 = sadd.s32 %s175, 1
      %s177 = scalar_select %p174, %s175, %s176
      %p180 = pneg %p174
      %p181 = scmp.eq.s32.totalorder %s28, 1
      %p182 = por %p180, %p181
      %p183 = scmp.ne.s32.totalorder %s175, %s178
      %p184 = scmp.eq.s32.totalorder %s28, 0
      %p185 = por %p183, %p184
      %p186 = scmp.ne.s32.totalorder %s175, %s178
      %p187 = scmp.eq.s32.totalorder %s33, 1
      %p188 = por %p186, %p187
      %p189 = scmp.ne.s32.totalorder %s178, %s179
      %p190 = scmp.eq.s32.totalorder %s33, 0
      %p191 = por %p189, %p190
      %p192 = scmp.ne.s32.totalorder %s178, %s179
      %p193 = scmp.eq.s32.totalorder %s34, 1
      %p194 = por %p192, %p193
      %p196 = scmp.ne.s32.totalorder %s179, %s195
      %p197 = scmp.eq.s32.totalorder %s34, 0
      %p198 = por %p196, %p197
      %s199 = ssub.s32 %s36, %s43
      %p200 = scmp.eq.s32.totalorder %s199, 0
      %s202 = sadd.s32 %s201, 1
      %s203 = scalar_select %p200, %s201, %s202
      %p206 = pneg %p200
      %p207 = scmp.eq.s32.totalorder %s28, 1
      %p208 = por %p206, %p207
      %p209 = scmp.ne.s32.totalorder %s201, %s204
      %p210 = scmp.eq.s32.totalorder %s28, 0
      %p211 = por %p209, %p210
      %p212 = scmp.ne.s32.totalorder %s201, %s204
      %p213 = scmp.eq.s32.totalorder %s33, 1
      %p214 = por %p212, %p213
      %p215 = scmp.ne.s32.totalorder %s204, %s205
      %p216 = scmp.eq.s32.totalorder %s33, 0
      %p217 = por %p215, %p216
      %p218 = scmp.ne.s32.totalorder %s204, %s205
      %p219 = scmp.eq.s32.totalorder %s34, 1
      %p220 = por %p218, %p219
      %p222 = scmp.ne.s32.totalorder %s205, %s221
      %p223 = scmp.eq.s32.totalorder %s34, 0
      %p224 = por %p222, %p223
      %s225 = ssub.s32 %s36, %s43
      %p226 = scmp.eq.s32.totalorder %s225, 0
      %s228 = sadd.s32 %s227, 1
      %s229 = scalar_select %p226, %s227, %s228
      %p232 = pneg %p226
      %p233 = scmp.eq.s32.totalorder %s28, 1
      %p234 = por %p232, %p233
      %p235 = scmp.ne.s32.totalorder %s227, %s230
      %p236 = scmp.eq.s32.totalorder %s28, 0
      %p237 = por %p235, %p236
      %p238 = scmp.ne.s32.totalorder %s227, %s230
      %p239 = scmp.eq.s32.totalorder %s33, 1
      %p240 = por %p238, %p239
      %p241 = scmp.ne.s32.totalorder %s230, %s231
      %p242 = scmp.eq.s32.totalorder %s33, 0
      %p243 = por %p241, %p242
      %p244 = scmp.ne.s32.totalorder %s230, %s231
      %p245 = scmp.eq.s32.totalorder %s34, 1
      %p246 = por %p244, %p245
      %p248 = scmp.ne.s32.totalorder %s231, %s247
      %p249 = scmp.eq.s32.totalorder %s34, 0
      %p250 = por %p248, %p249
      %s251 = ssub.s32 %s36, %s43
      %p252 = scmp.eq.s32.totalorder %s251, 0
      %s254 = sadd.s32 %s253, 1
      %s255 = scalar_select %p252, %s253, %s254
      %p258 = pneg %p252
      %p259 = scmp.eq.s32.totalorder %s28, 1
      %p260 = por %p258, %p259
      %p261 = scmp.ne.s32.totalorder %s253, %s256
      %p262 = scmp.eq.s32.totalorder %s28, 0
      %p263 = por %p261, %p262
      %p264 = scmp.ne.s32.totalorder %s253, %s256
      %p265 = scmp.eq.s32.totalorder %s33, 1
      %p266 = por %p264, %p265
      %p267 = scmp.ne.s32.totalorder %s256, %s257
      %p268 = scmp.eq.s32.totalorder %s33, 0
      %p269 = por %p267, %p268
      %p270 = scmp.ne.s32.totalorder %s256, %s257
      %p271 = scmp.eq.s32.totalorder %s34, 1
      %p272 = por %p270, %p271
      %p274 = scmp.ne.s32.totalorder %s257, %s273
      %p275 = scmp.eq.s32.totalorder %s34, 0
      %p276 = por %p274, %p275
      %s277 = ssub.s32 %s36, %s43
      %p278 = scmp.eq.s32.totalorder %s277, 0
      %s280 = sadd.s32 %s279, 1
      %s281 = scalar_select %p278, %s279, %s280
      %p284 = pneg %p278
      %p285 = scmp.eq.s32.totalorder %s28, 1
      %p286 = por %p284, %p285
      %p287 = scmp.ne.s32.totalorder %s279, %s282
      %p288 = scmp.eq.s32.totalorder %s28, 0
      %p289 = por %p287, %p288
      %p290 = scmp.ne.s32.totalorder %s279, %s282
      %p291 = scmp.eq.s32.totalorder %s33, 1
      %p292 = por %p290, %p291
      %p293 = scmp.ne.s32.totalorder %s282, %s283
      %p294 = scmp.eq.s32.totalorder %s33, 0
      %p295 = por %p293, %p294
      %p296 = scmp.ne.s32.totalorder %s282, %s283
      %p297 = scmp.eq.s32.totalorder %s34, 1
      %p298 = por %p296, %p297
      %p300 = scmp.ne.s32.totalorder %s283, %s299
      %p301 = scmp.eq.s32.totalorder %s34, 0
      %p302 = por %p300, %p301
      %s303 = ssub.s32 %s36, %s43
      %p304 = scmp.eq.s32.totalorder %s303, 0
      %s306 = sadd.s32 %s305, 1
      %s307 = scalar_select %p304, %s305, %s306
      %p310 = pneg %p304
      %p311 = scmp.eq.s32.totalorder %s28, 1
      %p312 = por %p310, %p311
      %p313 = scmp.ne.s32.totalorder %s305, %s308
      %p314 = scmp.eq.s32.totalorder %s28, 0
      %p315 = por %p313, %p314
      %p316 = scmp.ne.s32.totalorder %s305, %s308
      %p317 = scmp.eq.s32.totalorder %s33, 1
      %p318 = por %p316, %p317
      %p319 = scmp.ne.s32.totalorder %s308, %s309
      %p320 = scmp.eq.s32.totalorder %s33, 0
      %p321 = por %p319, %p320
      %p322 = scmp.ne.s32.totalorder %s308, %s309
      %p323 = scmp.eq.s32.totalorder %s34, 1
      %p324 = por %p322, %p323
      %p326 = scmp.ne.s32.totalorder %s309, %s325
      %p327 = scmp.eq.s32.totalorder %s34, 0
      %p328 = por %p326, %p327
      %s329 = ssub.s32 %s36, %s43
      %p330 = scmp.eq.s32.totalorder %s329, 0
      %s332 = sadd.s32 %s331, 1
      %s333 = scalar_select %p330, %s331, %s332
      %p336 = pneg %p330
      %p337 = scmp.eq.s32.totalorder %s28, 1
      %p338 = por %p336, %p337
      %p339 = scmp.ne.s32.totalorder %s331, %s334
      %p340 = scmp.eq.s32.totalorder %s28, 0
      %p341 = por %p339, %p340
      %p342 = scmp.ne.s32.totalorder %s331, %s334
      %p343 = scmp.eq.s32.totalorder %s33, 1
      %p344 = por %p342, %p343
      %p345 = scmp.ne.s32.totalorder %s334, %s335
      %p346 = scmp.eq.s32.totalorder %s33, 0
      %p347 = por %p345, %p346
      %p348 = scmp.ne.s32.totalorder %s334, %s335
      %p349 = scmp.eq.s32.totalorder %s34, 1
      %p350 = por %p348, %p349
      %p352 = scmp.ne.s32.totalorder %s335, %s351
      %p353 = scmp.eq.s32.totalorder %s34, 0
      %p354 = por %p352, %p353
      %s355 = ssub.s32 %s36, %s43
      %p356 = scmp.eq.s32.totalorder %s355, 0
      %s358 = sadd.s32 %s357, 1
      %s359 = scalar_select %p356, %s357, %s358
      %p362 = pneg %p356
      %p363 = scmp.eq.s32.totalorder %s28, 1
      %p364 = por %p362, %p363
      %p365 = scmp.ne.s32.totalorder %s357, %s360
      %p366 = scmp.eq.s32.totalorder %s28, 0
      %p367 = por %p365, %p366
      %p368 = scmp.ne.s32.totalorder %s357, %s360
      %p369 = scmp.eq.s32.totalorder %s33, 1
      %p370 = por %p368, %p369
      %p371 = scmp.ne.s32.totalorder %s360, %s361
      %p372 = scmp.eq.s32.totalorder %s33, 0
      %p373 = por %p371, %p372
      %p374 = scmp.ne.s32.totalorder %s360, %s361
      %p375 = scmp.eq.s32.totalorder %s34, 1
      %p376 = por %p374, %p375
      %p378 = scmp.ne.s32.totalorder %s361, %s377
      %p379 = scmp.eq.s32.totalorder %s34, 0
      %p380 = por %p378, %p379
      %s381 = ssub.s32 %s36, %s43
      %p382 = scmp.eq.s32.totalorder %s381, 0
      %s384 = sadd.s32 %s383, 1
      %s385 = scalar_select %p382, %s383, %s384
      %p388 = pneg %p382
      %p389 = scmp.eq.s32.totalorder %s28, 1
      %p390 = por %p388, %p389
      %p391 = scmp.ne.s32.totalorder %s383, %s386
      %p392 = scmp.eq.s32.totalorder %s28, 0
      %p393 = por %p391, %p392
      %p394 = scmp.ne.s32.totalorder %s383, %s386
      %p395 = scmp.eq.s32.totalorder %s33, 1
      %p396 = por %p394, %p395
      %p397 = scmp.ne.s32.totalorder %s386, %s387
      %p398 = scmp.eq.s32.totalorder %s33, 0
      %p399 = por %p397, %p398
      %p400 = scmp.ne.s32.totalorder %s386, %s387
      %p401 = scmp.eq.s32.totalorder %s34, 1
      %p402 = por %p400, %p401
      %p404 = scmp.ne.s32.totalorder %s387, %s403
      %p405 = scmp.eq.s32.totalorder %s34, 0
      %p406 = por %p404, %p405
      %s407 = ssub.s32 %s36, %s43
      %p408 = scmp.eq.s32.totalorder %s407, 0
      %s410 = sadd.s32 %s409, 1
      %s411 = scalar_select %p408, %s409, %s410
      %p414 = pneg %p408
      %p415 = scmp.eq.s32.totalorder %s28, 1
      %p416 = por %p414, %p415
      %p417 = scmp.ne.s32.totalorder %s409, %s412
      %p418 = scmp.eq.s32.totalorder %s28, 0
      %p419 = por %p417, %p418
      %p420 = scmp.ne.s32.totalorder %s409, %s412
      %p421 = scmp.eq.s32.totalorder %s33, 1
      %p422 = por %p420, %p421
      %p423 = scmp.ne.s32.totalorder %s412, %s413
      %p424 = scmp.eq.s32.totalorder %s33, 0
      %p425 = por %p423, %p424
      %p426 = scmp.ne.s32.totalorder %s412, %s413
      %p427 = scmp.eq.s32.totalorder %s34, 1
      %p428 = por %p426, %p427
      %p430 = scmp.ne.s32.totalorder %s413, %s429
      %p431 = scmp.eq.s32.totalorder %s34, 0
      %p432 = por %p430, %p431
      %s433 = ssub.s32 %s36, %s43
      %p434 = scmp.eq.s32.totalorder %s433, 0
      %s436 = sadd.s32 %s435, 1
      %s437 = scalar_select %p434, %s435, %s436
      %p440 = pneg %p434
      %p441 = scmp.eq.s32.totalorder %s28, 1
      %p442 = por %p440, %p441
      %p443 = scmp.ne.s32.totalorder %s435, %s438
      %p444 = scmp.eq.s32.totalorder %s28, 0
      %p445 = por %p443, %p444
      %p446 = scmp.ne.s32.totalorder %s435, %s438
      %p447 = scmp.eq.s32.totalorder %s33, 1
      %p448 = por %p446, %p447
      %p449 = scmp.ne.s32.totalorder %s438, %s439
      %p450 = scmp.eq.s32.totalorder %s33, 0
      %p451 = por %p449, %p450
      %p452 = scmp.ne.s32.totalorder %s438, %s439
      %p453 = scmp.eq.s32.totalorder %s34, 1
      %p454 = por %p452, %p453
      %p456 = scmp.ne.s32.totalorder %s439, %s455
      %p457 = scmp.eq.s32.totalorder %s34, 0
      %p458 = por %p456, %p457
      %s459 = ssub.s32 %s36, %s43
      %p460 = scmp.eq.s32.totalorder %s459, 0
      %s462 = sadd.s32 %s461, 1
      %s463 = scalar_select %p460, %s461, %s462
      %p466 = pneg %p460
      %p467 = scmp.eq.s32.totalorder %s28, 1
      %p468 = por %p466, %p467
      %p469 = scmp.ne.s32.totalorder %s461, %s464
      %p470 = scmp.eq.s32.totalorder %s28, 0
      %p471 = por %p469, %p470
      %p472 = scmp.ne.s32.totalorder %s461, %s464
      %p473 = scmp.eq.s32.totalorder %s33, 1
      %p474 = por %p472, %p473
      %p475 = scmp.ne.s32.totalorder %s464, %s465
      %p476 = scmp.eq.s32.totalorder %s33, 0
      %p477 = por %p475, %p476
      %p478 = scmp.ne.s32.totalorder %s464, %s465
      %p479 = scmp.eq.s32.totalorder %s34, 1
      %p480 = por %p478, %p479
      %p482 = scmp.ne.s32.totalorder %s465, %s481
      %p483 = scmp.eq.s32.totalorder %s34, 0
      %p484 = por %p482, %p483
      %s485 = ssub.s32 %s36, %s43
      %p486 = scmp.eq.s32.totalorder %s485, 0
      %s488 = sadd.s32 %s487, 1
      %s489 = scalar_select %p486, %s487, %s488
      %p492 = pneg %p486
      %p493 = scmp.eq.s32.totalorder %s28, 1
      %p494 = por %p492, %p493
      %p495 = scmp.ne.s32.totalorder %s487, %s490
      %p496 = scmp.eq.s32.totalorder %s28, 0
      %p497 = por %p495, %p496
      %p498 = scmp.ne.s32.totalorder %s487, %s490
      %p499 = scmp.eq.s32.totalorder %s33, 1
      %p500 = por %p498, %p499
      %p501 = scmp.ne.s32.totalorder %s490, %s491
      %p502 = scmp.eq.s32.totalorder %s33, 0
      %p503 = por %p501, %p502
      %p504 = scmp.ne.s32.totalorder %s490, %s491
      %p505 = scmp.eq.s32.totalorder %s34, 1
      %p506 = por %p504, %p505
      %p508 = scmp.ne.s32.totalorder %s491, %s507
      %p509 = scmp.eq.s32.totalorder %s34, 0
      %p510 = por %p508, %p509
      %s511 = ssub.s32 %s36, %s43
      %p512 = scmp.eq.s32.totalorder %s511, 0
      %s514 = sadd.s32 %s513, 1
      %s515 = scalar_select %p512, %s513, %s514
      %p518 = pneg %p512
      %p519 = scmp.eq.s32.totalorder %s28, 1
      %p520 = por %p518, %p519
      %p521 = scmp.ne.s32.totalorder %s513, %s516
      %p522 = scmp.eq.s32.totalorder %s28, 0
      %p523 = por %p521, %p522
      %p524 = scmp.ne.s32.totalorder %s513, %s516
      %p525 = scmp.eq.s32.totalorder %s33, 1
      %p526 = por %p524, %p525
      %p527 = scmp.ne.s32.totalorder %s516, %s517
      %p528 = scmp.eq.s32.totalorder %s33, 0
      %p529 = por %p527, %p528
      %p530 = scmp.ne.s32.totalorder %s516, %s517
      %p531 = scmp.eq.s32.totalorder %s34, 1
      %p532 = por %p530, %p531
      %p534 = scmp.ne.s32.totalorder %s517, %s533
      %p535 = scmp.eq.s32.totalorder %s34, 0
      %p536 = por %p534, %p535
      %s537 = ssub.s32 %s35, %s47
      %p538 = scmp.eq.s32.totalorder %s537, 0
      %s540 = sadd.s32 %s539, 1
      %s541 = scalar_select %p538, %s539, %s540
      %p544 = pneg %p538
      %p545 = scmp.eq.s32.totalorder %s28, 1
      %p546 = por %p544, %p545
      %p547 = scmp.ne.s32.totalorder %s539, %s542
      %p548 = scmp.eq.s32.totalorder %s28, 0
      %p549 = por %p547, %p548
      %p550 = scmp.ne.s32.totalorder %s539, %s542
      %p551 = scmp.eq.s32.totalorder %s33, 1
      %p552 = por %p550, %p551
      %p553 = scmp.ne.s32.totalorder %s542, %s543
      %p554 = scmp.eq.s32.totalorder %s33, 0
      %p555 = por %p553, %p554
      %p556 = scmp.ne.s32.totalorder %s542, %s543
      %p557 = scmp.eq.s32.totalorder %s34, 1
      %p558 = por %p556, %p557
      %p560 = scmp.ne.s32.totalorder %s543, %s559
      %p561 = scmp.eq.s32.totalorder %s34, 0
      %p562 = por %p560, %p561
      %p563 = scmp.le.s32.totalorder 1, %s28
      %p564 = scmp.lt.s32.totalorder %s28, 3
      %p565 = pnand %p563, %p564
      %p566 = pneg %p565
      // Predicated region
      $region9: #{tpu_custom_call.1} parent=5 // pred_check
        _
      $region10: #{tpu_custom_call.1} parent=5 // pred_check_branch
        %568 = sbr.rel (%p565) target = $region12
      $region11: #{tpu_custom_call.1} parent=5 // pred_region
        %s569 = ssub.s32 %s28, 1
        // Predicated region
        $region13: #{tpu_custom_call.1} parent=11 // pred_check
          %p570 = pneg %p66
        $region14: #{tpu_custom_call.1} parent=11 // pred_check_branch
          %572 = sbr.rel (%p570) target = $region16
        $region15: #{tpu_custom_call.1} parent=11 // pred_region
          %s573 = smul.u32 4, %s37
          %p574 = scmp.lt.s32.totalorder %s573, 3
          %s575 = scalar_select %p574, %s573, 3
          %s576 = smul.addr %s575, 8
          %s577 = scalar_lea.vmem %s0, %s576
          %s578 = smul.u32 4, %s37
        $region16: #{tpu_custom_call.1} parent=11 // pred_fallthru
          _
        // Predicated region
        $region17: #{tpu_custom_call.1} parent=11 // pred_check
          %p579 = pneg %p92
        $region18: #{tpu_custom_call.1} parent=11 // pred_check_branch
          %581 = sbr.rel (%p579) target = $region20
        $region19: #{tpu_custom_call.1} parent=11 // pred_region
          %s582 = smul.u32 4, %s37
          %s584 = ssub.s32 64, 64
          %585 = vsyncadd [#allocation4], %s584
          %s586 = smul.addr %s582, 16
          %s587 = scalar_lea.hbm %s1, %s586
          %s588 = sshll.u32 [#allocation3], 4
          %s589 = int_to_ptr.vmem [resolvable:$true] %s588
          %594 = dma.hbm_to_vmem [thread:$0]  %s587, 64, %s589, [#allocation4], 16, 16, 1
        $region20: #{tpu_custom_call.1} parent=11 // pred_fallthru
          _
        // Predicated region
        $region21: #{tpu_custom_call.1} parent=11 // pred_check
          %p595 = pneg %p113
        $region22: #{tpu_custom_call.1} parent=11 // pred_check_branch
          %597 = sbr.rel (%p595) target = $region24
        $region23: #{tpu_custom_call.1} parent=11 // pred_region
          %s599 = ssub.s32 128, 128
          %600 = vsyncadd [#allocation7], %s599
          %s602 = sshll.u32 [#allocation6], 4
          %s603 = int_to_ptr.vmem [resolvable:$true] %s602
          %605 = dma.hbm_to_vmem [thread:$0]  %s2, 128, %s603, [#allocation7]
        $region24: #{tpu_custom_call.1} parent=11 // pred_fallthru
          _
      $region12: #{tpu_custom_call.1} parent=5 // pred_fallthru
        _
      %p606 = scmp.lt.s32.totalorder %s28, 2
      // Predicated region
      $region25: #{tpu_custom_call.1} parent=5 // pred_check
        %p607 = pneg %p606
      $region26: #{tpu_custom_call.1} parent=5 // pred_check_branch
        %609 = sbr.rel (%p607) target = $region28
      $region27: #{tpu_custom_call.1} parent=5 // pred_region
        // Predicated region
        $region29: #{tpu_custom_call.1} parent=27 // pred_check
          %p610 = pneg %p133
        $region30: #{tpu_custom_call.1} parent=27 // pred_check_branch
          %612 = sbr.rel (%p610) target = $region32
        $region31: #{tpu_custom_call.1} parent=27 // pred_region
          %p613 = scmp.lt.s32.totalorder %s36, 1
          %s614 = scalar_select %p613, %s36, 1
          %s615 = smul.addr %s614, 4
          %s616 = smul.addr %s615, 4
          %s617 = scalar_lea.vmem %s3, %s616
        $region32: #{tpu_custom_call.1} parent=27 // pred_fallthru
          _
        // Predicated region
        $region33: #{tpu_custom_call.1} parent=27 // pred_check
          %p618 = pneg %p159
        $region34: #{tpu_custom_call.1} parent=27 // pred_check_branch
          %620 = sbr.rel (%p618) target = $region36
        $region35: #{tpu_custom_call.1} parent=27 // pred_region
          %p621 = scmp.lt.s32.totalorder %s36, 1
          %s622 = scalar_select %p621, %s36, 1
          %s623 = smul.addr %s622, 4
          %s624 = smul.addr %s623, 4
          %s625 = scalar_lea.vmem %s4, %s624
        $region36: #{tpu_custom_call.1} parent=27 // pred_fallthru
          _
        // Predicated region
        $region37: #{tpu_custom_call.1} parent=27 // pred_check
          %p626 = pneg %p185
        $region38: #{tpu_custom_call.1} parent=27 // pred_check_branch
          %628 = sbr.rel (%p626) target = $region40
        $region39: #{tpu_custom_call.1} parent=27 // pred_region
          %p629 = scmp.lt.s32.totalorder %s36, 1
          %s630 = scalar_select %p629, %s36, 1
          %s631 = smul.addr %s630, 4
          %s632 = smul.addr %s631, 4
          %s633 = scalar_lea.vmem %s5, %s632
        $region40: #{tpu_custom_call.1} parent=27 // pred_fallthru
          _
        // Predicated region
        $region41: #{tpu_custom_call.1} parent=27 // pred_check
          %p634 = pneg %p211
        $region42: #{tpu_custom_call.1} parent=27 // pred_check_branch
          %636 = sbr.rel (%p634) target = $region44
        $region43: #{tpu_custom_call.1} parent=27 // pred_region
          %p637 = scmp.lt.s32.totalorder %s36, 1
          %s638 = scalar_select %p637, %s36, 1
          %s639 = scalar_lea.vmem %s6, %s638
        $region44: #{tpu_custom_call.1} parent=27 // pred_fallthru
          _
        // Predicated region
        $region45: #{tpu_custom_call.1} parent=27 // pred_check
          %p640 = pneg %p237
        $region46: #{tpu_custom_call.1} parent=27 // pred_check_branch
          %642 = sbr.rel (%p640) target = $region48
        $region47: #{tpu_custom_call.1} parent=27 // pred_region
          %p643 = scmp.lt.s32.totalorder %s36, 1
          %s644 = scalar_select %p643, %s36, 1
          %s645 = scalar_lea.vmem %s7, %s644
        $region48: #{tpu_custom_call.1} parent=27 // pred_fallthru
          _
        // Predicated region
        $region49: #{tpu_custom_call.1} parent=27 // pred_check
          %p646 = pneg %p263
        $region50: #{tpu_custom_call.1} parent=27 // pred_check_branch
          %648 = sbr.rel (%p646) target = $region52
        $region51: #{tpu_custom_call.1} parent=27 // pred_region
          %p649 = scmp.lt.s32.totalorder %s36, 1
          %s650 = scalar_select %p649, %s36, 1
          %s651 = scalar_lea.vmem %s8, %s650
        $region52: #{tpu_custom_call.1} parent=27 // pred_fallthru
          _
        // Predicated region
        $region53: #{tpu_custom_call.1} parent=27 // pred_check
          %p652 = pneg %p289
        $region54: #{tpu_custom_call.1} parent=27 // pred_check_branch
          %654 = sbr.rel (%p652) target = $region56
        $region55: #{tpu_custom_call.1} parent=27 // pred_region
          %p655 = scmp.lt.s32.totalorder %s36, 1
          %s656 = scalar_select %p655, %s36, 1
          %s657 = smul.addr %s656, 4
          %s658 = smul.addr %s657, 4
          %s659 = scalar_lea.vmem %s9, %s658
        $region56: #{tpu_custom_call.1} parent=27 // pred_fallthru
          _
        // Predicated region
        $region57: #{tpu_custom_call.1} parent=27 // pred_check
          %p660 = pneg %p315
        $region58: #{tpu_custom_call.1} parent=27 // pred_check_branch
          %662 = sbr.rel (%p660) target = $region60
        $region59: #{tpu_custom_call.1} parent=27 // pred_region
          %p663 = scmp.lt.s32.totalorder %s36, 1
          %s664 = scalar_select %p663, %s36, 1
          %s665 = scalar_lea.vmem %s10, %s664
        $region60: #{tpu_custom_call.1} parent=27 // pred_fallthru
          _
        // Predicated region
        $region61: #{tpu_custom_call.1} parent=27 // pred_check
          %p666 = pneg %p341
        $region62: #{tpu_custom_call.1} parent=27 // pred_check_branch
          %668 = sbr.rel (%p666) target = $region64
        $region63: #{tpu_custom_call.1} parent=27 // pred_region
          %p669 = scmp.lt.s32.totalorder %s36, 1
          %s670 = scalar_select %p669, %s36, 1
          %s671 = scalar_lea.vmem %s11, %s670
        $region64: #{tpu_custom_call.1} parent=27 // pred_fallthru
          _
        // Predicated region
        $region65: #{tpu_custom_call.1} parent=27 // pred_check
          %p672 = pneg %p367
        $region66: #{tpu_custom_call.1} parent=27 // pred_check_branch
          %674 = sbr.rel (%p672) target = $region68
        $region67: #{tpu_custom_call.1} parent=27 // pred_region
          %p675 = scmp.lt.s32.totalorder %s36, 1
          %s676 = scalar_select %p675, %s36, 1
          %s677 = scalar_lea.vmem %s12, %s676
        $region68: #{tpu_custom_call.1} parent=27 // pred_fallthru
          _
        // Predicated region
        $region69: #{tpu_custom_call.1} parent=27 // pred_check
          %p678 = pneg %p393
        $region70: #{tpu_custom_call.1} parent=27 // pred_check_branch
          %680 = sbr.rel (%p678) target = $region72
        $region71: #{tpu_custom_call.1} parent=27 // pred_region
          %s681 = sand.u32 %s28, 1
          %s682 = scalar_lea.sflag [#allocation4], %s681
          %s683 = sand.u32 %s383, 1
          %s684 = smul.addr %s683, 16
          %s685 = scalar_lea.vmem [#allocation8], %s684
          %s687 = ssub.s32 256, 256
          %688 = vsyncadd %s682, %s687
          %s689 = smul.addr %s36, 4
          %s690 = smul.addr %s689, 64
          %s691 = scalar_lea.hbm %s13, %s690
          %s692 = sshll.u32 %s685, 4
          %s693 = int_to_ptr.vmem [resolvable:$true] %s692
          %698 = dma.hbm_to_vmem [thread:$0]  %s691, 256, %s693, %s682, 64, 64, 4
        $region72: #{tpu_custom_call.1} parent=27 // pred_fallthru
          _
        // Predicated region
        $region73: #{tpu_custom_call.1} parent=27 // pred_check
          %p699 = pneg %p419
        $region74: #{tpu_custom_call.1} parent=27 // pred_check_branch
          %701 = sbr.rel (%p699) target = $region76
        $region75: #{tpu_custom_call.1} parent=27 // pred_region
          %p702 = scmp.lt.s32.totalorder %s36, 1
          %s703 = scalar_select %p702, %s36, 1
          %s704 = scalar_lea.vmem %s14, %s703
        $region76: #{tpu_custom_call.1} parent=27 // pred_fallthru
          _
        // Predicated region
        $region77: #{tpu_custom_call.1} parent=27 // pred_check
          %p705 = pneg %p445
        $region78: #{tpu_custom_call.1} parent=27 // pred_check_branch
          %707 = sbr.rel (%p705) target = $region80
        $region79: #{tpu_custom_call.1} parent=27 // pred_region
          %p708 = scmp.lt.s32.totalorder %s36, 1
          %s709 = scalar_select %p708, %s36, 1
          %s710 = smul.addr %s709, 16
          %s711 = smul.addr %s710, 4
          %s712 = scalar_lea.vmem %s15, %s711
        $region80: #{tpu_custom_call.1} parent=27 // pred_fallthru
          _
        // Predicated region
        $region81: #{tpu_custom_call.1} parent=27 // pred_check
          %p713 = pneg %p471
        $region82: #{tpu_custom_call.1} parent=27 // pred_check_branch
          %715 = sbr.rel (%p713) target = $region84
        $region83: #{tpu_custom_call.1} parent=27 // pred_region
          %p716 = scmp.lt.s32.totalorder %s36, 1
          %s717 = scalar_select %p716, %s36, 1
          %s718 = scalar_lea.vmem %s16, %s717
        $region84: #{tpu_custom_call.1} parent=27 // pred_fallthru
          _
        // Predicated region
        $region85: #{tpu_custom_call.1} parent=27 // pred_check
          %p719 = pneg %p497
        $region86: #{tpu_custom_call.1} parent=27 // pred_check_branch
          %721 = sbr.rel (%p719) target = $region88
        $region87: #{tpu_custom_call.1} parent=27 // pred_region
          %p722 = scmp.lt.s32.totalorder %s36, 1
          %s723 = scalar_select %p722, %s36, 1
          %s724 = scalar_lea.vmem %s17, %s723
        $region88: #{tpu_custom_call.1} parent=27 // pred_fallthru
          _
        // Predicated region
        $region89: #{tpu_custom_call.1} parent=27 // pred_check
          %p725 = pneg %p523
        $region90: #{tpu_custom_call.1} parent=27 // pred_check_branch
          %727 = sbr.rel (%p725) target = $region92
        $region91: #{tpu_custom_call.1} parent=27 // pred_region
          %p728 = scmp.lt.s32.totalorder %s36, 1
          %s729 = scalar_select %p728, %s36, 1
          %s730 = scalar_lea.vmem %s18, %s729
        $region92: #{tpu_custom_call.1} parent=27 // pred_fallthru
          _
      $region28: #{tpu_custom_call.1} parent=5 // pred_fallthru
        _
      %p731 = scmp.le.s32.totalorder 1, %s28
      %p732 = scmp.lt.s32.totalorder %s28, 3
      %p733 = pnand %p731, %p732
      %p734 = pneg %p733
      // Predicated region
      $region93: #{tpu_custom_call.1} parent=5 // pred_check
        _
      $region94: #{tpu_custom_call.1} parent=5 // pred_check_branch
        %736 = sbr.rel (%p733) target = $region96
      $region95: #{tpu_custom_call.1} parent=5 // pred_region
        %s737 = ssub.s32 %s28, 1
        // Predicated region
        $region97: #{tpu_custom_call.1} parent=95 // pred_check
          %p738 = pneg %p92
        $region98: #{tpu_custom_call.1} parent=95 // pred_check_branch
          %740 = sbr.rel (%p738) target = $region100
        $region99: #{tpu_custom_call.1} parent=95 // pred_region
          %741 = dma.done [#allocation4], 64
        $region100: #{tpu_custom_call.1} parent=95 // pred_fallthru
          _
        // Predicated region
        $region101: #{tpu_custom_call.1} parent=95 // pred_check
          %p742 = pneg %p113
        $region102: #{tpu_custom_call.1} parent=95 // pred_check_branch
          %744 = sbr.rel (%p742) target = $region104
        $region103: #{tpu_custom_call.1} parent=95 // pred_region
          %745 = dma.done [#allocation7], 128
        $region104: #{tpu_custom_call.1} parent=95 // pred_fallthru
          _
        %s746 = sand.u32 %s33, 1
        %s747 = scalar_lea.sflag [#allocation4], %s746
        %s748 = sand.u32 %s386, 1
        %s749 = smul.addr %s748, 16
        %s750 = scalar_lea.vmem [#allocation8], %s749
        // Predicated region
        $region105: #{tpu_custom_call.1} parent=95 // pred_check
          %p751 = pneg %p399
        $region106: #{tpu_custom_call.1} parent=95 // pred_check_branch
          %753 = sbr.rel (%p751) target = $region108
        $region107: #{tpu_custom_call.1} parent=95 // pred_region
          %754 = dma.done %s747, 256
        $region108: #{tpu_custom_call.1} parent=95 // pred_fallthru
          _
        %s755 = smul.u32 4, %s37
        %p756 = scmp.lt.s32.totalorder %s755, 3
        %s757 = scalar_select %p756, %s755, 3
        %s758 = smul.addr %s757, 8
        %s759 = scalar_lea.vmem %s0, %s758
        %p760 = pneg %p66
        %p761 = pneg %p63
        %p762 = pneg %p92
        %p763 = pneg %p89
        %p764 = pneg %p113
        %p765 = pneg %p110
        %p766 = scmp.lt.s32.totalorder %s38, 1
        %s767 = scalar_select %p766, %s38, 1
        %s768 = smul.addr %s767, 4
        %s769 = smul.addr %s768, 4
        %s770 = scalar_lea.vmem %s3, %s769
        %p771 = pneg %p139
        %p772 = pneg %p136
        %p773 = scmp.lt.s32.totalorder %s38, 1
        %s774 = scalar_select %p773, %s38, 1
        %s775 = smul.addr %s774, 4
        %s776 = smul.addr %s775, 4
        %s777 = scalar_lea.vmem %s4, %s776
        %p778 = pneg %p165
        %p779 = pneg %p162
        %p780 = scmp.lt.s32.totalorder %s38, 1
        %s781 = scalar_select %p780, %s38, 1
        %s782 = smul.addr %s781, 4
        %s783 = smul.addr %s782, 4
        %s784 = scalar_lea.vmem %s5, %s783
        %p785 = pneg %p191
        %p786 = pneg %p188
        %p787 = scmp.lt.s32.totalorder %s38, 1
        %s788 = scalar_select %p787, %s38, 1
        %s789 = scalar_lea.vmem %s6, %s788
        %p790 = pneg %p217
        %p791 = pneg %p214
        %p792 = scmp.lt.s32.totalorder %s38, 1
        %s793 = scalar_select %p792, %s38, 1
        %s794 = scalar_lea.vmem %s7, %s793
        %p795 = pneg %p243
        %p796 = pneg %p240
        %p797 = scmp.lt.s32.totalorder %s38, 1
        %s798 = scalar_select %p797, %s38, 1
        %s799 = scalar_lea.vmem %s8, %s798
        %p800 = pneg %p269
        %p801 = pneg %p266
        %p802 = scmp.lt.s32.totalorder %s38, 1
        %s803 = scalar_select %p802, %s38, 1
        %s804 = smul.addr %s803, 4
        %s805 = smul.addr %s804, 4
        %s806 = scalar_lea.vmem %s9, %s805
        %p807 = pneg %p295
        %p808 = pneg %p292
        %p809 = scmp.lt.s32.totalorder %s38, 1
        %s810 = scalar_select %p809, %s38, 1
        %s811 = scalar_lea.vmem %s10, %s810
        %p812 = pneg %p321
        %p813 = pneg %p318
        %p814 = scmp.lt.s32.totalorder %s38, 1
        %s815 = scalar_select %p814, %s38, 1
        %s816 = scalar_lea.vmem %s11, %s815
        %p817 = pneg %p347
        %p818 = pneg %p344
        %p819 = scmp.lt.s32.totalorder %s38, 1
        %s820 = scalar_select %p819, %s38, 1
        %s821 = scalar_lea.vmem %s12, %s820
        %p822 = pneg %p373
        %p823 = pneg %p370
        %s824 = sand.u32 %s33, 1
        %s825 = scalar_lea.sflag [#allocation4], %s824
        %s826 = sand.u32 %s386, 1
        %s827 = smul.addr %s826, 16
        %s828 = scalar_lea.vmem [#allocation8], %s827
        %p829 = pneg %p399
        %p830 = pneg %p396
        %p831 = scmp.lt.s32.totalorder %s38, 1
        %s832 = scalar_select %p831, %s38, 1
        %s833 = scalar_lea.vmem %s14, %s832
        %p834 = pneg %p425
        %p835 = pneg %p422
        %p836 = scmp.lt.s32.totalorder %s38, 1
        %s837 = scalar_select %p836, %s38, 1
        %s838 = smul.addr %s837, 16
        %s839 = smul.addr %s838, 4
        %s840 = scalar_lea.vmem %s15, %s839
        %p841 = pneg %p451
        %p842 = pneg %p448
        %p843 = scmp.lt.s32.totalorder %s38, 1
        %s844 = scalar_select %p843, %s38, 1
        %s845 = scalar_lea.vmem %s16, %s844
        %p846 = pneg %p477
        %p847 = pneg %p474
        %p848 = scmp.lt.s32.totalorder %s38, 1
        %s849 = scalar_select %p848, %s38, 1
        %s850 = scalar_lea.vmem %s17, %s849
        %p851 = pneg %p503
        %p852 = pneg %p500
        %p853 = scmp.lt.s32.totalorder %s38, 1
        %s854 = scalar_select %p853, %s38, 1
        %s855 = scalar_lea.vmem %s18, %s854
        %p856 = pneg %p529
        %p857 = pneg %p526
        %p858 = pneg %p555
        %p859 = pneg %p552
        %s860 = smul.u32 4, %s37
        %p861 = scmp.lt.s32.totalorder %s860, 3
        %s862 = scalar_select %p861, %s860, 3
        %s863 = smul.addr %s862, 8
        %s864 = scalar_lea.vmem %s0, %s863
        %s865 = smul.u32 4, %s37
        %s866 = smul.u32 4, %s37
        %p867 = scmp.lt.s32.totalorder %s38, 1
        %s868 = scalar_select %p867, %s38, 1
        %s869 = smul.addr %s868, 4
        %s870 = smul.addr %s869, 4
        %s871 = scalar_lea.vmem %s3, %s870
        %p872 = scmp.lt.s32.totalorder %s38, 1
        %s873 = scalar_select %p872, %s38, 1
        %s874 = smul.addr %s873, 4
        %s875 = smul.addr %s874, 4
        %s876 = scalar_lea.vmem %s4, %s875
        %p877 = scmp.lt.s32.totalorder %s38, 1
        %s878 = scalar_select %p877, %s38, 1
        %s879 = smul.addr %s878, 4
        %s880 = smul.addr %s879, 4
        %s881 = scalar_lea.vmem %s5, %s880
        %p882 = scmp.lt.s32.totalorder %s38, 1
        %s883 = scalar_select %p882, %s38, 1
        %s884 = scalar_lea.vmem %s6, %s883
        %p885 = scmp.lt.s32.totalorder %s38, 1
        %s886 = scalar_select %p885, %s38, 1
        %s887 = scalar_lea.vmem %s7, %s886
        %p888 = scmp.lt.s32.totalorder %s38, 1
        %s889 = scalar_select %p888, %s38, 1
        %s890 = scalar_lea.vmem %s8, %s889
        %p891 = scmp.lt.s32.totalorder %s38, 1
        %s892 = scalar_select %p891, %s38, 1
        %s893 = smul.addr %s892, 4
        %s894 = smul.addr %s893, 4
        %s895 = scalar_lea.vmem %s9, %s894
        %p896 = scmp.lt.s32.totalorder %s38, 1
        %s897 = scalar_select %p896, %s38, 1
        %s898 = scalar_lea.vmem %s10, %s897
        %p899 = scmp.lt.s32.totalorder %s38, 1
        %s900 = scalar_select %p899, %s38, 1
        %s901 = scalar_lea.vmem %s11, %s900
        %p902 = scmp.lt.s32.totalorder %s38, 1
        %s903 = scalar_select %p902, %s38, 1
        %s904 = scalar_lea.vmem %s12, %s903
        %p905 = scmp.lt.s32.totalorder %s38, 1
        %s906 = scalar_select %p905, %s38, 1
        %s907 = scalar_lea.vmem %s14, %s906
        %p908 = scmp.lt.s32.totalorder %s38, 1
        %s909 = scalar_select %p908, %s38, 1
        %s910 = smul.addr %s909, 16
        %s911 = smul.addr %s910, 4
        %s912 = scalar_lea.vmem %s15, %s911
        %p913 = scmp.lt.s32.totalorder %s38, 1
        %s914 = scalar_select %p913, %s38, 1
        %s915 = scalar_lea.vmem %s16, %s914
        %p916 = scmp.lt.s32.totalorder %s38, 1
        %s917 = scalar_select %p916, %s38, 1
        %s918 = scalar_lea.vmem %s17, %s917
        %p919 = scmp.lt.s32.totalorder %s38, 1
        %s920 = scalar_select %p919, %s38, 1
        %s921 = scalar_lea.vmem %s18, %s920
        %s922 = smul.u32 4, %s37
        %p924 = scmp.eq.s32.totalorder %s38, 0
        // Predicated region
        $region109: #{tpu_custom_call.1} parent=95 // pred_check
          %p925 = pneg %p924
        $region110: #{tpu_custom_call.1} parent=95 // pred_check_branch
          %927 = sbr.rel (%p925) target = $region112
        $region111: #{tpu_custom_call.1} parent=95 // pred_region
          %v928 = vld [vmem:[%s864] sm:$0xff]
          %v929 = vld [vmem:[%s864 + $0x8] sm:$0xff]
          %v930 = vld [vmem:[%s864 + $0x10] sm:$0xff]
          %v931 = vld [vmem:[%s864 + $0x18] sm:$0xff]
          %v932 = vld [vmem:[#allocation3] sm:$0x1]
          %v933 = vld [vmem:[#allocation3 + $0x1] sm:$0x1]
          %v934 = vld [vmem:[#allocation3 + $0x2] sm:$0x1]
          %v935 = vld [vmem:[#allocation3 + $0x3] sm:$0x1]
          %v940 = vlaneseq
          %v941 = vshrl.u32 %v940, 7
          %v942 = vsub.s32 0, %v941
          %v943 = vrot.slane %v932, %v942
          %v944 = vlaneseq
          %v945 = vshrl.u32 %v944, 7
          %v946 = vsub.s32 0, %v945
          %v947 = vrot.slane %v933, %v946
          %v948 = vlaneseq
          %v949 = vshrl.u32 %v948, 7
          %v950 = vsub.s32 0, %v949
          %v951 = vrot.slane %v934, %v950
          %v952 = vlaneseq
          %v953 = vshrl.u32 %v952, 7
          %v954 = vsub.s32 0, %v953
          %v955 = vrot.slane %v935, %v954
          %v960 = vadd.f32 %v928, %v943
          %v961 = vadd.f32 %v929, %v947
          %v962 = vadd.f32 %v930, %v951
          %v963 = vadd.f32 %v931, %v955
          %vm964 = vcmask 261120
          %965 = vst.msk [vmem:[#allocation2] sm:$0xff] %vm964, %v960
          %966 = vst.msk [vmem:[#allocation2 + $0x8] sm:$0xff] %vm964, %v961
          %967 = vst.msk [vmem:[#allocation2 + $0x10] sm:$0xff] %vm964, %v962
          %968 = vst.msk [vmem:[#allocation2 + $0x18] sm:$0xff] %vm964, %v963
        $region112: #{tpu_custom_call.1} parent=95 // pred_fallthru
          _
        %v969 = vld [vmem:[#allocation2] sm:$0xff]
        %v970 = vld [vmem:[#allocation2 + $0x8] sm:$0xff]
        %v971 = vld [vmem:[#allocation2 + $0x10] sm:$0xff]
        %v972 = vld [vmem:[#allocation2 + $0x18] sm:$0xff]
        %v973 = vpack.c.bf16 %v970, %v969
        %v974 = vpack.c.bf16 %v972, %v971
        %v975 = vld [vmem:[%s871] sm:$0xf]
        %v976 = vld [vmem:[%s871 + $0x4] sm:$0xf]
        %v977 = vld [vmem:[%s871 + $0x8] sm:$0xf]
        %v978 = vld [vmem:[%s871 + $0xc] sm:$0xf]
        %v979 = vld [vmem:[%s884] sm:$0x1]
        %v981 = vlaneseq
        %v982 = vshrl.u32 %v981, 7
        %v983 = vsub.s32 0, %v982
        %v984 = vrot.slane %v979, %v983
        %v990 = vunpack.c.l.b16 %v975
        %v991 = vunpack.c.l.b16 %v976
        %v992 = vunpack.c.l.b16 %v977
        %v993 = vunpack.c.l.b16 %v978
        %v994 = vpack.c.b16 %v991, %v990
        %v995 = vpack.c.b16 %v993, %v992
        %vm998 = vcmask 261120
        %v1000 = vsel %vm998, %v973, 0
        %v1003 = vsel %vm998, %v974, 0
        %1005 = vmatprep.subr.bf16.mxu0 0
        %1006 = vmatpush1.bf16.msra.mxu0 %v994
        %1007 = vmatprep.subr.bf16.mxu0 0
        %1008 = vmatpush1.bf16.msra.mxu0 %v995
        %1009 = vmatprep.subr.bf16.mxu0 0
        %1010 = vmatpush1.bf16.msra.mxu0 0
        %1011 = vmatprep.subr.bf16.mxu0 0
        %1012 = vmatpush1.bf16.msra.mxu0 0
        %1013 = vmatprep.subr.bf16.mxu0 0
        %1014 = vmatpush1.bf16.msra.mxu0 0
        %1015 = vmatprep.subr.bf16.mxu0 0
        %1016 = vmatpush1.bf16.msra.mxu0 0
        %1017 = vmatprep.subr.bf16.mxu0 0
        %1018 = vmatpush1.bf16.msra.mxu0 0
        %1019 = vmatprep.subr.bf16.mxu0 0
        %1020 = vmatpush1.bf16.msra.mxu0 0
        %1021 = vmatprep.subr.bf16.mxu0 0
        %1022 = vmatpush1.bf16.msra.mxu0 0
        %1023 = vmatprep.subr.bf16.mxu0 0
        %1024 = vmatpush1.bf16.msra.mxu0 0
        %1025 = vmatprep.subr.bf16.mxu0 0
        %1026 = vmatpush1.bf16.msra.mxu0 0
        %1027 = vmatprep.subr.bf16.mxu0 0
        %1028 = vmatpush1.bf16.msra.mxu0 0
        %1029 = vmatprep.subr.bf16.mxu0 0
        %1030 = vmatpush1.bf16.msra.mxu0 0
        %1031 = vmatprep.subr.bf16.mxu0 0
        %1032 = vmatpush1.bf16.msra.mxu0 0
        %1033 = vmatprep.subr.bf16.mxu0 0
        %1034 = vmatpush1.bf16.msra.mxu0 0
        %1035 = vmatprep.subr.bf16.mxu0 0
        %1036 = vmatpush1.bf16.msra.mxu0 0
        %1037 = vmatprep.mubr.bf16.mxu0 0
        %1038 = vmatmul.mubr.bf16.gmra.mrb[0].mxu0 %v1000
        %v1039 = vpop.f32.mrb[0].mxu0
        %v1040 = vadd.f32 %v984, %v1039
        %v1041 = vpop.f32.mrb[0].mxu0
        %v1042 = vpop.f32.mrb[0].mxu0
        %v1043 = vadd.f32 %v984, %v1042
        %v1044 = vpop.f32.mrb[0].mxu0
        %1045 = vmatprep.mubr.bf16.mxu0 0
        %1046 = vmatmul.mubr.bf16.gmra.mrb[0].mxu0 %v1003
        %v1047 = vpop.f32.mrb[0].mxu0
        %v1048 = vadd.f32 %v984, %v1047
        %v1049 = vpop.f32.mrb[0].mxu0
        %v1050 = vpop.f32.mrb[0].mxu0
        %v1051 = vadd.f32 %v984, %v1050
        %v1052 = vpop.f32.mrb[0].mxu0
        %1053 = vdwg.mxu0
        %v1054 = vmul.f32 %v1040, 0.35355338
        %v1055 = vmul.f32 %v1043, 0.35355338
        %v1056 = vmul.f32 %v1048, 0.35355338
        %v1057 = vmul.f32 %v1051, 0.35355338
        %v1058 = vld [vmem:[%s876] sm:$0xf]
        %v1059 = vld [vmem:[%s876 + $0x4] sm:$0xf]
        %v1060 = vld [vmem:[%s876 + $0x8] sm:$0xf]
        %v1061 = vld [vmem:[%s876 + $0xc] sm:$0xf]
        %v1062 = vld [vmem:[%s887] sm:$0x1]
        %v1064 = vlaneseq
        %v1065 = vshrl.u32 %v1064, 7
        %v1066 = vsub.s32 0, %v1065
        %v1067 = vrot.slane %v1062, %v1066
        %v1073 = vunpack.c.l.b16 %v1058
        %v1074 = vunpack.c.l.b16 %v1059
        %v1075 = vunpack.c.l.b16 %v1060
        %v1076 = vunpack.c.l.b16 %v1061
        %v1077 = vpack.c.b16 %v1074, %v1073
        %v1078 = vpack.c.b16 %v1076, %v1075
        %1081 = vmatprep.subr.bf16.mxu0 0
        %1082 = vmatpush1.bf16.msra.mxu0 %v1077
        %1083 = vmatprep.subr.bf16.mxu0 0
        %1084 = vmatpush1.bf16.msra.mxu0 %v1078
        %1085 = vmatprep.subr.bf16.mxu0 0
        %1086 = vmatpush1.bf16.msra.mxu0 0
        %1087 = vmatprep.subr.bf16.mxu0 0
        %1088 = vmatpush1.bf16.msra.mxu0 0
        %1089 = vmatprep.subr.bf16.mxu0 0
        %1090 = vmatpush1.bf16.msra.mxu0 0
        %1091 = vmatprep.subr.bf16.mxu0 0
        %1092 = vmatpush1.bf16.msra.mxu0 0
        %1093 = vmatprep.subr.bf16.mxu0 0
        %1094 = vmatpush1.bf16.msra.mxu0 0
        %1095 = vmatprep.subr.bf16.mxu0 0
        %1096 = vmatpush1.bf16.msra.mxu0 0
        %1097 = vmatprep.subr.bf16.mxu0 0
        %1098 = vmatpush1.bf16.msra.mxu0 0
        %1099 = vmatprep.subr.bf16.mxu0 0
        %1100 = vmatpush1.bf16.msra.mxu0 0
        %1101 = vmatprep.subr.bf16.mxu0 0
        %1102 = vmatpush1.bf16.msra.mxu0 0
        %1103 = vmatprep.subr.bf16.mxu0 0
        %1104 = vmatpush1.bf16.msra.mxu0 0
        %1105 = vmatprep.subr.bf16.mxu0 0
        %1106 = vmatpush1.bf16.msra.mxu0 0
        %1107 = vmatprep.subr.bf16.mxu0 0
        %1108 = vmatpush1.bf16.msra.mxu0 0
        %1109 = vmatprep.subr.bf16.mxu0 0
        %1110 = vmatpush1.bf16.msra.mxu0 0
        %1111 = vmatprep.subr.bf16.mxu0 0
        %1112 = vmatpush1.bf16.msra.mxu0 0
        %1113 = vmatprep.mubr.bf16.mxu0 0
        %1114 = vmatmul.mubr.bf16.gmra.mrb[0].mxu0 %v1000
        %v1115 = vpop.f32.mrb[0].mxu0
        %v1116 = vadd.f32 %v1067, %v1115
        %v1117 = vpop.f32.mrb[0].mxu0
        %v1118 = vpop.f32.mrb[0].mxu0
        %v1119 = vadd.f32 %v1067, %v1118
        %v1120 = vpop.f32.mrb[0].mxu0
        %1121 = vmatprep.mubr.bf16.mxu0 0
        %1122 = vmatmul.mubr.bf16.gmra.mrb[0].mxu0 %v1003
        %v1123 = vpop.f32.mrb[0].mxu0
        %v1124 = vadd.f32 %v1067, %v1123
        %v1125 = vpop.f32.mrb[0].mxu0
        %v1126 = vpop.f32.mrb[0].mxu0
        %v1127 = vadd.f32 %v1067, %v1126
        %v1128 = vpop.f32.mrb[0].mxu0
        %1129 = vdwg.mxu0
        %v1130 = vld [vmem:[%s881] sm:$0xf]
        %v1131 = vld [vmem:[%s881 + $0x4] sm:$0xf]
        %v1132 = vld [vmem:[%s881 + $0x8] sm:$0xf]
        %v1133 = vld [vmem:[%s881 + $0xc] sm:$0xf]
        %v1134 = vld [vmem:[%s890] sm:$0x1]
        %v1136 = vlaneseq
        %v1137 = vshrl.u32 %v1136, 7
        %v1138 = vsub.s32 0, %v1137
        %v1139 = vrot.slane %v1134, %v1138
        %v1145 = vunpack.c.l.b16 %v1130
        %v1146 = vunpack.c.l.b16 %v1131
        %v1147 = vunpack.c.l.b16 %v1132
        %v1148 = vunpack.c.l.b16 %v1133
        %v1149 = vpack.c.b16 %v1146, %v1145
        %v1150 = vpack.c.b16 %v1148, %v1147
        %1153 = vmatprep.subr.bf16.mxu0 0
        %1154 = vmatpush1.bf16.msra.mxu0 %v1149
        %1155 = vmatprep.subr.bf16.mxu0 0
        %1156 = vmatpush1.bf16.msra.mxu0 %v1150
        %1157 = vmatprep.subr.bf16.mxu0 0
        %1158 = vmatpush1.bf16.msra.mxu0 0
        %1159 = vmatprep.subr.bf16.mxu0 0
        %1160 = vmatpush1.bf16.msra.mxu0 0
        %1161 = vmatprep.subr.bf16.mxu0 0
        %1162 = vmatpush1.bf16.msra.mxu0 0
        %1163 = vmatprep.subr.bf16.mxu0 0
        %1164 = vmatpush1.bf16.msra.mxu0 0
        %1165 = vmatprep.subr.bf16.mxu0 0
        %1166 = vmatpush1.bf16.msra.mxu0 0
        %1167 = vmatprep.subr.bf16.mxu0 0
        %1168 = vmatpush1.bf16.msra.mxu0 0
        %1169 = vmatprep.subr.bf16.mxu0 0
        %1170 = vmatpush1.bf16.msra.mxu0 0
        %1171 = vmatprep.subr.bf16.mxu0 0
        %1172 = vmatpush1.bf16.msra.mxu0 0
        %1173 = vmatprep.subr.bf16.mxu0 0
        %1174 = vmatpush1.bf16.msra.mxu0 0
        %1175 = vmatprep.subr.bf16.mxu0 0
        %1176 = vmatpush1.bf16.msra.mxu0 0
        %1177 = vmatprep.subr.bf16.mxu0 0
        %1178 = vmatpush1.bf16.msra.mxu0 0
        %1179 = vmatprep.subr.bf16.mxu0 0
        %1180 = vmatpush1.bf16.msra.mxu0 0
        %1181 = vmatprep.subr.bf16.mxu0 0
        %1182 = vmatpush1.bf16.msra.mxu0 0
        %1183 = vmatprep.subr.bf16.mxu0 0
        %1184 = vmatpush1.bf16.msra.mxu0 0
        %1185 = vmatprep.mubr.bf16.mxu0 0
        %1186 = vmatmul.mubr.bf16.gmra.mrb[0].mxu0 %v1000
        %v1187 = vpop.f32.mrb[0].mxu0
        %v1188 = vadd.f32 %v1139, %v1187
        %v1189 = vpop.f32.mrb[0].mxu0
        %v1190 = vpop.f32.mrb[0].mxu0
        %v1191 = vadd.f32 %v1139, %v1190
        %v1192 = vpop.f32.mrb[0].mxu0
        %1193 = vmatprep.mubr.bf16.mxu0 0
        %1194 = vmatmul.mubr.bf16.gmra.mrb[0].mxu0 %v1003
        %v1195 = vpop.f32.mrb[0].mxu0
        %v1196 = vadd.f32 %v1139, %v1195
        %v1197 = vpop.f32.mrb[0].mxu0
        %v1198 = vpop.f32.mrb[0].mxu0
        %v1199 = vadd.f32 %v1139, %v1198
        %v1200 = vpop.f32.mrb[0].mxu0
        %1201 = vdwg.mxu0
        %v1202 = vld [vmem:[#allocation6] sm:$0xff]
        %v1203 = vpack.c.bf16 %v1055, %v1054
        %v1204 = vpack.c.bf16 %v1057, %v1056
        %v1207 = vunpack.c.l.b16 %v1203
        %v1208 = vunpack.c.h.b16 %v1203
        %v1209 = vunpack.c.l.b16 %v1204
        %v1210 = vunpack.c.h.b16 %v1204
        %v1211 = vpack.c.b16 %v1207, %v1207
        %v1212 = vpack.c.b16 %v1208, %v1208
        %v1213 = vpack.c.b16 %v1209, %v1209
        %v1214 = vpack.c.b16 %v1210, %v1210
        %v1215 = vpack.c.bf16 %v1119, %v1116
        %v1216 = vpack.c.bf16 %v1127, %v1124
        %v1219 = vunpack.c.l.b16 %v1215
        %v1220 = vunpack.c.h.b16 %v1215
        %v1221 = vunpack.c.l.b16 %v1216
        %v1222 = vunpack.c.h.b16 %v1216
        %v1223 = vpack.c.b16 %v1219, %v1219
        %v1224 = vpack.c.b16 %v1220, %v1220
        %v1225 = vpack.c.b16 %v1221, %v1221
        %v1226 = vpack.c.b16 %v1222, %v1222
        %v1227 = vpack.c.bf16 %v1191, %v1188
        %v1228 = vpack.c.bf16 %v1199, %v1196
        %v1231 = vunpack.c.l.b16 %v1227
        %v1232 = vunpack.c.h.b16 %v1227
        %v1233 = vunpack.c.l.b16 %v1228
        %v1234 = vunpack.c.h.b16 %v1228
        %v1235 = vpack.c.b16 %v1231, %v1231
        %v1236 = vpack.c.b16 %v1232, %v1232
        %v1237 = vpack.c.b16 %v1233, %v1233
        %v1238 = vpack.c.b16 %v1234, %v1234
        %vm1239 = vcmask 64512
        %v1241 = vsel %vm1239, %v1211, 0
        %v1244 = vsel %vm1239, %v1223, 0
        %1246 = vmatprep.subr.bf16.mxu0 0
        %1247 = vmatpush1.bf16.xpose.msra.mxu0 %v1244
        %1248 = vmatprep.subr.bf16.mxu0 0
        %1249 = vmatpush1.bf16.xpose.msra.mxu0 0
        %1250 = vmatprep.subr.bf16.mxu0 0
        %1251 = vmatpush1.bf16.xpose.msra.mxu0 0
        %1252 = vmatprep.subr.bf16.mxu0 0
        %1253 = vmatpush1.bf16.xpose.msra.mxu0 0
        %1254 = vmatprep.subr.bf16.mxu0 0
        %1255 = vmatpush1.bf16.xpose.msra.mxu0 0
        %1256 = vmatprep.subr.bf16.mxu0 0
        %1257 = vmatpush1.bf16.xpose.msra.mxu0 0
        %1258 = vmatprep.subr.bf16.mxu0 0
        %1259 = vmatpush1.bf16.xpose.msra.mxu0 0
        %1260 = vmatprep.subr.bf16.mxu0 0
        %1261 = vmatpush1.bf16.xpose.msra.mxu0 0
        %1262 = vmatprep.subr.bf16.mxu0 0
        %1263 = vmatpush1.bf16.xpose.msra.mxu0 0
        %1264 = vmatprep.subr.bf16.mxu0 0
        %1265 = vmatpush1.bf16.xpose.msra.mxu0 0
        %1266 = vmatprep.subr.bf16.mxu0 0
        %1267 = vmatpush1.bf16.xpose.msra.mxu0 0
        %1268 = vmatprep.subr.bf16.mxu0 0
        %1269 = vmatpush1.bf16.xpose.msra.mxu0 0
        %1270 = vmatprep.subr.bf16.mxu0 0
        %1271 = vmatpush1.bf16.xpose.msra.mxu0 0
        %1272 = vmatprep.subr.bf16.mxu0 0
        %1273 = vmatpush1.bf16.xpose.msra.mxu0 0
        %1274 = vmatprep.subr.bf16.mxu0 0
        %1275 = vmatpush1.bf16.xpose.msra.mxu0 0
        %1276 = vmatprep.subr.bf16.mxu0 0
        %1277 = vmatpush1.bf16.xpose.msra.mxu0 0
        %1278 = vmatprep.mubr.bf16.mxu0 0
        %1279 = vmatmul.mubr.bf16.gmra.mrb[0].mxu0 %v1241
        %v1280 = vpop.f32.mrb[0].mxu0
        %v1281 = vadd.f32 %v1202, %v1280
        %v1282 = vpop.f32.mrb[0].mxu0
        %v1283 = vpop.f32.mrb[0].mxu0
        %v1284 = vpop.f32.mrb[0].mxu0
        %1285 = vdwg.mxu0
        %v1287 = vsel %vm1239, %v1212, 0
        %v1290 = vsel %vm1239, %v1224, 0
        %1292 = vmatprep.subr.bf16.mxu0 0
        %1293 = vmatpush1.bf16.xpose.msra.mxu0 %v1290
        %1294 = vmatprep.subr.bf16.mxu0 0
        %1295 = vmatpush1.bf16.xpose.msra.mxu0 0
        %1296 = vmatprep.subr.bf16.mxu0 0
        %1297 = vmatpush1.bf16.xpose.msra.mxu0 0
        %1298 = vmatprep.subr.bf16.mxu0 0
        %1299 = vmatpush1.bf16.xpose.msra.mxu0 0
        %1300 = vmatprep.subr.bf16.mxu0 0
        %1301 = vmatpush1.bf16.xpose.msra.mxu0 0
        %1302 = vmatprep.subr.bf16.mxu0 0
        %1303 = vmatpush1.bf16.xpose.msra.mxu0 0
        %1304 = vmatprep.subr.bf16.mxu0 0
        %1305 = vmatpush1.bf16.xpose.msra.mxu0 0
        %1306 = vmatprep.subr.bf16.mxu0 0
        %1307 = vmatpush1.bf16.xpose.msra.mxu0 0
        %1308 = vmatprep.subr.bf16.mxu0 0
        %1309 = vmatpush1.bf16.xpose.msra.mxu0 0
        %1310 = vmatprep.subr.bf16.mxu0 0
        %1311 = vmatpush1.bf16.xpose.msra.mxu0 0
        %1312 = vmatprep.subr.bf16.mxu0 0
        %1313 = vmatpush1.bf16.xpose.msra.mxu0 0
        %1314 = vmatprep.subr.bf16.mxu0 0
        %1315 = vmatpush1.bf16.xpose.msra.mxu0 0
        %1316 = vmatprep.subr.bf16.mxu0 0
        %1317 = vmatpush1.bf16.xpose.msra.mxu0 0
        %1318 = vmatprep.subr.bf16.mxu0 0
        %1319 = vmatpush1.bf16.xpose.msra.mxu0 0
        %1320 = vmatprep.subr.bf16.mxu0 0
        %1321 = vmatpush1.bf16.xpose.msra.mxu0 0
        %1322 = vmatprep.subr.bf16.mxu0 0
        %1323 = vmatpush1.bf16.xpose.msra.mxu0 0
        %1324 = vmatprep.mubr.bf16.mxu0 0
        %1325 = vmatmul.mubr.bf16.gmra.mrb[0].mxu0 %v1287
        %v1326 = vpop.f32.mrb[0].mxu0
        %v1327 = vadd.f32 %v1202, %v1326
        %v1328 = vpop.f32.mrb[0].mxu0
        %v1329 = vpop.f32.mrb[0].mxu0
        %v1330 = vpop.f32.mrb[0].mxu0
        %1331 = vdwg.mxu0
        %v1333 = vsel %vm1239, %v1213, 0
        %v1336 = vsel %vm1239, %v1225, 0
        %1338 = vmatprep.subr.bf16.mxu0 0
        %1339 = vmatpush1.bf16.xpose.msra.mxu0 %v1336
        %1340 = vmatprep.subr.bf16.mxu0 0
        %1341 = vmatpush1.bf16.xpose.msra.mxu0 0
        %1342 = vmatprep.subr.bf16.mxu0 0
        %1343 = vmatpush1.bf16.xpose.msra.mxu0 0
        %1344 = vmatprep.subr.bf16.mxu0 0
        %1345 = vmatpush1.bf16.xpose.msra.mxu0 0
        %1346 = vmatprep.subr.bf16.mxu0 0
        %1347 = vmatpush1.bf16.xpose.msra.mxu0 0
        %1348 = vmatprep.subr.bf16.mxu0 0
        %1349 = vmatpush1.bf16.xpose.msra.mxu0 0
        %1350 = vmatprep.subr.bf16.mxu0 0
        %1351 = vmatpush1.bf16.xpose.msra.mxu0 0
        %1352 = vmatprep.subr.bf16.mxu0 0
        %1353 = vmatpush1.bf16.xpose.msra.mxu0 0
        %1354 = vmatprep.subr.bf16.mxu0 0
        %1355 = vmatpush1.bf16.xpose.msra.mxu0 0
        %1356 = vmatprep.subr.bf16.mxu0 0
        %1357 = vmatpush1.bf16.xpose.msra.mxu0 0
        %1358 = vmatprep.subr.bf16.mxu0 0
        %1359 = vmatpush1.bf16.xpose.msra.mxu0 0
        %1360 = vmatprep.subr.bf16.mxu0 0
        %1361 = vmatpush1.bf16.xpose.msra.mxu0 0
        %1362 = vmatprep.subr.bf16.mxu0 0
        %1363 = vmatpush1.bf16.xpose.msra.mxu0 0
        %1364 = vmatprep.subr.bf16.mxu0 0
        %1365 = vmatpush1.bf16.xpose.msra.mxu0 0
        %1366 = vmatprep.subr.bf16.mxu0 0
        %1367 = vmatpush1.bf16.xpose.msra.mxu0 0
        %1368 = vmatprep.subr.bf16.mxu0 0
        %1369 = vmatpush1.bf16.xpose.msra.mxu0 0
        %1370 = vmatprep.mubr.bf16.mxu0 0
        %1371 = vmatmul.mubr.bf16.gmra.mrb[0].mxu0 %v1333
        %v1372 = vpop.f32.mrb[0].mxu0
        %v1373 = vadd.f32 %v1202, %v1372
        %v1374 = vpop.f32.mrb[0].mxu0
        %v1375 = vpop.f32.mrb[0].mxu0
        %v1376 = vpop.f32.mrb[0].mxu0
        %1377 = vdwg.mxu0
        %v1379 = vsel %vm1239, %v1214, 0
        %v1382 = vsel %vm1239, %v1226, 0
        %1384 = vmatprep.subr.bf16.mxu0 0
        %1385 = vmatpush1.bf16.xpose.msra.mxu0 %v1382
        %1386 = vmatprep.subr.bf16.mxu0 0
        %1387 = vmatpush1.bf16.xpose.msra.mxu0 0
        %1388 = vmatprep.subr.bf16.mxu0 0
        %1389 = vmatpush1.bf16.xpose.msra.mxu0 0
        %1390 = vmatprep.subr.bf16.mxu0 0
        %1391 = vmatpush1.bf16.xpose.msra.mxu0 0
        %1392 = vmatprep.subr.bf16.mxu0 0
        %1393 = vmatpush1.bf16.xpose.msra.mxu0 0
        %1394 = vmatprep.subr.bf16.mxu0 0
        %1395 = vmatpush1.bf16.xpose.msra.mxu0 0
        %1396 = vmatprep.subr.bf16.mxu0 0
        %1397 = vmatpush1.bf16.xpose.msra.mxu0 0
        %1398 = vmatprep.subr.bf16.mxu0 0
        %1399 = vmatpush1.bf16.xpose.msra.mxu0 0
        %1400 = vmatprep.subr.bf16.mxu0 0
        %1401 = vmatpush1.bf16.xpose.msra.mxu0 0
        %1402 = vmatprep.subr.bf16.mxu0 0
        %1403 = vmatpush1.bf16.xpose.msra.mxu0 0
        %1404 = vmatprep.subr.bf16.mxu0 0
        %1405 = vmatpush1.bf16.xpose.msra.mxu0 0
        %1406 = vmatprep.subr.bf16.mxu0 0
        %1407 = vmatpush1.bf16.xpose.msra.mxu0 0
        %1408 = vmatprep.subr.bf16.mxu0 0
        %1409 = vmatpush1.bf16.xpose.msra.mxu0 0
        %1410 = vmatprep.subr.bf16.mxu0 0
        %1411 = vmatpush1.bf16.xpose.msra.mxu0 0
        %1412 = vmatprep.subr.bf16.mxu0 0
        %1413 = vmatpush1.bf16.xpose.msra.mxu0 0
        %1414 = vmatprep.subr.bf16.mxu0 0
        %1415 = vmatpush1.bf16.xpose.msra.mxu0 0
        %1416 = vmatprep.mubr.bf16.mxu0 0
        %1417 = vmatmul.mubr.bf16.gmra.mrb[0].mxu0 %v1379
        %v1418 = vpop.f32.mrb[0].mxu0
        %v1419 = vadd.f32 %v1202, %v1418
        %v1420 = vpop.f32.mrb[0].mxu0
        %v1421 = vpop.f32.mrb[0].mxu0
        %v1422 = vpop.f32.mrb[0].mxu0
        %1423 = vdwg.mxu0
        %v1424 = vsel %vm1239, %v1281, -inf
        %1425 = vmax.xlane.f32.xlu0 %v1424
        %v1426 = vpop.xlane.xlu0 %1425
        %v1427 = vsel %vm1239, %v1327, -inf
        %1428 = vmax.xlane.f32.xlu0 %v1427
        %v1429 = vpop.xlane.xlu0 %1428
        %v1430 = vsel %vm1239, %v1373, -inf
        %1431 = vmax.xlane.f32.xlu0 %v1430
        %v1432 = vpop.xlane.xlu0 %1431
        %v1433 = vsel %vm1239, %v1419, -inf
        %1434 = vmax.xlane.f32.xlu0 %v1433
        %v1435 = vpop.xlane.xlu0 %1434
        %v1436 = vsub.f32 %v1281, %v1426
        %v1437 = vsub.f32 %v1327, %v1429
        %v1438 = vsub.f32 %v1373, %v1432
        %v1439 = vsub.f32 %v1419, %v1435
        %v1440 = vmul.f32 %v1436, 1.442695
        %v1441 = vpow.pop %v1440
        %v1442 = vmul.f32 %v1437, 1.442695
        %v1443 = vpow.pop %v1442
        %v1444 = vmul.f32 %v1438, 1.442695
        %v1445 = vpow.pop %v1444
        %v1446 = vmul.f32 %v1439, 1.442695
        %v1447 = vpow.pop %v1446
        %v1448 = vsel %vm1239, %v1441, 0.0
        %1449 = vadd.xlane.f32.xlu0 %v1448
        %v1450 = vpop.xlane.xlu0 %1449
        %v1451 = vsel %vm1239, %v1443, 0.0
        %1452 = vadd.xlane.f32.xlu0 %v1451
        %v1453 = vpop.xlane.xlu0 %1452
        %v1454 = vsel %vm1239, %v1445, 0.0
        %1455 = vadd.xlane.f32.xlu0 %v1454
        %v1456 = vpop.xlane.xlu0 %1455
        %v1457 = vsel %vm1239, %v1447, 0.0
        %1458 = vadd.xlane.f32.xlu0 %v1457
        %v1459 = vpop.xlane.xlu0 %1458
        %v1460 = vrcp.pop %v1450
        %v1461 = vrcp.pop %v1453
        %v1462 = vrcp.pop %v1456
        %v1463 = vrcp.pop %v1459
        %v1464 = vmul.f32 %v1441, %v1460
        %v1465 = vmul.f32 %v1443, %v1461
        %v1466 = vmul.f32 %v1445, %v1462
        %v1467 = vmul.f32 %v1447, %v1463
        %v1468 = vpack.c.bf16 %v1464, %v1464
        %v1469 = vpack.c.bf16 %v1465, %v1465
        %v1470 = vpack.c.bf16 %v1466, %v1466
        %v1471 = vpack.c.bf16 %v1467, %v1467
        %v1473 = vsel %vm1239, %v1468, 0
        %vm1475 = vcmask 1043456
        %v1477 = vsel %vm1475, %v1235, 0
        %1479 = vmatprep.subr.bf16.mxu0 0
        %1480 = vmatpush1.bf16.msra.mxu0 %v1477
        %1481 = vmatprep.subr.bf16.mxu0 0
        %1482 = vmatpush1.bf16.msra.mxu0 0
        %1483 = vmatprep.subr.bf16.mxu0 0
        %1484 = vmatpush1.bf16.msra.mxu0 0
        %1485 = vmatprep.subr.bf16.mxu0 0
        %1486 = vmatpush1.bf16.msra.mxu0 0
        %1487 = vmatprep.subr.bf16.mxu0 0
        %1488 = vmatpush1.bf16.msra.mxu0 0
        %1489 = vmatprep.subr.bf16.mxu0 0
        %1490 = vmatpush1.bf16.msra.mxu0 0
        %1491 = vmatprep.subr.bf16.mxu0 0
        %1492 = vmatpush1.bf16.msra.mxu0 0
        %1493 = vmatprep.subr.bf16.mxu0 0
        %1494 = vmatpush1.bf16.msra.mxu0 0
        %1495 = vmatprep.subr.bf16.mxu0 0
        %1496 = vmatpush1.bf16.msra.mxu0 0
        %1497 = vmatprep.subr.bf16.mxu0 0
        %1498 = vmatpush1.bf16.msra.mxu0 0
        %1499 = vmatprep.subr.bf16.mxu0 0
        %1500 = vmatpush1.bf16.msra.mxu0 0
        %1501 = vmatprep.subr.bf16.mxu0 0
        %1502 = vmatpush1.bf16.msra.mxu0 0
        %1503 = vmatprep.subr.bf16.mxu0 0
        %1504 = vmatpush1.bf16.msra.mxu0 0
        %1505 = vmatprep.subr.bf16.mxu0 0
        %1506 = vmatpush1.bf16.msra.mxu0 0
        %1507 = vmatprep.subr.bf16.mxu0 0
        %1508 = vmatpush1.bf16.msra.mxu0 0
        %1509 = vmatprep.subr.bf16.mxu0 0
        %1510 = vmatpush1.bf16.msra.mxu0 0
        %1511 = vmatprep.mubr.bf16.mxu0 0
        %1512 = vmatmul.mubr.bf16.gmra.mrb[0].mxu0 %v1473
        %v1513 = vpop.f32.mrb[0].mxu0
        %v1514 = vadd.f32 0.0, %v1513
        %v1515 = vpop.f32.mrb[0].mxu0
        %v1516 = vpop.f32.mrb[0].mxu0
        %v1517 = vpop.f32.mrb[0].mxu0
        %1518 = vdwg.mxu0
        %v1520 = vsel %vm1239, %v1469, 0
        %v1523 = vsel %vm1475, %v1236, 0
        %1525 = vmatprep.subr.bf16.mxu0 0
        %1526 = vmatpush1.bf16.msra.mxu0 %v1523
        %1527 = vmatprep.subr.bf16.mxu0 0
        %1528 = vmatpush1.bf16.msra.mxu0 0
        %1529 = vmatprep.subr.bf16.mxu0 0
        %1530 = vmatpush1.bf16.msra.mxu0 0
        %1531 = vmatprep.subr.bf16.mxu0 0
        %1532 = vmatpush1.bf16.msra.mxu0 0
        %1533 = vmatprep.subr.bf16.mxu0 0
        %1534 = vmatpush1.bf16.msra.mxu0 0
        %1535 = vmatprep.subr.bf16.mxu0 0
        %1536 = vmatpush1.bf16.msra.mxu0 0
        %1537 = vmatprep.subr.bf16.mxu0 0
        %1538 = vmatpush1.bf16.msra.mxu0 0
        %1539 = vmatprep.subr.bf16.mxu0 0
        %1540 = vmatpush1.bf16.msra.mxu0 0
        %1541 = vmatprep.subr.bf16.mxu0 0
        %1542 = vmatpush1.bf16.msra.mxu0 0
        %1543 = vmatprep.subr.bf16.mxu0 0
        %1544 = vmatpush1.bf16.msra.mxu0 0
        %1545 = vmatprep.subr.bf16.mxu0 0
        %1546 = vmatpush1.bf16.msra.mxu0 0
        %1547 = vmatprep.subr.bf16.mxu0 0
        %1548 = vmatpush1.bf16.msra.mxu0 0
        %1549 = vmatprep.subr.bf16.mxu0 0
        %1550 = vmatpush1.bf16.msra.mxu0 0
        %1551 = vmatprep.subr.bf16.mxu0 0
        %1552 = vmatpush1.bf16.msra.mxu0 0
        %1553 = vmatprep.subr.bf16.mxu0 0
        %1554 = vmatpush1.bf16.msra.mxu0 0
        %1555 = vmatprep.subr.bf16.mxu0 0
        %1556 = vmatpush1.bf16.msra.mxu0 0
        %1557 = vmatprep.mubr.bf16.mxu0 0
        %1558 = vmatmul.mubr.bf16.gmra.mrb[0].mxu0 %v1520
        %v1559 = vpop.f32.mrb[0].mxu0
        %v1560 = vadd.f32 0.0, %v1559
        %v1561 = vpop.f32.mrb[0].mxu0
        %v1562 = vpop.f32.mrb[0].mxu0
        %v1563 = vpop.f32.mrb[0].mxu0
        %1564 = vdwg.mxu0
        %v1566 = vsel %vm1239, %v1470, 0
        %v1569 = vsel %vm1475, %v1237, 0
        %1571 = vmatprep.subr.bf16.mxu0 0
        %1572 = vmatpush1.bf16.msra.mxu0 %v1569
        %1573 = vmatprep.subr.bf16.mxu0 0
        %1574 = vmatpush1.bf16.msra.mxu0 0
        %1575 = vmatprep.subr.bf16.mxu0 0
        %1576 = vmatpush1.bf16.msra.mxu0 0
        %1577 = vmatprep.subr.bf16.mxu0 0
        %1578 = vmatpush1.bf16.msra.mxu0 0
        %1579 = vmatprep.subr.bf16.mxu0 0
        %1580 = vmatpush1.bf16.msra.mxu0 0
        %1581 = vmatprep.subr.bf16.mxu0 0
        %1582 = vmatpush1.bf16.msra.mxu0 0
        %1583 = vmatprep.subr.bf16.mxu0 0
        %1584 = vmatpush1.bf16.msra.mxu0 0
        %1585 = vmatprep.subr.bf16.mxu0 0
        %1586 = vmatpush1.bf16.msra.mxu0 0
        %1587 = vmatprep.subr.bf16.mxu0 0
        %1588 = vmatpush1.bf16.msra.mxu0 0
        %1589 = vmatprep.subr.bf16.mxu0 0
        %1590 = vmatpush1.bf16.msra.mxu0 0
        %1591 = vmatprep.subr.bf16.mxu0 0
        %1592 = vmatpush1.bf16.msra.mxu0 0
        %1593 = vmatprep.subr.bf16.mxu0 0
        %1594 = vmatpush1.bf16.msra.mxu0 0
        %1595 = vmatprep.subr.bf16.mxu0 0
        %1596 = vmatpush1.bf16.msra.mxu0 0
        %1597 = vmatprep.subr.bf16.mxu0 0
        %1598 = vmatpush1.bf16.msra.mxu0 0
        %1599 = vmatprep.subr.bf16.mxu0 0
        %1600 = vmatpush1.bf16.msra.mxu0 0
        %1601 = vmatprep.subr.bf16.mxu0 0
        %1602 = vmatpush1.bf16.msra.mxu0 0
        %1603 = vmatprep.mubr.bf16.mxu0 0
        %1604 = vmatmul.mubr.bf16.gmra.mrb[0].mxu0 %v1566
        %v1605 = vpop.f32.mrb[0].mxu0
        %v1606 = vadd.f32 0.0, %v1605
        %v1607 = vpop.f32.mrb[0].mxu0
        %v1608 = vpop.f32.mrb[0].mxu0
        %v1609 = vpop.f32.mrb[0].mxu0
        %1610 = vdwg.mxu0
        %v1612 = vsel %vm1239, %v1471, 0
        %v1615 = vsel %vm1475, %v1238, 0
        %1617 = vmatprep.subr.bf16.mxu0 0
        %1618 = vmatpush1.bf16.msra.mxu0 %v1615
        %1619 = vmatprep.subr.bf16.mxu0 0
        %1620 = vmatpush1.bf16.msra.mxu0 0
        %1621 = vmatprep.subr.bf16.mxu0 0
        %1622 = vmatpush1.bf16.msra.mxu0 0
        %1623 = vmatprep.subr.bf16.mxu0 0
        %1624 = vmatpush1.bf16.msra.mxu0 0
        %1625 = vmatprep.subr.bf16.mxu0 0
        %1626 = vmatpush1.bf16.msra.mxu0 0
        %1627 = vmatprep.subr.bf16.mxu0 0
        %1628 = vmatpush1.bf16.msra.mxu0 0
        %1629 = vmatprep.subr.bf16.mxu0 0
        %1630 = vmatpush1.bf16.msra.mxu0 0
        %1631 = vmatprep.subr.bf16.mxu0 0
        %1632 = vmatpush1.bf16.msra.mxu0 0
        %1633 = vmatprep.subr.bf16.mxu0 0
        %1634 = vmatpush1.bf16.msra.mxu0 0
        %1635 = vmatprep.subr.bf16.mxu0 0
        %1636 = vmatpush1.bf16.msra.mxu0 0
        %1637 = vmatprep.subr.bf16.mxu0 0
        %1638 = vmatpush1.bf16.msra.mxu0 0
        %1639 = vmatprep.subr.bf16.mxu0 0
        %1640 = vmatpush1.bf16.msra.mxu0 0
        %1641 = vmatprep.subr.bf16.mxu0 0
        %1642 = vmatpush1.bf16.msra.mxu0 0
        %1643 = vmatprep.subr.bf16.mxu0 0
        %1644 = vmatpush1.bf16.msra.mxu0 0
        %1645 = vmatprep.subr.bf16.mxu0 0
        %1646 = vmatpush1.bf16.msra.mxu0 0
        %1647 = vmatprep.subr.bf16.mxu0 0
        %1648 = vmatpush1.bf16.msra.mxu0 0
        %1649 = vmatprep.mubr.bf16.mxu0 0
        %1650 = vmatmul.mubr.bf16.gmra.mrb[0].mxu0 %v1612
        %v1651 = vpop.f32.mrb[0].mxu0
        %v1652 = vadd.f32 0.0, %v1651
        %v1653 = vpop.f32.mrb[0].mxu0
        %v1654 = vpop.f32.mrb[0].mxu0
        %v1655 = vpop.f32.mrb[0].mxu0
        %1656 = vdwg.mxu0
        %1657 = vrot.lane.b32.xlu0 %v1211, 120
        %v1658 = vpop.permute.xlu0 %1657
        %1659 = vrot.lane.b32.xlu0 %v1223, 120
        %v1660 = vpop.permute.xlu0 %1659
        %v1662 = vsel %vm1239, %v1658, 0
        %v1665 = vsel %vm1239, %v1660, 0
        %1667 = vmatprep.subr.bf16.mxu0 0
        %1668 = vmatpush1.bf16.xpose.msra.mxu0 %v1665
        %1669 = vmatprep.subr.bf16.mxu0 0
        %1670 = vmatpush1.bf16.xpose.msra.mxu0 0
        %1671 = vmatprep.subr.bf16.mxu0 0
        %1672 = vmatpush1.bf16.xpose.msra.mxu0 0
        %1673 = vmatprep.subr.bf16.mxu0 0
        %1674 = vmatpush1.bf16.xpose.msra.mxu0 0
        %1675 = vmatprep.subr.bf16.mxu0 0
        %1676 = vmatpush1.bf16.xpose.msra.mxu0 0
        %1677 = vmatprep.subr.bf16.mxu0 0
        %1678 = vmatpush1.bf16.xpose.msra.mxu0 0
        %1679 = vmatprep.subr.bf16.mxu0 0
        %1680 = vmatpush1.bf16.xpose.msra.mxu0 0
        %1681 = vmatprep.subr.bf16.mxu0 0
        %1682 = vmatpush1.bf16.xpose.msra.mxu0 0
        %1683 = vmatprep.subr.bf16.mxu0 0
        %1684 = vmatpush1.bf16.xpose.msra.mxu0 0
        %1685 = vmatprep.subr.bf16.mxu0 0
        %1686 = vmatpush1.bf16.xpose.msra.mxu0 0
        %1687 = vmatprep.subr.bf16.mxu0 0
        %1688 = vmatpush1.bf16.xpose.msra.mxu0 0
        %1689 = vmatprep.subr.bf16.mxu0 0
        %1690 = vmatpush1.bf16.xpose.msra.mxu0 0
        %1691 = vmatprep.subr.bf16.mxu0 0
        %1692 = vmatpush1.bf16.xpose.msra.mxu0 0
        %1693 = vmatprep.subr.bf16.mxu0 0
        %1694 = vmatpush1.bf16.xpose.msra.mxu0 0
        %1695 = vmatprep.subr.bf16.mxu0 0
        %1696 = vmatpush1.bf16.xpose.msra.mxu0 0
        %1697 = vmatprep.subr.bf16.mxu0 0
        %1698 = vmatpush1.bf16.xpose.msra.mxu0 0
        %1699 = vmatprep.mubr.bf16.mxu0 0
        %1700 = vmatmul.mubr.bf16.gmra.mrb[0].mxu0 %v1662
        %v1701 = vpop.f32.mrb[0].mxu0
        %v1702 = vadd.f32 %v1202, %v1701
        %v1703 = vpop.f32.mrb[0].mxu0
        %v1704 = vpop.f32.mrb[0].mxu0
        %v1705 = vpop.f32.mrb[0].mxu0
        %1706 = vdwg.mxu0
        %1707 = vrot.lane.b32.xlu0 %v1212, 120
        %v1708 = vpop.permute.xlu0 %1707
        %1709 = vrot.lane.b32.xlu0 %v1224, 120
        %v1710 = vpop.permute.xlu0 %1709
        %v1712 = vsel %vm1239, %v1708, 0
        %v1715 = vsel %vm1239, %v1710, 0
        %1717 = vmatprep.subr.bf16.mxu0 0
        %1718 = vmatpush1.bf16.xpose.msra.mxu0 %v1715
        %1719 = vmatprep.subr.bf16.mxu0 0
        %1720 = vmatpush1.bf16.xpose.msra.mxu0 0
        %1721 = vmatprep.subr.bf16.mxu0 0
        %1722 = vmatpush1.bf16.xpose.msra.mxu0 0
        %1723 = vmatprep.subr.bf16.mxu0 0
        %1724 = vmatpush1.bf16.xpose.msra.mxu0 0
        %1725 = vmatprep.subr.bf16.mxu0 0
        %1726 = vmatpush1.bf16.xpose.msra.mxu0 0
        %1727 = vmatprep.subr.bf16.mxu0 0
        %1728 = vmatpush1.bf16.xpose.msra.mxu0 0
        %1729 = vmatprep.subr.bf16.mxu0 0
        %1730 = vmatpush1.bf16.xpose.msra.mxu0 0
        %1731 = vmatprep.subr.bf16.mxu0 0
        %1732 = vmatpush1.bf16.xpose.msra.mxu0 0
        %1733 = vmatprep.subr.bf16.mxu0 0
        %1734 = vmatpush1.bf16.xpose.msra.mxu0 0
        %1735 = vmatprep.subr.bf16.mxu0 0
        %1736 = vmatpush1.bf16.xpose.msra.mxu0 0
        %1737 = vmatprep.subr.bf16.mxu0 0
        %1738 = vmatpush1.bf16.xpose.msra.mxu0 0
        %1739 = vmatprep.subr.bf16.mxu0 0
        %1740 = vmatpush1.bf16.xpose.msra.mxu0 0
        %1741 = vmatprep.subr.bf16.mxu0 0
        %1742 = vmatpush1.bf16.xpose.msra.mxu0 0
        %1743 = vmatprep.subr.bf16.mxu0 0
        %1744 = vmatpush1.bf16.xpose.msra.mxu0 0
        %1745 = vmatprep.subr.bf16.mxu0 0
        %1746 = vmatpush1.bf16.xpose.msra.mxu0 0
        %1747 = vmatprep.subr.bf16.mxu0 0
        %1748 = vmatpush1.bf16.xpose.msra.mxu0 0
        %1749 = vmatprep.mubr.bf16.mxu0 0
        %1750 = vmatmul.mubr.bf16.gmra.mrb[0].mxu0 %v1712
        %v1751 = vpop.f32.mrb[0].mxu0
        %v1752 = vadd.f32 %v1202, %v1751
        %v1753 = vpop.f32.mrb[0].mxu0
        %v1754 = vpop.f32.mrb[0].mxu0
        %v1755 = vpop.f32.mrb[0].mxu0
        %1756 = vdwg.mxu0
        %1757 = vrot.lane.b32.xlu0 %v1213, 120
        %v1758 = vpop.permute.xlu0 %1757
        %1759 = vrot.lane.b32.xlu0 %v1225, 120
        %v1760 = vpop.permute.xlu0 %1759
        %v1762 = vsel %vm1239, %v1758, 0
        %v1765 = vsel %vm1239, %v1760, 0
        %1767 = vmatprep.subr.bf16.mxu0 0
        %1768 = vmatpush1.bf16.xpose.msra.mxu0 %v1765
        %1769 = vmatprep.subr.bf16.mxu0 0
        %1770 = vmatpush1.bf16.xpose.msra.mxu0 0
        %1771 = vmatprep.subr.bf16.mxu0 0
        %1772 = vmatpush1.bf16.xpose.msra.mxu0 0
        %1773 = vmatprep.subr.bf16.mxu0 0
        %1774 = vmatpush1.bf16.xpose.msra.mxu0 0
        %1775 = vmatprep.subr.bf16.mxu0 0
        %1776 = vmatpush1.bf16.xpose.msra.mxu0 0
        %1777 = vmatprep.subr.bf16.mxu0 0
        %1778 = vmatpush1.bf16.xpose.msra.mxu0 0
        %1779 = vmatprep.subr.bf16.mxu0 0
        %1780 = vmatpush1.bf16.xpose.msra.mxu0 0
        %1781 = vmatprep.subr.bf16.mxu0 0
        %1782 = vmatpush1.bf16.xpose.msra.mxu0 0
        %1783 = vmatprep.subr.bf16.mxu0 0
        %1784 = vmatpush1.bf16.xpose.msra.mxu0 0
        %1785 = vmatprep.subr.bf16.mxu0 0
        %1786 = vmatpush1.bf16.xpose.msra.mxu0 0
        %1787 = vmatprep.subr.bf16.mxu0 0
        %1788 = vmatpush1.bf16.xpose.msra.mxu0 0
        %1789 = vmatprep.subr.bf16.mxu0 0
        %1790 = vmatpush1.bf16.xpose.msra.mxu0 0
        %1791 = vmatprep.subr.bf16.mxu0 0
        %1792 = vmatpush1.bf16.xpose.msra.mxu0 0
        %1793 = vmatprep.subr.bf16.mxu0 0
        %1794 = vmatpush1.bf16.xpose.msra.mxu0 0
        %1795 = vmatprep.subr.bf16.mxu0 0
        %1796 = vmatpush1.bf16.xpose.msra.mxu0 0
        %1797 = vmatprep.subr.bf16.mxu0 0
        %1798 = vmatpush1.bf16.xpose.msra.mxu0 0
        %1799 = vmatprep.mubr.bf16.mxu0 0
        %1800 = vmatmul.mubr.bf16.gmra.mrb[0].mxu0 %v1762
        %v1801 = vpop.f32.mrb[0].mxu0
        %v1802 = vadd.f32 %v1202, %v1801
        %v1803 = vpop.f32.mrb[0].mxu0
        %v1804 = vpop.f32.mrb[0].mxu0
        %v1805 = vpop.f32.mrb[0].mxu0
        %1806 = vdwg.mxu0
        %1807 = vrot.lane.b32.xlu0 %v1214, 120
        %v1808 = vpop.permute.xlu0 %1807
        %1809 = vrot.lane.b32.xlu0 %v1226, 120
        %v1810 = vpop.permute.xlu0 %1809
        %v1812 = vsel %vm1239, %v1808, 0
        %v1815 = vsel %vm1239, %v1810, 0
        %1817 = vmatprep.subr.bf16.mxu0 0
        %1818 = vmatpush1.bf16.xpose.msra.mxu0 %v1815
        %1819 = vmatprep.subr.bf16.mxu0 0
        %1820 = vmatpush1.bf16.xpose.msra.mxu0 0
        %1821 = vmatprep.subr.bf16.mxu0 0
        %1822 = vmatpush1.bf16.xpose.msra.mxu0 0
        %1823 = vmatprep.subr.bf16.mxu0 0
        %1824 = vmatpush1.bf16.xpose.msra.mxu0 0
        %1825 = vmatprep.subr.bf16.mxu0 0
        %1826 = vmatpush1.bf16.xpose.msra.mxu0 0
        %1827 = vmatprep.subr.bf16.mxu0 0
        %1828 = vmatpush1.bf16.xpose.msra.mxu0 0
        %1829 = vmatprep.subr.bf16.mxu0 0
        %1830 = vmatpush1.bf16.xpose.msra.mxu0 0
        %1831 = vmatprep.subr.bf16.mxu0 0
        %1832 = vmatpush1.bf16.xpose.msra.mxu0 0
        %1833 = vmatprep.subr.bf16.mxu0 0
        %1834 = vmatpush1.bf16.xpose.msra.mxu0 0
        %1835 = vmatprep.subr.bf16.mxu0 0
        %1836 = vmatpush1.bf16.xpose.msra.mxu0 0
        %1837 = vmatprep.subr.bf16.mxu0 0
        %1838 = vmatpush1.bf16.xpose.msra.mxu0 0
        %1839 = vmatprep.subr.bf16.mxu0 0
        %1840 = vmatpush1.bf16.xpose.msra.mxu0 0
        %1841 = vmatprep.subr.bf16.mxu0 0
        %1842 = vmatpush1.bf16.xpose.msra.mxu0 0
        %1843 = vmatprep.subr.bf16.mxu0 0
        %1844 = vmatpush1.bf16.xpose.msra.mxu0 0
        %1845 = vmatprep.subr.bf16.mxu0 0
        %1846 = vmatpush1.bf16.xpose.msra.mxu0 0
        %1847 = vmatprep.subr.bf16.mxu0 0
        %1848 = vmatpush1.bf16.xpose.msra.mxu0 0
        %1849 = vmatprep.mubr.bf16.mxu0 0
        %1850 = vmatmul.mubr.bf16.gmra.mrb[0].mxu0 %v1812
        %v1851 = vpop.f32.mrb[0].mxu0
        %v1852 = vadd.f32 %v1202, %v1851
        %v1853 = vpop.f32.mrb[0].mxu0
        %v1854 = vpop.f32.mrb[0].mxu0
        %v1855 = vpop.f32.mrb[0].mxu0
        %1856 = vdwg.mxu0
        %v1857 = vsel %vm1239, %v1702, -inf
        %1858 = vmax.xlane.f32.xlu0 %v1857
        %v1859 = vpop.xlane.xlu0 %1858
        %v1860 = vsel %vm1239, %v1752, -inf
        %1861 = vmax.xlane.f32.xlu0 %v1860
        %v1862 = vpop.xlane.xlu0 %1861
        %v1863 = vsel %vm1239, %v1802, -inf
        %1864 = vmax.xlane.f32.xlu0 %v1863
        %v1865 = vpop.xlane.xlu0 %1864
        %v1866 = vsel %vm1239, %v1852, -inf
        %1867 = vmax.xlane.f32.xlu0 %v1866
        %v1868 = vpop.xlane.xlu0 %1867
        %v1869 = vsub.f32 %v1702, %v1859
        %v1870 = vsub.f32 %v1752, %v1862
        %v1871 = vsub.f32 %v1802, %v1865
        %v1872 = vsub.f32 %v1852, %v1868
        %v1873 = vmul.f32 %v1869, 1.442695
        %v1874 = vpow.pop %v1873
        %v1875 = vmul.f32 %v1870, 1.442695
        %v1876 = vpow.pop %v1875
        %v1877 = vmul.f32 %v1871, 1.442695
        %v1878 = vpow.pop %v1877
        %v1879 = vmul.f32 %v1872, 1.442695
        %v1880 = vpow.pop %v1879
        %v1881 = vsel %vm1239, %v1874, 0.0
        %1882 = vadd.xlane.f32.xlu0 %v1881
        %v1883 = vpop.xlane.xlu0 %1882
        %v1884 = vsel %vm1239, %v1876, 0.0
        %1885 = vadd.xlane.f32.xlu0 %v1884
        %v1886 = vpop.xlane.xlu0 %1885
        %v1887 = vsel %vm1239, %v1878, 0.0
        %1888 = vadd.xlane.f32.xlu0 %v1887
        %v1889 = vpop.xlane.xlu0 %1888
        %v1890 = vsel %vm1239, %v1880, 0.0
        %1891 = vadd.xlane.f32.xlu0 %v1890
        %v1892 = vpop.xlane.xlu0 %1891
        %v1893 = vrcp.pop %v1883
        %v1894 = vrcp.pop %v1886
        %v1895 = vrcp.pop %v1889
        %v1896 = vrcp.pop %v1892
        %v1897 = vmul.f32 %v1874, %v1893
        %v1898 = vmul.f32 %v1876, %v1894
        %v1899 = vmul.f32 %v1878, %v1895
        %v1900 = vmul.f32 %v1880, %v1896
        %v1901 = vpack.c.bf16 %v1897, %v1897
        %v1902 = vpack.c.bf16 %v1898, %v1898
        %v1903 = vpack.c.bf16 %v1899, %v1899
        %v1904 = vpack.c.bf16 %v1900, %v1900
        %1905 = vrot.lane.b32.xlu0 %v1235, 120
        %v1906 = vpop.permute.xlu0 %1905
        %v1908 = vsel %vm1239, %v1901, 0
        %v1911 = vsel %vm1475, %v1906, 0
        %1913 = vmatprep.subr.bf16.mxu0 0
        %1914 = vmatpush1.bf16.msra.mxu0 %v1911
        %1915 = vmatprep.subr.bf16.mxu0 0
        %1916 = vmatpush1.bf16.msra.mxu0 0
        %1917 = vmatprep.subr.bf16.mxu0 0
        %1918 = vmatpush1.bf16.msra.mxu0 0
        %1919 = vmatprep.subr.bf16.mxu0 0
        %1920 = vmatpush1.bf16.msra.mxu0 0
        %1921 = vmatprep.subr.bf16.mxu0 0
        %1922 = vmatpush1.bf16.msra.mxu0 0
        %1923 = vmatprep.subr.bf16.mxu0 0
        %1924 = vmatpush1.bf16.msra.mxu0 0
        %1925 = vmatprep.subr.bf16.mxu0 0
        %1926 = vmatpush1.bf16.msra.mxu0 0
        %1927 = vmatprep.subr.bf16.mxu0 0
        %1928 = vmatpush1.bf16.msra.mxu0 0
        %1929 = vmatprep.subr.bf16.mxu0 0
        %1930 = vmatpush1.bf16.msra.mxu0 0
        %1931 = vmatprep.subr.bf16.mxu0 0
        %1932 = vmatpush1.bf16.msra.mxu0 0
        %1933 = vmatprep.subr.bf16.mxu0 0
        %1934 = vmatpush1.bf16.msra.mxu0 0
        %1935 = vmatprep.subr.bf16.mxu0 0
        %1936 = vmatpush1.bf16.msra.mxu0 0
        %1937 = vmatprep.subr.bf16.mxu0 0
        %1938 = vmatpush1.bf16.msra.mxu0 0
        %1939 = vmatprep.subr.bf16.mxu0 0
        %1940 = vmatpush1.bf16.msra.mxu0 0
        %1941 = vmatprep.subr.bf16.mxu0 0
        %1942 = vmatpush1.bf16.msra.mxu0 0
        %1943 = vmatprep.subr.bf16.mxu0 0
        %1944 = vmatpush1.bf16.msra.mxu0 0
        %1945 = vmatprep.mubr.bf16.mxu0 0
        %1946 = vmatmul.mubr.bf16.gmra.mrb[0].mxu0 %v1908
        %v1947 = vpop.f32.mrb[0].mxu0
        %v1948 = vadd.f32 0.0, %v1947
        %v1949 = vpop.f32.mrb[0].mxu0
        %v1950 = vpop.f32.mrb[0].mxu0
        %v1951 = vpop.f32.mrb[0].mxu0
        %1952 = vdwg.mxu0
        %1953 = vrot.lane.b32.xlu0 %v1236, 120
        %v1954 = vpop.permute.xlu0 %1953
        %v1956 = vsel %vm1239, %v1902, 0
        %v1959 = vsel %vm1475, %v1954, 0
        %1961 = vmatprep.subr.bf16.mxu0 0
        %1962 = vmatpush1.bf16.msra.mxu0 %v1959
        %1963 = vmatprep.subr.bf16.mxu0 0
        %1964 = vmatpush1.bf16.msra.mxu0 0
        %1965 = vmatprep.subr.bf16.mxu0 0
        %1966 = vmatpush1.bf16.msra.mxu0 0
        %1967 = vmatprep.subr.bf16.mxu0 0
        %1968 = vmatpush1.bf16.msra.mxu0 0
        %1969 = vmatprep.subr.bf16.mxu0 0
        %1970 = vmatpush1.bf16.msra.mxu0 0
        %1971 = vmatprep.subr.bf16.mxu0 0
        %1972 = vmatpush1.bf16.msra.mxu0 0
        %1973 = vmatprep.subr.bf16.mxu0 0
        %1974 = vmatpush1.bf16.msra.mxu0 0
        %1975 = vmatprep.subr.bf16.mxu0 0
        %1976 = vmatpush1.bf16.msra.mxu0 0
        %1977 = vmatprep.subr.bf16.mxu0 0
        %1978 = vmatpush1.bf16.msra.mxu0 0
        %1979 = vmatprep.subr.bf16.mxu0 0
        %1980 = vmatpush1.bf16.msra.mxu0 0
        %1981 = vmatprep.subr.bf16.mxu0 0
        %1982 = vmatpush1.bf16.msra.mxu0 0
        %1983 = vmatprep.subr.bf16.mxu0 0
        %1984 = vmatpush1.bf16.msra.mxu0 0
        %1985 = vmatprep.subr.bf16.mxu0 0
        %1986 = vmatpush1.bf16.msra.mxu0 0
        %1987 = vmatprep.subr.bf16.mxu0 0
        %1988 = vmatpush1.bf16.msra.mxu0 0
        %1989 = vmatprep.subr.bf16.mxu0 0
        %1990 = vmatpush1.bf16.msra.mxu0 0
        %1991 = vmatprep.subr.bf16.mxu0 0
        %1992 = vmatpush1.bf16.msra.mxu0 0
        %1993 = vmatprep.mubr.bf16.mxu0 0
        %1994 = vmatmul.mubr.bf16.gmra.mrb[0].mxu0 %v1956
        %v1995 = vpop.f32.mrb[0].mxu0
        %v1996 = vadd.f32 0.0, %v1995
        %v1997 = vpop.f32.mrb[0].mxu0
        %v1998 = vpop.f32.mrb[0].mxu0
        %v1999 = vpop.f32.mrb[0].mxu0
        %2000 = vdwg.mxu0
        %2001 = vrot.lane.b32.xlu0 %v1237, 120
        %v2002 = vpop.permute.xlu0 %2001
        %v2004 = vsel %vm1239, %v1903, 0
        %v2007 = vsel %vm1475, %v2002, 0
        %2009 = vmatprep.subr.bf16.mxu0 0
        %2010 = vmatpush1.bf16.msra.mxu0 %v2007
        %2011 = vmatprep.subr.bf16.mxu0 0
        %2012 = vmatpush1.bf16.msra.mxu0 0
        %2013 = vmatprep.subr.bf16.mxu0 0
        %2014 = vmatpush1.bf16.msra.mxu0 0
        %2015 = vmatprep.subr.bf16.mxu0 0
        %2016 = vmatpush1.bf16.msra.mxu0 0
        %2017 = vmatprep.subr.bf16.mxu0 0
        %2018 = vmatpush1.bf16.msra.mxu0 0
        %2019 = vmatprep.subr.bf16.mxu0 0
        %2020 = vmatpush1.bf16.msra.mxu0 0
        %2021 = vmatprep.subr.bf16.mxu0 0
        %2022 = vmatpush1.bf16.msra.mxu0 0
        %2023 = vmatprep.subr.bf16.mxu0 0
        %2024 = vmatpush1.bf16.msra.mxu0 0
        %2025 = vmatprep.subr.bf16.mxu0 0
        %2026 = vmatpush1.bf16.msra.mxu0 0
        %2027 = vmatprep.subr.bf16.mxu0 0
        %2028 = vmatpush1.bf16.msra.mxu0 0
        %2029 = vmatprep.subr.bf16.mxu0 0
        %2030 = vmatpush1.bf16.msra.mxu0 0
        %2031 = vmatprep.subr.bf16.mxu0 0
        %2032 = vmatpush1.bf16.msra.mxu0 0
        %2033 = vmatprep.subr.bf16.mxu0 0
        %2034 = vmatpush1.bf16.msra.mxu0 0
        %2035 = vmatprep.subr.bf16.mxu0 0
        %2036 = vmatpush1.bf16.msra.mxu0 0
        %2037 = vmatprep.subr.bf16.mxu0 0
        %2038 = vmatpush1.bf16.msra.mxu0 0
        %2039 = vmatprep.subr.bf16.mxu0 0
        %2040 = vmatpush1.bf16.msra.mxu0 0
        %2041 = vmatprep.mubr.bf16.mxu0 0
        %2042 = vmatmul.mubr.bf16.gmra.mrb[0].mxu0 %v2004
        %v2043 = vpop.f32.mrb[0].mxu0
        %v2044 = vadd.f32 0.0, %v2043
        %v2045 = vpop.f32.mrb[0].mxu0
        %v2046 = vpop.f32.mrb[0].mxu0
        %v2047 = vpop.f32.mrb[0].mxu0
        %2048 = vdwg.mxu0
        %2049 = vrot.lane.b32.xlu0 %v1238, 120
        %v2050 = vpop.permute.xlu0 %2049
        %v2052 = vsel %vm1239, %v1904, 0
        %v2055 = vsel %vm1475, %v2050, 0
        %2057 = vmatprep.subr.bf16.mxu0 0
        %2058 = vmatpush1.bf16.msra.mxu0 %v2055
        %2059 = vmatprep.subr.bf16.mxu0 0
        %2060 = vmatpush1.bf16.msra.mxu0 0
        %2061 = vmatprep.subr.bf16.mxu0 0
        %2062 = vmatpush1.bf16.msra.mxu0 0
        %2063 = vmatprep.subr.bf16.mxu0 0
        %2064 = vmatpush1.bf16.msra.mxu0 0
        %2065 = vmatprep.subr.bf16.mxu0 0
        %2066 = vmatpush1.bf16.msra.mxu0 0
        %2067 = vmatprep.subr.bf16.mxu0 0
        %2068 = vmatpush1.bf16.msra.mxu0 0
        %2069 = vmatprep.subr.bf16.mxu0 0
        %2070 = vmatpush1.bf16.msra.mxu0 0
        %2071 = vmatprep.subr.bf16.mxu0 0
        %2072 = vmatpush1.bf16.msra.mxu0 0
        %2073 = vmatprep.subr.bf16.mxu0 0
        %2074 = vmatpush1.bf16.msra.mxu0 0
        %2075 = vmatprep.subr.bf16.mxu0 0
        %2076 = vmatpush1.bf16.msra.mxu0 0
        %2077 = vmatprep.subr.bf16.mxu0 0
        %2078 = vmatpush1.bf16.msra.mxu0 0
        %2079 = vmatprep.subr.bf16.mxu0 0
        %2080 = vmatpush1.bf16.msra.mxu0 0
        %2081 = vmatprep.subr.bf16.mxu0 0
        %2082 = vmatpush1.bf16.msra.mxu0 0
        %2083 = vmatprep.subr.bf16.mxu0 0
        %2084 = vmatpush1.bf16.msra.mxu0 0
        %2085 = vmatprep.subr.bf16.mxu0 0
        %2086 = vmatpush1.bf16.msra.mxu0 0
        %2087 = vmatprep.subr.bf16.mxu0 0
        %2088 = vmatpush1.bf16.msra.mxu0 0
        %2089 = vmatprep.mubr.bf16.mxu0 0
        %2090 = vmatmul.mubr.bf16.gmra.mrb[0].mxu0 %v2052
        %v2091 = vpop.f32.mrb[0].mxu0
        %v2092 = vadd.f32 0.0, %v2091
        %v2093 = vpop.f32.mrb[0].mxu0
        %v2094 = vpop.f32.mrb[0].mxu0
        %v2095 = vpop.f32.mrb[0].mxu0
        %2096 = vdwg.mxu0
        %2097 = vrot.lane.b32.xlu0 %v1211, 112
        %v2098 = vpop.permute.xlu0 %2097
        %2099 = vrot.lane.b32.xlu0 %v1223, 112
        %v2100 = vpop.permute.xlu0 %2099
        %v2102 = vsel %vm1239, %v2098, 0
        %v2105 = vsel %vm1239, %v2100, 0
        %2107 = vmatprep.subr.bf16.mxu0 0
        %2108 = vmatpush1.bf16.xpose.msra.mxu0 %v2105
        %2109 = vmatprep.subr.bf16.mxu0 0
        %2110 = vmatpush1.bf16.xpose.msra.mxu0 0
        %2111 = vmatprep.subr.bf16.mxu0 0
        %2112 = vmatpush1.bf16.xpose.msra.mxu0 0
        %2113 = vmatprep.subr.bf16.mxu0 0
        %2114 = vmatpush1.bf16.xpose.msra.mxu0 0
        %2115 = vmatprep.subr.bf16.mxu0 0
        %2116 = vmatpush1.bf16.xpose.msra.mxu0 0
        %2117 = vmatprep.subr.bf16.mxu0 0
        %2118 = vmatpush1.bf16.xpose.msra.mxu0 0
        %2119 = vmatprep.subr.bf16.mxu0 0
        %2120 = vmatpush1.bf16.xpose.msra.mxu0 0
        %2121 = vmatprep.subr.bf16.mxu0 0
        %2122 = vmatpush1.bf16.xpose.msra.mxu0 0
        %2123 = vmatprep.subr.bf16.mxu0 0
        %2124 = vmatpush1.bf16.xpose.msra.mxu0 0
        %2125 = vmatprep.subr.bf16.mxu0 0
        %2126 = vmatpush1.bf16.xpose.msra.mxu0 0
        %2127 = vmatprep.subr.bf16.mxu0 0
        %2128 = vmatpush1.bf16.xpose.msra.mxu0 0
        %2129 = vmatprep.subr.bf16.mxu0 0
        %2130 = vmatpush1.bf16.xpose.msra.mxu0 0
        %2131 = vmatprep.subr.bf16.mxu0 0
        %2132 = vmatpush1.bf16.xpose.msra.mxu0 0
        %2133 = vmatprep.subr.bf16.mxu0 0
        %2134 = vmatpush1.bf16.xpose.msra.mxu0 0
        %2135 = vmatprep.subr.bf16.mxu0 0
        %2136 = vmatpush1.bf16.xpose.msra.mxu0 0
        %2137 = vmatprep.subr.bf16.mxu0 0
        %2138 = vmatpush1.bf16.xpose.msra.mxu0 0
        %2139 = vmatprep.mubr.bf16.mxu0 0
        %2140 = vmatmul.mubr.bf16.gmra.mrb[0].mxu0 %v2102
        %v2141 = vpop.f32.mrb[0].mxu0
        %v2142 = vadd.f32 %v1202, %v2141
        %v2143 = vpop.f32.mrb[0].mxu0
        %v2144 = vpop.f32.mrb[0].mxu0
        %v2145 = vpop.f32.mrb[0].mxu0
        %2146 = vdwg.mxu0
        %2147 = vrot.lane.b32.xlu0 %v1212, 112
        %v2148 = vpop.permute.xlu0 %2147
        %2149 = vrot.lane.b32.xlu0 %v1224, 112
        %v2150 = vpop.permute.xlu0 %2149
        %v2152 = vsel %vm1239, %v2148, 0
        %v2155 = vsel %vm1239, %v2150, 0
        %2157 = vmatprep.subr.bf16.mxu0 0
        %2158 = vmatpush1.bf16.xpose.msra.mxu0 %v2155
        %2159 = vmatprep.subr.bf16.mxu0 0
        %2160 = vmatpush1.bf16.xpose.msra.mxu0 0
        %2161 = vmatprep.subr.bf16.mxu0 0
        %2162 = vmatpush1.bf16.xpose.msra.mxu0 0
        %2163 = vmatprep.subr.bf16.mxu0 0
        %2164 = vmatpush1.bf16.xpose.msra.mxu0 0
        %2165 = vmatprep.subr.bf16.mxu0 0
        %2166 = vmatpush1.bf16.xpose.msra.mxu0 0
        %2167 = vmatprep.subr.bf16.mxu0 0
        %2168 = vmatpush1.bf16.xpose.msra.mxu0 0
        %2169 = vmatprep.subr.bf16.mxu0 0
        %2170 = vmatpush1.bf16.xpose.msra.mxu0 0
        %2171 = vmatprep.subr.bf16.mxu0 0
        %2172 = vmatpush1.bf16.xpose.msra.mxu0 0
        %2173 = vmatprep.subr.bf16.mxu0 0
        %2174 = vmatpush1.bf16.xpose.msra.mxu0 0
        %2175 = vmatprep.subr.bf16.mxu0 0
        %2176 = vmatpush1.bf16.xpose.msra.mxu0 0
        %2177 = vmatprep.subr.bf16.mxu0 0
        %2178 = vmatpush1.bf16.xpose.msra.mxu0 0
        %2179 = vmatprep.subr.bf16.mxu0 0
        %2180 = vmatpush1.bf16.xpose.msra.mxu0 0
        %2181 = vmatprep.subr.bf16.mxu0 0
        %2182 = vmatpush1.bf16.xpose.msra.mxu0 0
        %2183 = vmatprep.subr.bf16.mxu0 0
        %2184 = vmatpush1.bf16.xpose.msra.mxu0 0
        %2185 = vmatprep.subr.bf16.mxu0 0
        %2186 = vmatpush1.bf16.xpose.msra.mxu0 0
        %2187 = vmatprep.subr.bf16.mxu0 0
        %2188 = vmatpush1.bf16.xpose.msra.mxu0 0
        %2189 = vmatprep.mubr.bf16.mxu0 0
        %2190 = vmatmul.mubr.bf16.gmra.mrb[0].mxu0 %v2152
        %v2191 = vpop.f32.mrb[0].mxu0
        %v2192 = vadd.f32 %v1202, %v2191
        %v2193 = vpop.f32.mrb[0].mxu0
        %v2194 = vpop.f32.mrb[0].mxu0
        %v2195 = vpop.f32.mrb[0].mxu0
        %2196 = vdwg.mxu0
        %2197 = vrot.lane.b32.xlu0 %v1213, 112
        %v2198 = vpop.permute.xlu0 %2197
        %2199 = vrot.lane.b32.xlu0 %v1225, 112
        %v2200 = vpop.permute.xlu0 %2199
        %v2202 = vsel %vm1239, %v2198, 0
        %v2205 = vsel %vm1239, %v2200, 0
        %2207 = vmatprep.subr.bf16.mxu0 0
        %2208 = vmatpush1.bf16.xpose.msra.mxu0 %v2205
        %2209 = vmatprep.subr.bf16.mxu0 0
        %2210 = vmatpush1.bf16.xpose.msra.mxu0 0
        %2211 = vmatprep.subr.bf16.mxu0 0
        %2212 = vmatpush1.bf16.xpose.msra.mxu0 0
        %2213 = vmatprep.subr.bf16.mxu0 0
        %2214 = vmatpush1.bf16.xpose.msra.mxu0 0
        %2215 = vmatprep.subr.bf16.mxu0 0
        %2216 = vmatpush1.bf16.xpose.msra.mxu0 0
        %2217 = vmatprep.subr.bf16.mxu0 0
        %2218 = vmatpush1.bf16.xpose.msra.mxu0 0
        %2219 = vmatprep.subr.bf16.mxu0 0
        %2220 = vmatpush1.bf16.xpose.msra.mxu0 0
        %2221 = vmatprep.subr.bf16.mxu0 0
        %2222 = vmatpush1.bf16.xpose.msra.mxu0 0
        %2223 = vmatprep.subr.bf16.mxu0 0
        %2224 = vmatpush1.bf16.xpose.msra.mxu0 0
        %2225 = vmatprep.subr.bf16.mxu0 0
        %2226 = vmatpush1.bf16.xpose.msra.mxu0 0
        %2227 = vmatprep.subr.bf16.mxu0 0
        %2228 = vmatpush1.bf16.xpose.msra.mxu0 0
        %2229 = vmatprep.subr.bf16.mxu0 0
        %2230 = vmatpush1.bf16.xpose.msra.mxu0 0
        %2231 = vmatprep.subr.bf16.mxu0 0
        %2232 = vmatpush1.bf16.xpose.msra.mxu0 0
        %2233 = vmatprep.subr.bf16.mxu0 0
        %2234 = vmatpush1.bf16.xpose.msra.mxu0 0
        %2235 = vmatprep.subr.bf16.mxu0 0
        %2236 = vmatpush1.bf16.xpose.msra.mxu0 0
        %2237 = vmatprep.subr.bf16.mxu0 0
        %2238 = vmatpush1.bf16.xpose.msra.mxu0 0
        %2239 = vmatprep.mubr.bf16.mxu0 0
        %2240 = vmatmul.mubr.bf16.gmra.mrb[0].mxu0 %v2202
        %v2241 = vpop.f32.mrb[0].mxu0
        %v2242 = vadd.f32 %v1202, %v2241
        %v2243 = vpop.f32.mrb[0].mxu0
        %v2244 = vpop.f32.mrb[0].mxu0
        %v2245 = vpop.f32.mrb[0].mxu0
        %2246 = vdwg.mxu0
        %2247 = vrot.lane.b32.xlu0 %v1214, 112
        %v2248 = vpop.permute.xlu0 %2247
        %2249 = vrot.lane.b32.xlu0 %v1226, 112
        %v2250 = vpop.permute.xlu0 %2249
        %v2252 = vsel %vm1239, %v2248, 0
        %v2255 = vsel %vm1239, %v2250, 0
        %2257 = vmatprep.subr.bf16.mxu0 0
        %2258 = vmatpush1.bf16.xpose.msra.mxu0 %v2255
        %2259 = vmatprep.subr.bf16.mxu0 0
        %2260 = vmatpush1.bf16.xpose.msra.mxu0 0
        %2261 = vmatprep.subr.bf16.mxu0 0
        %2262 = vmatpush1.bf16.xpose.msra.mxu0 0
        %2263 = vmatprep.subr.bf16.mxu0 0
        %2264 = vmatpush1.bf16.xpose.msra.mxu0 0
        %2265 = vmatprep.subr.bf16.mxu0 0
        %2266 = vmatpush1.bf16.xpose.msra.mxu0 0
        %2267 = vmatprep.subr.bf16.mxu0 0
        %2268 = vmatpush1.bf16.xpose.msra.mxu0 0
        %2269 = vmatprep.subr.bf16.mxu0 0
        %2270 = vmatpush1.bf16.xpose.msra.mxu0 0
        %2271 = vmatprep.subr.bf16.mxu0 0
        %2272 = vmatpush1.bf16.xpose.msra.mxu0 0
        %2273 = vmatprep.subr.bf16.mxu0 0
        %2274 = vmatpush1.bf16.xpose.msra.mxu0 0
        %2275 = vmatprep.subr.bf16.mxu0 0
        %2276 = vmatpush1.bf16.xpose.msra.mxu0 0
        %2277 = vmatprep.subr.bf16.mxu0 0
        %2278 = vmatpush1.bf16.xpose.msra.mxu0 0
        %2279 = vmatprep.subr.bf16.mxu0 0
        %2280 = vmatpush1.bf16.xpose.msra.mxu0 0
        %2281 = vmatprep.subr.bf16.mxu0 0
        %2282 = vmatpush1.bf16.xpose.msra.mxu0 0
        %2283 = vmatprep.subr.bf16.mxu0 0
        %2284 = vmatpush1.bf16.xpose.msra.mxu0 0
        %2285 = vmatprep.subr.bf16.mxu0 0
        %2286 = vmatpush1.bf16.xpose.msra.mxu0 0
        %2287 = vmatprep.subr.bf16.mxu0 0
        %2288 = vmatpush1.bf16.xpose.msra.mxu0 0
        %2289 = vmatprep.mubr.bf16.mxu0 0
        %2290 = vmatmul.mubr.bf16.gmra.mrb[0].mxu0 %v2252
        %v2291 = vpop.f32.mrb[0].mxu0
        %v2292 = vadd.f32 %v1202, %v2291
        %v2293 = vpop.f32.mrb[0].mxu0
        %v2294 = vpop.f32.mrb[0].mxu0
        %v2295 = vpop.f32.mrb[0].mxu0
        %2296 = vdwg.mxu0
        %v2297 = vsel %vm1239, %v2142, -inf
        %2298 = vmax.xlane.f32.xlu0 %v2297
        %v2299 = vpop.xlane.xlu0 %2298
        %v2300 = vsel %vm1239, %v2192, -inf
        %2301 = vmax.xlane.f32.xlu0 %v2300
        %v2302 = vpop.xlane.xlu0 %2301
        %v2303 = vsel %vm1239, %v2242, -inf
        %2304 = vmax.xlane.f32.xlu0 %v2303
        %v2305 = vpop.xlane.xlu0 %2304
        %v2306 = vsel %vm1239, %v2292, -inf
        %2307 = vmax.xlane.f32.xlu0 %v2306
        %v2308 = vpop.xlane.xlu0 %2307
        %v2309 = vsub.f32 %v2142, %v2299
        %v2310 = vsub.f32 %v2192, %v2302
        %v2311 = vsub.f32 %v2242, %v2305
        %v2312 = vsub.f32 %v2292, %v2308
        %v2313 = vmul.f32 %v2309, 1.442695
        %v2314 = vpow.pop %v2313
        %v2315 = vmul.f32 %v2310, 1.442695
        %v2316 = vpow.pop %v2315
        %v2317 = vmul.f32 %v2311, 1.442695
        %v2318 = vpow.pop %v2317
        %v2319 = vmul.f32 %v2312, 1.442695
        %v2320 = vpow.pop %v2319
        %v2321 = vsel %vm1239, %v2314, 0.0
        %2322 = vadd.xlane.f32.xlu0 %v2321
        %v2323 = vpop.xlane.xlu0 %2322
        %v2324 = vsel %vm1239, %v2316, 0.0
        %2325 = vadd.xlane.f32.xlu0 %v2324
        %v2326 = vpop.xlane.xlu0 %2325
        %v2327 = vsel %vm1239, %v2318, 0.0
        %2328 = vadd.xlane.f32.xlu0 %v2327
        %v2329 = vpop.xlane.xlu0 %2328
        %v2330 = vsel %vm1239, %v2320, 0.0
        %2331 = vadd.xlane.f32.xlu0 %v2330
        %v2332 = vpop.xlane.xlu0 %2331
        %v2333 = vrcp.pop %v2323
        %v2334 = vrcp.pop %v2326
        %v2335 = vrcp.pop %v2329
        %v2336 = vrcp.pop %v2332
        %v2337 = vmul.f32 %v2314, %v2333
        %v2338 = vmul.f32 %v2316, %v2334
        %v2339 = vmul.f32 %v2318, %v2335
        %v2340 = vmul.f32 %v2320, %v2336
        %v2341 = vpack.c.bf16 %v2337, %v2337
        %v2342 = vpack.c.bf16 %v2338, %v2338
        %v2343 = vpack.c.bf16 %v2339, %v2339
        %v2344 = vpack.c.bf16 %v2340, %v2340
        %2345 = vrot.lane.b32.xlu0 %v1235, 112
        %v2346 = vpop.permute.xlu0 %2345
        %v2348 = vsel %vm1239, %v2341, 0
        %v2351 = vsel %vm1475, %v2346, 0
        %2353 = vmatprep.subr.bf16.mxu0 0
        %2354 = vmatpush1.bf16.msra.mxu0 %v2351
        %2355 = vmatprep.subr.bf16.mxu0 0
        %2356 = vmatpush1.bf16.msra.mxu0 0
        %2357 = vmatprep.subr.bf16.mxu0 0
        %2358 = vmatpush1.bf16.msra.mxu0 0
        %2359 = vmatprep.subr.bf16.mxu0 0
        %2360 = vmatpush1.bf16.msra.mxu0 0
        %2361 = vmatprep.subr.bf16.mxu0 0
        %2362 = vmatpush1.bf16.msra.mxu0 0
        %2363 = vmatprep.subr.bf16.mxu0 0
        %2364 = vmatpush1.bf16.msra.mxu0 0
        %2365 = vmatprep.subr.bf16.mxu0 0
        %2366 = vmatpush1.bf16.msra.mxu0 0
        %2367 = vmatprep.subr.bf16.mxu0 0
        %2368 = vmatpush1.bf16.msra.mxu0 0
        %2369 = vmatprep.subr.bf16.mxu0 0
        %2370 = vmatpush1.bf16.msra.mxu0 0
        %2371 = vmatprep.subr.bf16.mxu0 0
        %2372 = vmatpush1.bf16.msra.mxu0 0
        %2373 = vmatprep.subr.bf16.mxu0 0
        %2374 = vmatpush1.bf16.msra.mxu0 0
        %2375 = vmatprep.subr.bf16.mxu0 0
        %2376 = vmatpush1.bf16.msra.mxu0 0
        %2377 = vmatprep.subr.bf16.mxu0 0
        %2378 = vmatpush1.bf16.msra.mxu0 0
        %2379 = vmatprep.subr.bf16.mxu0 0
        %2380 = vmatpush1.bf16.msra.mxu0 0
        %2381 = vmatprep.subr.bf16.mxu0 0
        %2382 = vmatpush1.bf16.msra.mxu0 0
        %2383 = vmatprep.subr.bf16.mxu0 0
        %2384 = vmatpush1.bf16.msra.mxu0 0
        %2385 = vmatprep.mubr.bf16.mxu0 0
        %2386 = vmatmul.mubr.bf16.gmra.mrb[0].mxu0 %v2348
        %v2387 = vpop.f32.mrb[0].mxu0
        %v2388 = vadd.f32 0.0, %v2387
        %v2389 = vpop.f32.mrb[0].mxu0
        %v2390 = vpop.f32.mrb[0].mxu0
        %v2391 = vpop.f32.mrb[0].mxu0
        %2392 = vdwg.mxu0
        %2393 = vrot.lane.b32.xlu0 %v1236, 112
        %v2394 = vpop.permute.xlu0 %2393
        %v2396 = vsel %vm1239, %v2342, 0
        %v2399 = vsel %vm1475, %v2394, 0
        %2401 = vmatprep.subr.bf16.mxu0 0
        %2402 = vmatpush1.bf16.msra.mxu0 %v2399
        %2403 = vmatprep.subr.bf16.mxu0 0
        %2404 = vmatpush1.bf16.msra.mxu0 0
        %2405 = vmatprep.subr.bf16.mxu0 0
        %2406 = vmatpush1.bf16.msra.mxu0 0
        %2407 = vmatprep.subr.bf16.mxu0 0
        %2408 = vmatpush1.bf16.msra.mxu0 0
        %2409 = vmatprep.subr.bf16.mxu0 0
        %2410 = vmatpush1.bf16.msra.mxu0 0
        %2411 = vmatprep.subr.bf16.mxu0 0
        %2412 = vmatpush1.bf16.msra.mxu0 0
        %2413 = vmatprep.subr.bf16.mxu0 0
        %2414 = vmatpush1.bf16.msra.mxu0 0
        %2415 = vmatprep.subr.bf16.mxu0 0
        %2416 = vmatpush1.bf16.msra.mxu0 0
        %2417 = vmatprep.subr.bf16.mxu0 0
        %2418 = vmatpush1.bf16.msra.mxu0 0
        %2419 = vmatprep.subr.bf16.mxu0 0
        %2420 = vmatpush1.bf16.msra.mxu0 0
        %2421 = vmatprep.subr.bf16.mxu0 0
        %2422 = vmatpush1.bf16.msra.mxu0 0
        %2423 = vmatprep.subr.bf16.mxu0 0
        %2424 = vmatpush1.bf16.msra.mxu0 0
        %2425 = vmatprep.subr.bf16.mxu0 0
        %2426 = vmatpush1.bf16.msra.mxu0 0
        %2427 = vmatprep.subr.bf16.mxu0 0
        %2428 = vmatpush1.bf16.msra.mxu0 0
        %2429 = vmatprep.subr.bf16.mxu0 0
        %2430 = vmatpush1.bf16.msra.mxu0 0
        %2431 = vmatprep.subr.bf16.mxu0 0
        %2432 = vmatpush1.bf16.msra.mxu0 0
        %2433 = vmatprep.mubr.bf16.mxu0 0
        %2434 = vmatmul.mubr.bf16.gmra.mrb[0].mxu0 %v2396
        %v2435 = vpop.f32.mrb[0].mxu0
        %v2436 = vadd.f32 0.0, %v2435
        %v2437 = vpop.f32.mrb[0].mxu0
        %v2438 = vpop.f32.mrb[0].mxu0
        %v2439 = vpop.f32.mrb[0].mxu0
        %2440 = vdwg.mxu0
        %2441 = vrot.lane.b32.xlu0 %v1237, 112
        %v2442 = vpop.permute.xlu0 %2441
        %v2444 = vsel %vm1239, %v2343, 0
        %v2447 = vsel %vm1475, %v2442, 0
        %2449 = vmatprep.subr.bf16.mxu0 0
        %2450 = vmatpush1.bf16.msra.mxu0 %v2447
        %2451 = vmatprep.subr.bf16.mxu0 0
        %2452 = vmatpush1.bf16.msra.mxu0 0
        %2453 = vmatprep.subr.bf16.mxu0 0
        %2454 = vmatpush1.bf16.msra.mxu0 0
        %2455 = vmatprep.subr.bf16.mxu0 0
        %2456 = vmatpush1.bf16.msra.mxu0 0
        %2457 = vmatprep.subr.bf16.mxu0 0
        %2458 = vmatpush1.bf16.msra.mxu0 0
        %2459 = vmatprep.subr.bf16.mxu0 0
        %2460 = vmatpush1.bf16.msra.mxu0 0
        %2461 = vmatprep.subr.bf16.mxu0 0
        %2462 = vmatpush1.bf16.msra.mxu0 0
        %2463 = vmatprep.subr.bf16.mxu0 0
        %2464 = vmatpush1.bf16.msra.mxu0 0
        %2465 = vmatprep.subr.bf16.mxu0 0
        %2466 = vmatpush1.bf16.msra.mxu0 0
        %2467 = vmatprep.subr.bf16.mxu0 0
        %2468 = vmatpush1.bf16.msra.mxu0 0
        %2469 = vmatprep.subr.bf16.mxu0 0
        %2470 = vmatpush1.bf16.msra.mxu0 0
        %2471 = vmatprep.subr.bf16.mxu0 0
        %2472 = vmatpush1.bf16.msra.mxu0 0
        %2473 = vmatprep.subr.bf16.mxu0 0
        %2474 = vmatpush1.bf16.msra.mxu0 0
        %2475 = vmatprep.subr.bf16.mxu0 0
        %2476 = vmatpush1.bf16.msra.mxu0 0
        %2477 = vmatprep.subr.bf16.mxu0 0
        %2478 = vmatpush1.bf16.msra.mxu0 0
        %2479 = vmatprep.subr.bf16.mxu0 0
        %2480 = vmatpush1.bf16.msra.mxu0 0
        %2481 = vmatprep.mubr.bf16.mxu0 0
        %2482 = vmatmul.mubr.bf16.gmra.mrb[0].mxu0 %v2444
        %v2483 = vpop.f32.mrb[0].mxu0
        %v2484 = vadd.f32 0.0, %v2483
        %v2485 = vpop.f32.mrb[0].mxu0
        %v2486 = vpop.f32.mrb[0].mxu0
        %v2487 = vpop.f32.mrb[0].mxu0
        %2488 = vdwg.mxu0
        %2489 = vrot.lane.b32.xlu0 %v1238, 112
        %v2490 = vpop.permute.xlu0 %2489
        %v2492 = vsel %vm1239, %v2344, 0
        %v2495 = vsel %vm1475, %v2490, 0
        %2497 = vmatprep.subr.bf16.mxu0 0
        %2498 = vmatpush1.bf16.msra.mxu0 %v2495
        %2499 = vmatprep.subr.bf16.mxu0 0
        %2500 = vmatpush1.bf16.msra.mxu0 0
        %2501 = vmatprep.subr.bf16.mxu0 0
        %2502 = vmatpush1.bf16.msra.mxu0 0
        %2503 = vmatprep.subr.bf16.mxu0 0
        %2504 = vmatpush1.bf16.msra.mxu0 0
        %2505 = vmatprep.subr.bf16.mxu0 0
        %2506 = vmatpush1.bf16.msra.mxu0 0
        %2507 = vmatprep.subr.bf16.mxu0 0
        %2508 = vmatpush1.bf16.msra.mxu0 0
        %2509 = vmatprep.subr.bf16.mxu0 0
        %2510 = vmatpush1.bf16.msra.mxu0 0
        %2511 = vmatprep.subr.bf16.mxu0 0
        %2512 = vmatpush1.bf16.msra.mxu0 0
        %2513 = vmatprep.subr.bf16.mxu0 0
        %2514 = vmatpush1.bf16.msra.mxu0 0
        %2515 = vmatprep.subr.bf16.mxu0 0
        %2516 = vmatpush1.bf16.msra.mxu0 0
        %2517 = vmatprep.subr.bf16.mxu0 0
        %2518 = vmatpush1.bf16.msra.mxu0 0
        %2519 = vmatprep.subr.bf16.mxu0 0
        %2520 = vmatpush1.bf16.msra.mxu0 0
        %2521 = vmatprep.subr.bf16.mxu0 0
        %2522 = vmatpush1.bf16.msra.mxu0 0
        %2523 = vmatprep.subr.bf16.mxu0 0
        %2524 = vmatpush1.bf16.msra.mxu0 0
        %2525 = vmatprep.subr.bf16.mxu0 0
        %2526 = vmatpush1.bf16.msra.mxu0 0
        %2527 = vmatprep.subr.bf16.mxu0 0
        %2528 = vmatpush1.bf16.msra.mxu0 0
        %2529 = vmatprep.mubr.bf16.mxu0 0
        %2530 = vmatmul.mubr.bf16.gmra.mrb[0].mxu0 %v2492
        %v2531 = vpop.f32.mrb[0].mxu0
        %v2532 = vadd.f32 0.0, %v2531
        %v2533 = vpop.f32.mrb[0].mxu0
        %v2534 = vpop.f32.mrb[0].mxu0
        %v2535 = vpop.f32.mrb[0].mxu0
        %2536 = vdwg.mxu0
        %2537 = vrot.lane.b32.xlu0 %v1211, 104
        %v2538 = vpop.permute.xlu0 %2537
        %2539 = vrot.lane.b32.xlu0 %v1223, 104
        %v2540 = vpop.permute.xlu0 %2539
        %v2542 = vsel %vm1239, %v2538, 0
        %v2545 = vsel %vm1239, %v2540, 0
        %2547 = vmatprep.subr.bf16.mxu0 0
        %2548 = vmatpush1.bf16.xpose.msra.mxu0 %v2545
        %2549 = vmatprep.subr.bf16.mxu0 0
        %2550 = vmatpush1.bf16.xpose.msra.mxu0 0
        %2551 = vmatprep.subr.bf16.mxu0 0
        %2552 = vmatpush1.bf16.xpose.msra.mxu0 0
        %2553 = vmatprep.subr.bf16.mxu0 0
        %2554 = vmatpush1.bf16.xpose.msra.mxu0 0
        %2555 = vmatprep.subr.bf16.mxu0 0
        %2556 = vmatpush1.bf16.xpose.msra.mxu0 0
        %2557 = vmatprep.subr.bf16.mxu0 0
        %2558 = vmatpush1.bf16.xpose.msra.mxu0 0
        %2559 = vmatprep.subr.bf16.mxu0 0
        %2560 = vmatpush1.bf16.xpose.msra.mxu0 0
        %2561 = vmatprep.subr.bf16.mxu0 0
        %2562 = vmatpush1.bf16.xpose.msra.mxu0 0
        %2563 = vmatprep.subr.bf16.mxu0 0
        %2564 = vmatpush1.bf16.xpose.msra.mxu0 0
        %2565 = vmatprep.subr.bf16.mxu0 0
        %2566 = vmatpush1.bf16.xpose.msra.mxu0 0
        %2567 = vmatprep.subr.bf16.mxu0 0
        %2568 = vmatpush1.bf16.xpose.msra.mxu0 0
        %2569 = vmatprep.subr.bf16.mxu0 0
        %2570 = vmatpush1.bf16.xpose.msra.mxu0 0
        %2571 = vmatprep.subr.bf16.mxu0 0
        %2572 = vmatpush1.bf16.xpose.msra.mxu0 0
        %2573 = vmatprep.subr.bf16.mxu0 0
        %2574 = vmatpush1.bf16.xpose.msra.mxu0 0
        %2575 = vmatprep.subr.bf16.mxu0 0
        %2576 = vmatpush1.bf16.xpose.msra.mxu0 0
        %2577 = vmatprep.subr.bf16.mxu0 0
        %2578 = vmatpush1.bf16.xpose.msra.mxu0 0
        %2579 = vmatprep.mubr.bf16.mxu0 0
        %2580 = vmatmul.mubr.bf16.gmra.mrb[0].mxu0 %v2542
        %v2581 = vpop.f32.mrb[0].mxu0
        %v2582 = vadd.f32 %v1202, %v2581
        %v2583 = vpop.f32.mrb[0].mxu0
        %v2584 = vpop.f32.mrb[0].mxu0
        %v2585 = vpop.f32.mrb[0].mxu0
        %2586 = vdwg.mxu0
        %2587 = vrot.lane.b32.xlu0 %v1212, 104
        %v2588 = vpop.permute.xlu0 %2587
        %2589 = vrot.lane.b32.xlu0 %v1224, 104
        %v2590 = vpop.permute.xlu0 %2589
        %v2592 = vsel %vm1239, %v2588, 0
        %v2595 = vsel %vm1239, %v2590, 0
        %2597 = vmatprep.subr.bf16.mxu0 0
        %2598 = vmatpush1.bf16.xpose.msra.mxu0 %v2595
        %2599 = vmatprep.subr.bf16.mxu0 0
        %2600 = vmatpush1.bf16.xpose.msra.mxu0 0
        %2601 = vmatprep.subr.bf16.mxu0 0
        %2602 = vmatpush1.bf16.xpose.msra.mxu0 0
        %2603 = vmatprep.subr.bf16.mxu0 0
        %2604 = vmatpush1.bf16.xpose.msra.mxu0 0
        %2605 = vmatprep.subr.bf16.mxu0 0
        %2606 = vmatpush1.bf16.xpose.msra.mxu0 0
        %2607 = vmatprep.subr.bf16.mxu0 0
        %2608 = vmatpush1.bf16.xpose.msra.mxu0 0
        %2609 = vmatprep.subr.bf16.mxu0 0
        %2610 = vmatpush1.bf16.xpose.msra.mxu0 0
        %2611 = vmatprep.subr.bf16.mxu0 0
        %2612 = vmatpush1.bf16.xpose.msra.mxu0 0
        %2613 = vmatprep.subr.bf16.mxu0 0
        %2614 = vmatpush1.bf16.xpose.msra.mxu0 0
        %2615 = vmatprep.subr.bf16.mxu0 0
        %2616 = vmatpush1.bf16.xpose.msra.mxu0 0
        %2617 = vmatprep.subr.bf16.mxu0 0
        %2618 = vmatpush1.bf16.xpose.msra.mxu0 0
        %2619 = vmatprep.subr.bf16.mxu0 0
        %2620 = vmatpush1.bf16.xpose.msra.mxu0 0
        %2621 = vmatprep.subr.bf16.mxu0 0
        %2622 = vmatpush1.bf16.xpose.msra.mxu0 0
        %2623 = vmatprep.subr.bf16.mxu0 0
        %2624 = vmatpush1.bf16.xpose.msra.mxu0 0
        %2625 = vmatprep.subr.bf16.mxu0 0
        %2626 = vmatpush1.bf16.xpose.msra.mxu0 0
        %2627 = vmatprep.subr.bf16.mxu0 0
        %2628 = vmatpush1.bf16.xpose.msra.mxu0 0
        %2629 = vmatprep.mubr.bf16.mxu0 0
        %2630 = vmatmul.mubr.bf16.gmra.mrb[0].mxu0 %v2592
        %v2631 = vpop.f32.mrb[0].mxu0
        %v2632 = vadd.f32 %v1202, %v2631
        %v2633 = vpop.f32.mrb[0].mxu0
        %v2634 = vpop.f32.mrb[0].mxu0
        %v2635 = vpop.f32.mrb[0].mxu0
        %2636 = vdwg.mxu0
        %2637 = vrot.lane.b32.xlu0 %v1213, 104
        %v2638 = vpop.permute.xlu0 %2637
        %2639 = vrot.lane.b32.xlu0 %v1225, 104
        %v2640 = vpop.permute.xlu0 %2639
        %v2642 = vsel %vm1239, %v2638, 0
        %v2645 = vsel %vm1239, %v2640, 0
        %2647 = vmatprep.subr.bf16.mxu0 0
        %2648 = vmatpush1.bf16.xpose.msra.mxu0 %v2645
        %2649 = vmatprep.subr.bf16.mxu0 0
        %2650 = vmatpush1.bf16.xpose.msra.mxu0 0
        %2651 = vmatprep.subr.bf16.mxu0 0
        %2652 = vmatpush1.bf16.xpose.msra.mxu0 0
        %2653 = vmatprep.subr.bf16.mxu0 0
        %2654 = vmatpush1.bf16.xpose.msra.mxu0 0
        %2655 = vmatprep.subr.bf16.mxu0 0
        %2656 = vmatpush1.bf16.xpose.msra.mxu0 0
        %2657 = vmatprep.subr.bf16.mxu0 0
        %2658 = vmatpush1.bf16.xpose.msra.mxu0 0
        %2659 = vmatprep.subr.bf16.mxu0 0
        %2660 = vmatpush1.bf16.xpose.msra.mxu0 0
        %2661 = vmatprep.subr.bf16.mxu0 0
        %2662 = vmatpush1.bf16.xpose.msra.mxu0 0
        %2663 = vmatprep.subr.bf16.mxu0 0
        %2664 = vmatpush1.bf16.xpose.msra.mxu0 0
        %2665 = vmatprep.subr.bf16.mxu0 0
        %2666 = vmatpush1.bf16.xpose.msra.mxu0 0
        %2667 = vmatprep.subr.bf16.mxu0 0
        %2668 = vmatpush1.bf16.xpose.msra.mxu0 0
        %2669 = vmatprep.subr.bf16.mxu0 0
        %2670 = vmatpush1.bf16.xpose.msra.mxu0 0
        %2671 = vmatprep.subr.bf16.mxu0 0
        %2672 = vmatpush1.bf16.xpose.msra.mxu0 0
        %2673 = vmatprep.subr.bf16.mxu0 0
        %2674 = vmatpush1.bf16.xpose.msra.mxu0 0
        %2675 = vmatprep.subr.bf16.mxu0 0
        %2676 = vmatpush1.bf16.xpose.msra.mxu0 0
        %2677 = vmatprep.subr.bf16.mxu0 0
        %2678 = vmatpush1.bf16.xpose.msra.mxu0 0
        %2679 = vmatprep.mubr.bf16.mxu0 0
        %2680 = vmatmul.mubr.bf16.gmra.mrb[0].mxu0 %v2642
        %v2681 = vpop.f32.mrb[0].mxu0
        %v2682 = vadd.f32 %v1202, %v2681
        %v2683 = vpop.f32.mrb[0].mxu0
        %v2684 = vpop.f32.mrb[0].mxu0
        %v2685 = vpop.f32.mrb[0].mxu0
        %2686 = vdwg.mxu0
        %2687 = vrot.lane.b32.xlu0 %v1214, 104
        %v2688 = vpop.permute.xlu0 %2687
        %2689 = vrot.lane.b32.xlu0 %v1226, 104
        %v2690 = vpop.permute.xlu0 %2689
        %v2692 = vsel %vm1239, %v2688, 0
        %v2695 = vsel %vm1239, %v2690, 0
        %2697 = vmatprep.subr.bf16.mxu0 0
        %2698 = vmatpush1.bf16.xpose.msra.mxu0 %v2695
        %2699 = vmatprep.subr.bf16.mxu0 0
        %2700 = vmatpush1.bf16.xpose.msra.mxu0 0
        %2701 = vmatprep.subr.bf16.mxu0 0
        %2702 = vmatpush1.bf16.xpose.msra.mxu0 0
        %2703 = vmatprep.subr.bf16.mxu0 0
        %2704 = vmatpush1.bf16.xpose.msra.mxu0 0
        %2705 = vmatprep.subr.bf16.mxu0 0
        %2706 = vmatpush1.bf16.xpose.msra.mxu0 0
        %2707 = vmatprep.subr.bf16.mxu0 0
        %2708 = vmatpush1.bf16.xpose.msra.mxu0 0
        %2709 = vmatprep.subr.bf16.mxu0 0
        %2710 = vmatpush1.bf16.xpose.msra.mxu0 0
        %2711 = vmatprep.subr.bf16.mxu0 0
        %2712 = vmatpush1.bf16.xpose.msra.mxu0 0
        %2713 = vmatprep.subr.bf16.mxu0 0
        %2714 = vmatpush1.bf16.xpose.msra.mxu0 0
        %2715 = vmatprep.subr.bf16.mxu0 0
        %2716 = vmatpush1.bf16.xpose.msra.mxu0 0
        %2717 = vmatprep.subr.bf16.mxu0 0
        %2718 = vmatpush1.bf16.xpose.msra.mxu0 0
        %2719 = vmatprep.subr.bf16.mxu0 0
        %2720 = vmatpush1.bf16.xpose.msra.mxu0 0
        %2721 = vmatprep.subr.bf16.mxu0 0
        %2722 = vmatpush1.bf16.xpose.msra.mxu0 0
        %2723 = vmatprep.subr.bf16.mxu0 0
        %2724 = vmatpush1.bf16.xpose.msra.mxu0 0
        %2725 = vmatprep.subr.bf16.mxu0 0
        %2726 = vmatpush1.bf16.xpose.msra.mxu0 0
        %2727 = vmatprep.subr.bf16.mxu0 0
        %2728 = vmatpush1.bf16.xpose.msra.mxu0 0
        %2729 = vmatprep.mubr.bf16.mxu0 0
        %2730 = vmatmul.mubr.bf16.gmra.mrb[0].mxu0 %v2692
        %v2731 = vpop.f32.mrb[0].mxu0
        %v2732 = vadd.f32 %v1202, %v2731
        %v2733 = vpop.f32.mrb[0].mxu0
        %v2734 = vpop.f32.mrb[0].mxu0
        %v2735 = vpop.f32.mrb[0].mxu0
        %2736 = vdwg.mxu0
        %v2737 = vsel %vm1239, %v2582, -inf
        %2738 = vmax.xlane.f32.xlu0 %v2737
        %v2739 = vpop.xlane.xlu0 %2738
        %v2740 = vsel %vm1239, %v2632, -inf
        %2741 = vmax.xlane.f32.xlu0 %v2740
        %v2742 = vpop.xlane.xlu0 %2741
        %v2743 = vsel %vm1239, %v2682, -inf
        %2744 = vmax.xlane.f32.xlu0 %v2743
        %v2745 = vpop.xlane.xlu0 %2744
        %v2746 = vsel %vm1239, %v2732, -inf
        %2747 = vmax.xlane.f32.xlu0 %v2746
        %v2748 = vpop.xlane.xlu0 %2747
        %v2749 = vsub.f32 %v2582, %v2739
        %v2750 = vsub.f32 %v2632, %v2742
        %v2751 = vsub.f32 %v2682, %v2745
        %v2752 = vsub.f32 %v2732, %v2748
        %v2753 = vmul.f32 %v2749, 1.442695
        %v2754 = vpow.pop %v2753
        %v2755 = vmul.f32 %v2750, 1.442695
        %v2756 = vpow.pop %v2755
        %v2757 = vmul.f32 %v2751, 1.442695
        %v2758 = vpow.pop %v2757
        %v2759 = vmul.f32 %v2752, 1.442695
        %v2760 = vpow.pop %v2759
        %v2761 = vsel %vm1239, %v2754, 0.0
        %2762 = vadd.xlane.f32.xlu0 %v2761
        %v2763 = vpop.xlane.xlu0 %2762
        %v2764 = vsel %vm1239, %v2756, 0.0
        %2765 = vadd.xlane.f32.xlu0 %v2764
        %v2766 = vpop.xlane.xlu0 %2765
        %v2767 = vsel %vm1239, %v2758, 0.0
        %2768 = vadd.xlane.f32.xlu0 %v2767
        %v2769 = vpop.xlane.xlu0 %2768
        %v2770 = vsel %vm1239, %v2760, 0.0
        %2771 = vadd.xlane.f32.xlu0 %v2770
        %v2772 = vpop.xlane.xlu0 %2771
        %v2773 = vrcp.pop %v2763
        %v2774 = vrcp.pop %v2766
        %v2775 = vrcp.pop %v2769
        %v2776 = vrcp.pop %v2772
        %v2777 = vmul.f32 %v2754, %v2773
        %v2778 = vmul.f32 %v2756, %v2774
        %v2779 = vmul.f32 %v2758, %v2775
        %v2780 = vmul.f32 %v2760, %v2776
        %v2781 = vpack.c.bf16 %v2777, %v2777
        %v2782 = vpack.c.bf16 %v2778, %v2778
        %v2783 = vpack.c.bf16 %v2779, %v2779
        %v2784 = vpack.c.bf16 %v2780, %v2780
        %2785 = vrot.lane.b32.xlu0 %v1235, 104
        %v2786 = vpop.permute.xlu0 %2785
        %v2788 = vsel %vm1239, %v2781, 0
        %v2791 = vsel %vm1475, %v2786, 0
        %2793 = vmatprep.subr.bf16.mxu0 0
        %2794 = vmatpush1.bf16.msra.mxu0 %v2791
        %2795 = vmatprep.subr.bf16.mxu0 0
        %2796 = vmatpush1.bf16.msra.mxu0 0
        %2797 = vmatprep.subr.bf16.mxu0 0
        %2798 = vmatpush1.bf16.msra.mxu0 0
        %2799 = vmatprep.subr.bf16.mxu0 0
        %2800 = vmatpush1.bf16.msra.mxu0 0
        %2801 = vmatprep.subr.bf16.mxu0 0
        %2802 = vmatpush1.bf16.msra.mxu0 0
        %2803 = vmatprep.subr.bf16.mxu0 0
        %2804 = vmatpush1.bf16.msra.mxu0 0
        %2805 = vmatprep.subr.bf16.mxu0 0
        %2806 = vmatpush1.bf16.msra.mxu0 0
        %2807 = vmatprep.subr.bf16.mxu0 0
        %2808 = vmatpush1.bf16.msra.mxu0 0
        %2809 = vmatprep.subr.bf16.mxu0 0
        %2810 = vmatpush1.bf16.msra.mxu0 0
        %2811 = vmatprep.subr.bf16.mxu0 0
        %2812 = vmatpush1.bf16.msra.mxu0 0
        %2813 = vmatprep.subr.bf16.mxu0 0
        %2814 = vmatpush1.bf16.msra.mxu0 0
        %2815 = vmatprep.subr.bf16.mxu0 0
        %2816 = vmatpush1.bf16.msra.mxu0 0
        %2817 = vmatprep.subr.bf16.mxu0 0
        %2818 = vmatpush1.bf16.msra.mxu0 0
        %2819 = vmatprep.subr.bf16.mxu0 0
        %2820 = vmatpush1.bf16.msra.mxu0 0
        %2821 = vmatprep.subr.bf16.mxu0 0
        %2822 = vmatpush1.bf16.msra.mxu0 0
        %2823 = vmatprep.subr.bf16.mxu0 0
        %2824 = vmatpush1.bf16.msra.mxu0 0
        %2825 = vmatprep.mubr.bf16.mxu0 0
        %2826 = vmatmul.mubr.bf16.gmra.mrb[0].mxu0 %v2788
        %v2827 = vpop.f32.mrb[0].mxu0
        %v2828 = vadd.f32 0.0, %v2827
        %v2829 = vpop.f32.mrb[0].mxu0
        %v2830 = vpop.f32.mrb[0].mxu0
        %v2831 = vpop.f32.mrb[0].mxu0
        %2832 = vdwg.mxu0
        %2833 = vrot.lane.b32.xlu0 %v1236, 104
        %v2834 = vpop.permute.xlu0 %2833
        %v2836 = vsel %vm1239, %v2782, 0
        %v2839 = vsel %vm1475, %v2834, 0
        %2841 = vmatprep.subr.bf16.mxu0 0
        %2842 = vmatpush1.bf16.msra.mxu0 %v2839
        %2843 = vmatprep.subr.bf16.mxu0 0
        %2844 = vmatpush1.bf16.msra.mxu0 0
        %2845 = vmatprep.subr.bf16.mxu0 0
        %2846 = vmatpush1.bf16.msra.mxu0 0
        %2847 = vmatprep.subr.bf16.mxu0 0
        %2848 = vmatpush1.bf16.msra.mxu0 0
        %2849 = vmatprep.subr.bf16.mxu0 0
        %2850 = vmatpush1.bf16.msra.mxu0 0
        %2851 = vmatprep.subr.bf16.mxu0 0
        %2852 = vmatpush1.bf16.msra.mxu0 0
        %2853 = vmatprep.subr.bf16.mxu0 0
        %2854 = vmatpush1.bf16.msra.mxu0 0
        %2855 = vmatprep.subr.bf16.mxu0 0
        %2856 = vmatpush1.bf16.msra.mxu0 0
        %2857 = vmatprep.subr.bf16.mxu0 0
        %2858 = vmatpush1.bf16.msra.mxu0 0
        %2859 = vmatprep.subr.bf16.mxu0 0
        %2860 = vmatpush1.bf16.msra.mxu0 0
        %2861 = vmatprep.subr.bf16.mxu0 0
        %2862 = vmatpush1.bf16.msra.mxu0 0
        %2863 = vmatprep.subr.bf16.mxu0 0
        %2864 = vmatpush1.bf16.msra.mxu0 0
        %2865 = vmatprep.subr.bf16.mxu0 0
        %2866 = vmatpush1.bf16.msra.mxu0 0
        %2867 = vmatprep.subr.bf16.mxu0 0
        %2868 = vmatpush1.bf16.msra.mxu0 0
        %2869 = vmatprep.subr.bf16.mxu0 0
        %2870 = vmatpush1.bf16.msra.mxu0 0
        %2871 = vmatprep.subr.bf16.mxu0 0
        %2872 = vmatpush1.bf16.msra.mxu0 0
        %2873 = vmatprep.mubr.bf16.mxu0 0
        %2874 = vmatmul.mubr.bf16.gmra.mrb[0].mxu0 %v2836
        %v2875 = vpop.f32.mrb[0].mxu0
        %v2876 = vadd.f32 0.0, %v2875
        %v2877 = vpop.f32.mrb[0].mxu0
        %v2878 = vpop.f32.mrb[0].mxu0
        %v2879 = vpop.f32.mrb[0].mxu0
        %2880 = vdwg.mxu0
        %2881 = vrot.lane.b32.xlu0 %v1237, 104
        %v2882 = vpop.permute.xlu0 %2881
        %v2884 = vsel %vm1239, %v2783, 0
        %v2887 = vsel %vm1475, %v2882, 0
        %2889 = vmatprep.subr.bf16.mxu0 0
        %2890 = vmatpush1.bf16.msra.mxu0 %v2887
        %2891 = vmatprep.subr.bf16.mxu0 0
        %2892 = vmatpush1.bf16.msra.mxu0 0
        %2893 = vmatprep.subr.bf16.mxu0 0
        %2894 = vmatpush1.bf16.msra.mxu0 0
        %2895 = vmatprep.subr.bf16.mxu0 0
        %2896 = vmatpush1.bf16.msra.mxu0 0
        %2897 = vmatprep.subr.bf16.mxu0 0
        %2898 = vmatpush1.bf16.msra.mxu0 0
        %2899 = vmatprep.subr.bf16.mxu0 0
        %2900 = vmatpush1.bf16.msra.mxu0 0
        %2901 = vmatprep.subr.bf16.mxu0 0
        %2902 = vmatpush1.bf16.msra.mxu0 0
        %2903 = vmatprep.subr.bf16.mxu0 0
        %2904 = vmatpush1.bf16.msra.mxu0 0
        %2905 = vmatprep.subr.bf16.mxu0 0
        %2906 = vmatpush1.bf16.msra.mxu0 0
        %2907 = vmatprep.subr.bf16.mxu0 0
        %2908 = vmatpush1.bf16.msra.mxu0 0
        %2909 = vmatprep.subr.bf16.mxu0 0
        %2910 = vmatpush1.bf16.msra.mxu0 0
        %2911 = vmatprep.subr.bf16.mxu0 0
        %2912 = vmatpush1.bf16.msra.mxu0 0
        %2913 = vmatprep.subr.bf16.mxu0 0
        %2914 = vmatpush1.bf16.msra.mxu0 0
        %2915 = vmatprep.subr.bf16.mxu0 0
        %2916 = vmatpush1.bf16.msra.mxu0 0
        %2917 = vmatprep.subr.bf16.mxu0 0
        %2918 = vmatpush1.bf16.msra.mxu0 0
        %2919 = vmatprep.subr.bf16.mxu0 0
        %2920 = vmatpush1.bf16.msra.mxu0 0
        %2921 = vmatprep.mubr.bf16.mxu0 0
        %2922 = vmatmul.mubr.bf16.gmra.mrb[0].mxu0 %v2884
        %v2923 = vpop.f32.mrb[0].mxu0
        %v2924 = vadd.f32 0.0, %v2923
        %v2925 = vpop.f32.mrb[0].mxu0
        %v2926 = vpop.f32.mrb[0].mxu0
        %v2927 = vpop.f32.mrb[0].mxu0
        %2928 = vdwg.mxu0
        %2929 = vrot.lane.b32.xlu0 %v1238, 104
        %v2930 = vpop.permute.xlu0 %2929
        %v2932 = vsel %vm1239, %v2784, 0
        %v2935 = vsel %vm1475, %v2930, 0
        %2937 = vmatprep.subr.bf16.mxu0 0
        %2938 = vmatpush1.bf16.msra.mxu0 %v2935
        %2939 = vmatprep.subr.bf16.mxu0 0
        %2940 = vmatpush1.bf16.msra.mxu0 0
        %2941 = vmatprep.subr.bf16.mxu0 0
        %2942 = vmatpush1.bf16.msra.mxu0 0
        %2943 = vmatprep.subr.bf16.mxu0 0
        %2944 = vmatpush1.bf16.msra.mxu0 0
        %2945 = vmatprep.subr.bf16.mxu0 0
        %2946 = vmatpush1.bf16.msra.mxu0 0
        %2947 = vmatprep.subr.bf16.mxu0 0
        %2948 = vmatpush1.bf16.msra.mxu0 0
        %2949 = vmatprep.subr.bf16.mxu0 0
        %2950 = vmatpush1.bf16.msra.mxu0 0
        %2951 = vmatprep.subr.bf16.mxu0 0
        %2952 = vmatpush1.bf16.msra.mxu0 0
        %2953 = vmatprep.subr.bf16.mxu0 0
        %2954 = vmatpush1.bf16.msra.mxu0 0
        %2955 = vmatprep.subr.bf16.mxu0 0
        %2956 = vmatpush1.bf16.msra.mxu0 0
        %2957 = vmatprep.subr.bf16.mxu0 0
        %2958 = vmatpush1.bf16.msra.mxu0 0
        %2959 = vmatprep.subr.bf16.mxu0 0
        %2960 = vmatpush1.bf16.msra.mxu0 0
        %2961 = vmatprep.subr.bf16.mxu0 0
        %2962 = vmatpush1.bf16.msra.mxu0 0
        %2963 = vmatprep.subr.bf16.mxu0 0
        %2964 = vmatpush1.bf16.msra.mxu0 0
        %2965 = vmatprep.subr.bf16.mxu0 0
        %2966 = vmatpush1.bf16.msra.mxu0 0
        %2967 = vmatprep.subr.bf16.mxu0 0
        %2968 = vmatpush1.bf16.msra.mxu0 0
        %2969 = vmatprep.mubr.bf16.mxu0 0
        %2970 = vmatmul.mubr.bf16.gmra.mrb[0].mxu0 %v2932
        %v2971 = vpop.f32.mrb[0].mxu0
        %v2972 = vadd.f32 0.0, %v2971
        %v2973 = vpop.f32.mrb[0].mxu0
        %v2974 = vpop.f32.mrb[0].mxu0
        %v2975 = vpop.f32.mrb[0].mxu0
        %2976 = vdwg.mxu0
        %2981 = vrot.lane.b32.xlu0 %v1948, 8
        %v2982 = vpop.permute.xlu0 %2981
        %2983 = vrot.lane.b32.xlu0 %v1996, 8
        %v2984 = vpop.permute.xlu0 %2983
        %2985 = vrot.lane.b32.xlu0 %v2044, 8
        %v2986 = vpop.permute.xlu0 %2985
        %2987 = vrot.lane.b32.xlu0 %v2092, 8
        %v2988 = vpop.permute.xlu0 %2987
        %2997 = vrot.lane.b32.xlu0 %v2388, 16
        %v2998 = vpop.permute.xlu0 %2997
        %2999 = vrot.lane.b32.xlu0 %v2436, 16
        %v3000 = vpop.permute.xlu0 %2999
        %3001 = vrot.lane.b32.xlu0 %v2484, 16
        %v3002 = vpop.permute.xlu0 %3001
        %3003 = vrot.lane.b32.xlu0 %v2532, 16
        %v3004 = vpop.permute.xlu0 %3003
        %3013 = vrot.lane.b32.xlu0 %v2828, 24
        %v3014 = vpop.permute.xlu0 %3013
        %3015 = vrot.lane.b32.xlu0 %v2876, 24
        %v3016 = vpop.permute.xlu0 %3015
        %3017 = vrot.lane.b32.xlu0 %v2924, 24
        %v3018 = vpop.permute.xlu0 %3017
        %3019 = vrot.lane.b32.xlu0 %v2972, 24
        %v3020 = vpop.permute.xlu0 %3019
        %v3025 = vsel %vm1239, %v1514, %v2982
        %v3026 = vsel %vm1239, %v1560, %v2984
        %v3027 = vsel %vm1239, %v1606, %v2986
        %v3028 = vsel %vm1239, %v1652, %v2988
        %vm3029 = vcmask 130048
        %v3030 = vsel %vm3029, %v3025, %v2998
        %v3031 = vsel %vm3029, %v3026, %v3000
        %v3032 = vsel %vm3029, %v3027, %v3002
        %v3033 = vsel %vm3029, %v3028, %v3004
        %vm3034 = vcmask 195584
        %v3035 = vsel %vm3034, %v3030, %v3014
        %v3036 = vsel %vm3034, %v3031, %v3016
        %v3037 = vsel %vm3034, %v3032, %v3018
        %v3038 = vsel %vm3034, %v3033, %v3020
        %v3039 = vpack.c.bf16 %v3036, %v3035
        %v3040 = vpack.c.bf16 %v3038, %v3037
        %v3041 = vld [vmem:[%s895] sm:$0xf]
        %v3042 = vld [vmem:[%s895 + $0x4] sm:$0xf]
        %v3043 = vld [vmem:[%s895 + $0x8] sm:$0xf]
        %v3044 = vld [vmem:[%s895 + $0xc] sm:$0xf]
        %v3045 = vld [vmem:[%s898] sm:$0x1]
        %v3047 = vlaneseq
        %v3048 = vshrl.u32 %v3047, 7
        %v3049 = vsub.s32 0, %v3048
        %v3050 = vrot.slane %v3045, %v3049
        %v3056 = vunpack.c.l.b16 %v3041
        %v3057 = vunpack.c.l.b16 %v3042
        %v3058 = vunpack.c.l.b16 %v3043
        %v3059 = vunpack.c.l.b16 %v3044
        %v3060 = vpack.c.b16 %v3057, %v3056
        %v3061 = vpack.c.b16 %v3059, %v3058
        %v3065 = vsel %vm998, %v3039, 0
        %v3068 = vsel %vm998, %v3040, 0
        %3070 = vmatprep.subr.bf16.mxu0 0
        %3071 = vmatpush1.bf16.msra.mxu0 %v3060
        %3072 = vmatprep.subr.bf16.mxu0 0
        %3073 = vmatpush1.bf16.msra.mxu0 %v3061
        %3074 = vmatprep.subr.bf16.mxu0 0
        %3075 = vmatpush1.bf16.msra.mxu0 0
        %3076 = vmatprep.subr.bf16.mxu0 0
        %3077 = vmatpush1.bf16.msra.mxu0 0
        %3078 = vmatprep.subr.bf16.mxu0 0
        %3079 = vmatpush1.bf16.msra.mxu0 0
        %3080 = vmatprep.subr.bf16.mxu0 0
        %3081 = vmatpush1.bf16.msra.mxu0 0
        %3082 = vmatprep.subr.bf16.mxu0 0
        %3083 = vmatpush1.bf16.msra.mxu0 0
        %3084 = vmatprep.subr.bf16.mxu0 0
        %3085 = vmatpush1.bf16.msra.mxu0 0
        %3086 = vmatprep.subr.bf16.mxu0 0
        %3087 = vmatpush1.bf16.msra.mxu0 0
        %3088 = vmatprep.subr.bf16.mxu0 0
        %3089 = vmatpush1.bf16.msra.mxu0 0
        %3090 = vmatprep.subr.bf16.mxu0 0
        %3091 = vmatpush1.bf16.msra.mxu0 0
        %3092 = vmatprep.subr.bf16.mxu0 0
        %3093 = vmatpush1.bf16.msra.mxu0 0
        %3094 = vmatprep.subr.bf16.mxu0 0
        %3095 = vmatpush1.bf16.msra.mxu0 0
        %3096 = vmatprep.subr.bf16.mxu0 0
        %3097 = vmatpush1.bf16.msra.mxu0 0
        %3098 = vmatprep.subr.bf16.mxu0 0
        %3099 = vmatpush1.bf16.msra.mxu0 0
        %3100 = vmatprep.subr.bf16.mxu0 0
        %3101 = vmatpush1.bf16.msra.mxu0 0
        %3102 = vmatprep.mubr.bf16.mxu0 0
        %3103 = vmatmul.mubr.bf16.gmra.mrb[0].mxu0 %v3065
        %v3104 = vpop.f32.mrb[0].mxu0
        %v3105 = vadd.f32 %v3050, %v3104
        %v3106 = vpop.f32.mrb[0].mxu0
        %v3107 = vpop.f32.mrb[0].mxu0
        %v3108 = vadd.f32 %v3050, %v3107
        %v3109 = vpop.f32.mrb[0].mxu0
        %3110 = vmatprep.mubr.bf16.mxu0 0
        %3111 = vmatmul.mubr.bf16.gmra.mrb[0].mxu0 %v3068
        %v3112 = vpop.f32.mrb[0].mxu0
        %v3113 = vadd.f32 %v3050, %v3112
        %v3114 = vpop.f32.mrb[0].mxu0
        %v3115 = vpop.f32.mrb[0].mxu0
        %v3116 = vadd.f32 %v3050, %v3115
        %v3117 = vpop.f32.mrb[0].mxu0
        %3118 = vdwg.mxu0
        %v3119 = vadd.f32 %v3105, %v969
        %v3120 = vadd.f32 %v3108, %v970
        %v3121 = vadd.f32 %v3113, %v971
        %v3122 = vadd.f32 %v3116, %v972
        %v3123 = vld [vmem:[%s901] sm:$0x1]
        %v3124 = vld [vmem:[%s904] sm:$0x1]
        %v3125 = vsel %vm998, %v3119, 0.0
        %3126 = vadd.xlane.f32.xlu0 %v3125
        %v3127 = vpop.xlane.xlu0 %3126
        %v3128 = vsel %vm998, %v3120, 0.0
        %3129 = vadd.xlane.f32.xlu0 %v3128
        %v3130 = vpop.xlane.xlu0 %3129
        %v3131 = vsel %vm998, %v3121, 0.0
        %3132 = vadd.xlane.f32.xlu0 %v3131
        %v3133 = vpop.xlane.xlu0 %3132
        %v3134 = vsel %vm998, %v3122, 0.0
        %3135 = vadd.xlane.f32.xlu0 %v3134
        %v3136 = vpop.xlane.xlu0 %3135
        %v3137 = vrcp.pop 32.0
        %v3138 = vmul.f32 %v3127, %v3137
        %v3139 = vmul.f32 %v3130, %v3137
        %v3140 = vmul.f32 %v3133, %v3137
        %v3141 = vmul.f32 %v3136, %v3137
        %v3142 = vsub.f32 %v3119, %v3138
        %v3143 = vsub.f32 %v3120, %v3139
        %v3144 = vsub.f32 %v3121, %v3140
        %v3145 = vsub.f32 %v3122, %v3141
        %v3146 = vmul.f32 %v3142, %v3142
        %v3147 = vmul.f32 %v3143, %v3143
        %v3148 = vmul.f32 %v3144, %v3144
        %v3149 = vmul.f32 %v3145, %v3145
        %v3150 = vsel %vm998, %v3146, 0.0
        %3151 = vadd.xlane.f32.xlu0 %v3150
        %v3152 = vpop.xlane.xlu0 %3151
        %v3153 = vsel %vm998, %v3147, 0.0
        %3154 = vadd.xlane.f32.xlu0 %v3153
        %v3155 = vpop.xlane.xlu0 %3154
        %v3156 = vsel %vm998, %v3148, 0.0
        %3157 = vadd.xlane.f32.xlu0 %v3156
        %v3158 = vpop.xlane.xlu0 %3157
        %v3159 = vsel %vm998, %v3149, 0.0
        %3160 = vadd.xlane.f32.xlu0 %v3159
        %v3161 = vpop.xlane.xlu0 %3160
        %v3162 = vmul.f32 %v3152, %v3137
        %v3163 = vmul.f32 %v3155, %v3137
        %v3164 = vmul.f32 %v3158, %v3137
        %v3165 = vmul.f32 %v3161, %v3137
        %v3166 = vadd.f32 %v3162, 1e-05
        %v3167 = vadd.f32 %v3163, 1e-05
        %v3168 = vadd.f32 %v3164, 1e-05
        %v3169 = vadd.f32 %v3165, 1e-05
        %v3170 = vrsqrt.pop %v3166
        %v3171 = vrsqrt.pop %v3167
        %v3172 = vrsqrt.pop %v3168
        %v3173 = vrsqrt.pop %v3169
        %v3174 = vmul.f32 %v3142, %v3170
        %v3175 = vmul.f32 %v3143, %v3171
        %v3176 = vmul.f32 %v3144, %v3172
        %v3177 = vmul.f32 %v3145, %v3173
        %v3179 = vlaneseq
        %v3180 = vshrl.u32 %v3179, 7
        %v3181 = vsub.s32 0, %v3180
        %v3182 = vrot.slane %v3123, %v3181
        %v3184 = vmul.f32 %v3174, %v3182
        %v3185 = vmul.f32 %v3175, %v3182
        %v3186 = vmul.f32 %v3176, %v3182
        %v3187 = vmul.f32 %v3177, %v3182
        %v3189 = vlaneseq
        %v3190 = vshrl.u32 %v3189, 7
        %v3191 = vsub.s32 0, %v3190
        %v3192 = vrot.slane %v3124, %v3191
        %v3194 = vadd.f32 %v3184, %v3192
        %v3195 = vadd.f32 %v3185, %v3192
        %v3196 = vadd.f32 %v3186, %v3192
        %v3197 = vadd.f32 %v3187, %v3192
        %v3198 = vpack.c.bf16 %v3195, %v3194
        %v3199 = vpack.c.bf16 %v3197, %v3196
        %v3200 = vld [vmem:[%s750] sm:$0xf]
        %v3201 = vld [vmem:[%s750 + $0x4] sm:$0xf]
        %v3202 = vld [vmem:[%s750 + $0x8] sm:$0xf]
        %v3203 = vld [vmem:[%s750 + $0xc] sm:$0xf]
        %v3204 = vld [vmem:[%s907] sm:$0x1]
        %v3206 = vlaneseq
        %v3207 = vshrl.u32 %v3206, 7
        %v3208 = vsub.s32 0, %v3207
        %v3209 = vrot.slane %v3204, %v3208
        %v3215 = vunpack.c.l.b16 %v3200
        %v3216 = vunpack.c.l.b16 %v3201
        %v3217 = vunpack.c.l.b16 %v3202
        %v3218 = vunpack.c.l.b16 %v3203
        %v3219 = vpack.c.b16 %v3216, %v3215
        %v3220 = vpack.c.b16 %v3218, %v3217
        %v3224 = vsel %vm998, %v3198, 0
        %v3227 = vsel %vm998, %v3199, 0
        %3229 = vmatprep.subr.bf16.mxu0 0
        %3230 = vmatpush1.bf16.msra.mxu0 %v3219
        %3231 = vmatprep.subr.bf16.mxu0 0
        %3232 = vmatpush1.bf16.msra.mxu0 %v3220
        %3233 = vmatprep.subr.bf16.mxu0 0
        %3234 = vmatpush1.bf16.msra.mxu0 0
        %3235 = vmatprep.subr.bf16.mxu0 0
        %3236 = vmatpush1.bf16.msra.mxu0 0
        %3237 = vmatprep.subr.bf16.mxu0 0
        %3238 = vmatpush1.bf16.msra.mxu0 0
        %3239 = vmatprep.subr.bf16.mxu0 0
        %3240 = vmatpush1.bf16.msra.mxu0 0
        %3241 = vmatprep.subr.bf16.mxu0 0
        %3242 = vmatpush1.bf16.msra.mxu0 0
        %3243 = vmatprep.subr.bf16.mxu0 0
        %3244 = vmatpush1.bf16.msra.mxu0 0
        %3245 = vmatprep.subr.bf16.mxu0 0
        %3246 = vmatpush1.bf16.msra.mxu0 0
        %3247 = vmatprep.subr.bf16.mxu0 0
        %3248 = vmatpush1.bf16.msra.mxu0 0
        %3249 = vmatprep.subr.bf16.mxu0 0
        %3250 = vmatpush1.bf16.msra.mxu0 0
        %3251 = vmatprep.subr.bf16.mxu0 0
        %3252 = vmatpush1.bf16.msra.mxu0 0
        %3253 = vmatprep.subr.bf16.mxu0 0
        %3254 = vmatpush1.bf16.msra.mxu0 0
        %3255 = vmatprep.subr.bf16.mxu0 0
        %3256 = vmatpush1.bf16.msra.mxu0 0
        %3257 = vmatprep.subr.bf16.mxu0 0
        %3258 = vmatpush1.bf16.msra.mxu0 0
        %3259 = vmatprep.subr.bf16.mxu0 0
        %3260 = vmatpush1.bf16.msra.mxu0 0
        %3261 = vmatprep.mubr.bf16.mxu0 0
        %3262 = vmatmul.mubr.bf16.gmra.mrb[0].mxu0 %v3224
        %v3263 = vpop.f32.mrb[0].mxu0
        %v3264 = vadd.f32 %v3209, %v3263
        %v3265 = vpop.f32.mrb[0].mxu0
        %v3266 = vpop.f32.mrb[0].mxu0
        %v3267 = vadd.f32 %v3209, %v3266
        %v3268 = vpop.f32.mrb[0].mxu0
        %3269 = vmatprep.mubr.bf16.mxu0 0
        %3270 = vmatmul.mubr.bf16.gmra.mrb[0].mxu0 %v3227
        %v3271 = vpop.f32.mrb[0].mxu0
        %v3272 = vadd.f32 %v3209, %v3271
        %v3273 = vpop.f32.mrb[0].mxu0
        %v3274 = vpop.f32.mrb[0].mxu0
        %v3275 = vadd.f32 %v3209, %v3274
        %v3276 = vpop.f32.mrb[0].mxu0
        %3277 = vdwg.mxu0
        %v3278 = vmax.f32 %v3264, 0.0
        %v3279 = vmax.f32 %v3267, 0.0
        %v3280 = vmax.f32 %v3272, 0.0
        %v3281 = vmax.f32 %v3275, 0.0
        %v3282 = vpack.c.bf16 %v3279, %v3278
        %v3283 = vpack.c.bf16 %v3281, %v3280
        %v3284 = vld [vmem:[%s912] sm:$0xf]
        %v3285 = vld [vmem:[%s912 + $0x4] sm:$0xf]
        %v3286 = vld [vmem:[%s912 + $0x8] sm:$0xf]
        %v3287 = vld [vmem:[%s912 + $0xc] sm:$0xf]
        %v3288 = vld [vmem:[%s912 + $0x10] sm:$0xf]
        %v3289 = vld [vmem:[%s912 + $0x14] sm:$0xf]
        %v3290 = vld [vmem:[%s912 + $0x18] sm:$0xf]
        %v3291 = vld [vmem:[%s912 + $0x1c] sm:$0xf]
        %v3292 = vld [vmem:[%s912 + $0x20] sm:$0xf]
        %v3293 = vld [vmem:[%s912 + $0x24] sm:$0xf]
        %v3294 = vld [vmem:[%s912 + $0x28] sm:$0xf]
        %v3295 = vld [vmem:[%s912 + $0x2c] sm:$0xf]
        %v3296 = vld [vmem:[%s912 + $0x30] sm:$0xf]
        %v3297 = vld [vmem:[%s912 + $0x34] sm:$0xf]
        %v3298 = vld [vmem:[%s912 + $0x38] sm:$0xf]
        %v3299 = vld [vmem:[%s912 + $0x3c] sm:$0xf]
        %v3300 = vld [vmem:[%s915] sm:$0x1]
        %v3302 = vlaneseq
        %v3303 = vshrl.u32 %v3302, 7
        %v3304 = vsub.s32 0, %v3303
        %v3305 = vrot.slane %v3300, %v3304
        %v3323 = vunpack.c.l.b16 %v3284
        %v3324 = vunpack.c.l.b16 %v3285
        %v3325 = vunpack.c.l.b16 %v3286
        %v3326 = vunpack.c.l.b16 %v3287
        %v3327 = vunpack.c.l.b16 %v3288
        %v3328 = vunpack.c.l.b16 %v3289
        %v3329 = vunpack.c.l.b16 %v3290
        %v3330 = vunpack.c.l.b16 %v3291
        %v3331 = vunpack.c.l.b16 %v3292
        %v3332 = vunpack.c.l.b16 %v3293
        %v3333 = vunpack.c.l.b16 %v3294
        %v3334 = vunpack.c.l.b16 %v3295
        %v3335 = vunpack.c.l.b16 %v3296
        %v3336 = vunpack.c.l.b16 %v3297
        %v3337 = vunpack.c.l.b16 %v3298
        %v3338 = vunpack.c.l.b16 %v3299
        %v3339 = vpack.c.b16 %v3324, %v3323
        %v3340 = vpack.c.b16 %v3326, %v3325
        %v3341 = vpack.c.b16 %v3328, %v3327
        %v3342 = vpack.c.b16 %v3330, %v3329
        %v3343 = vpack.c.b16 %v3332, %v3331
        %v3344 = vpack.c.b16 %v3334, %v3333
        %v3345 = vpack.c.b16 %v3336, %v3335
        %v3346 = vpack.c.b16 %v3338, %v3337
        %3355 = vmatprep.subr.bf16.mxu0 0
        %3356 = vmatpush1.bf16.msra.mxu0 %v3339
        %3357 = vmatprep.subr.bf16.mxu0 0
        %3358 = vmatpush1.bf16.msra.mxu0 %v3340
        %3359 = vmatprep.subr.bf16.mxu0 0
        %3360 = vmatpush1.bf16.msra.mxu0 %v3341
        %3361 = vmatprep.subr.bf16.mxu0 0
        %3362 = vmatpush1.bf16.msra.mxu0 %v3342
        %3363 = vmatprep.subr.bf16.mxu0 0
        %3364 = vmatpush1.bf16.msra.mxu0 %v3343
        %3365 = vmatprep.subr.bf16.mxu0 0
        %3366 = vmatpush1.bf16.msra.mxu0 %v3344
        %3367 = vmatprep.subr.bf16.mxu0 0
        %3368 = vmatpush1.bf16.msra.mxu0 %v3345
        %3369 = vmatprep.subr.bf16.mxu0 0
        %3370 = vmatpush1.bf16.msra.mxu0 %v3346
        %3371 = vmatprep.subr.bf16.mxu0 0
        %3372 = vmatpush1.bf16.msra.mxu0 0
        %3373 = vmatprep.subr.bf16.mxu0 0
        %3374 = vmatpush1.bf16.msra.mxu0 0
        %3375 = vmatprep.subr.bf16.mxu0 0
        %3376 = vmatpush1.bf16.msra.mxu0 0
        %3377 = vmatprep.subr.bf16.mxu0 0
        %3378 = vmatpush1.bf16.msra.mxu0 0
        %3379 = vmatprep.subr.bf16.mxu0 0
        %3380 = vmatpush1.bf16.msra.mxu0 0
        %3381 = vmatprep.subr.bf16.mxu0 0
        %3382 = vmatpush1.bf16.msra.mxu0 0
        %3383 = vmatprep.subr.bf16.mxu0 0
        %3384 = vmatpush1.bf16.msra.mxu0 0
        %3385 = vmatprep.subr.bf16.mxu0 0
        %3386 = vmatpush1.bf16.msra.mxu0 0
        %3387 = vmatprep.mubr.bf16.mxu0 0
        %3388 = vmatmul.mubr.bf16.gmra.mrb[0].mxu0 %v3282
        %v3389 = vpop.f32.mrb[0].mxu0
        %v3390 = vadd.f32 %v3305, %v3389
        %v3391 = vpop.f32.mrb[0].mxu0
        %v3392 = vpop.f32.mrb[0].mxu0
        %v3393 = vadd.f32 %v3305, %v3392
        %v3394 = vpop.f32.mrb[0].mxu0
        %3395 = vmatprep.mubr.bf16.mxu0 0
        %3396 = vmatmul.mubr.bf16.gmra.mrb[0].mxu0 %v3283
        %v3397 = vpop.f32.mrb[0].mxu0
        %v3398 = vadd.f32 %v3305, %v3397
        %v3399 = vpop.f32.mrb[0].mxu0
        %v3400 = vpop.f32.mrb[0].mxu0
        %v3401 = vadd.f32 %v3305, %v3400
        %v3402 = vpop.f32.mrb[0].mxu0
        %3403 = vdwg.mxu0
        %v3404 = vadd.f32 %v3390, %v3194
        %v3405 = vadd.f32 %v3393, %v3195
        %v3406 = vadd.f32 %v3398, %v3196
        %v3407 = vadd.f32 %v3401, %v3197
        %v3408 = vld [vmem:[%s918] sm:$0x1]
        %v3409 = vld [vmem:[%s921] sm:$0x1]
        %v3410 = vsel %vm998, %v3404, 0.0
        %3411 = vadd.xlane.f32.xlu0 %v3410
        %v3412 = vpop.xlane.xlu0 %3411
        %v3413 = vsel %vm998, %v3405, 0.0
        %3414 = vadd.xlane.f32.xlu0 %v3413
        %v3415 = vpop.xlane.xlu0 %3414
        %v3416 = vsel %vm998, %v3406, 0.0
        %3417 = vadd.xlane.f32.xlu0 %v3416
        %v3418 = vpop.xlane.xlu0 %3417
        %v3419 = vsel %vm998, %v3407, 0.0
        %3420 = vadd.xlane.f32.xlu0 %v3419
        %v3421 = vpop.xlane.xlu0 %3420
        %v3422 = vmul.f32 %v3412, %v3137
        %v3423 = vmul.f32 %v3415, %v3137
        %v3424 = vmul.f32 %v3418, %v3137
        %v3425 = vmul.f32 %v3421, %v3137
        %v3426 = vsub.f32 %v3404, %v3422
        %v3427 = vsub.f32 %v3405, %v3423
        %v3428 = vsub.f32 %v3406, %v3424
        %v3429 = vsub.f32 %v3407, %v3425
        %v3430 = vmul.f32 %v3426, %v3426
        %v3431 = vmul.f32 %v3427, %v3427
        %v3432 = vmul.f32 %v3428, %v3428
        %v3433 = vmul.f32 %v3429, %v3429
        %v3434 = vsel %vm998, %v3430, 0.0
        %3435 = vadd.xlane.f32.xlu0 %v3434
        %v3436 = vpop.xlane.xlu0 %3435
        %v3437 = vsel %vm998, %v3431, 0.0
        %3438 = vadd.xlane.f32.xlu0 %v3437
        %v3439 = vpop.xlane.xlu0 %3438
        %v3440 = vsel %vm998, %v3432, 0.0
        %3441 = vadd.xlane.f32.xlu0 %v3440
        %v3442 = vpop.xlane.xlu0 %3441
        %v3443 = vsel %vm998, %v3433, 0.0
        %3444 = vadd.xlane.f32.xlu0 %v3443
        %v3445 = vpop.xlane.xlu0 %3444
        %v3446 = vmul.f32 %v3436, %v3137
        %v3447 = vmul.f32 %v3439, %v3137
        %v3448 = vmul.f32 %v3442, %v3137
        %v3449 = vmul.f32 %v3445, %v3137
        %v3450 = vadd.f32 %v3446, 1e-05
        %v3451 = vadd.f32 %v3447, 1e-05
        %v3452 = vadd.f32 %v3448, 1e-05
        %v3453 = vadd.f32 %v3449, 1e-05
        %v3454 = vrsqrt.pop %v3450
        %v3455 = vrsqrt.pop %v3451
        %v3456 = vrsqrt.pop %v3452
        %v3457 = vrsqrt.pop %v3453
        %v3458 = vmul.f32 %v3426, %v3454
        %v3459 = vmul.f32 %v3427, %v3455
        %v3460 = vmul.f32 %v3428, %v3456
        %v3461 = vmul.f32 %v3429, %v3457
        %v3463 = vlaneseq
        %v3464 = vshrl.u32 %v3463, 7
        %v3465 = vsub.s32 0, %v3464
        %v3466 = vrot.slane %v3408, %v3465
        %v3468 = vmul.f32 %v3458, %v3466
        %v3469 = vmul.f32 %v3459, %v3466
        %v3470 = vmul.f32 %v3460, %v3466
        %v3471 = vmul.f32 %v3461, %v3466
        %v3473 = vlaneseq
        %v3474 = vshrl.u32 %v3473, 7
        %v3475 = vsub.s32 0, %v3474
        %v3476 = vrot.slane %v3409, %v3475
        %v3478 = vadd.f32 %v3468, %v3476
        %v3479 = vadd.f32 %v3469, %v3476
        %v3480 = vadd.f32 %v3470, %v3476
        %v3481 = vadd.f32 %v3471, %v3476
        %3482 = vst.msk [vmem:[#allocation2] sm:$0xff] %vm998, %v3478
        %3483 = vst.msk [vmem:[#allocation2 + $0x8] sm:$0xff] %vm998, %v3479
        %3484 = vst.msk [vmem:[#allocation2 + $0x10] sm:$0xff] %vm998, %v3480
        %3485 = vst.msk [vmem:[#allocation2 + $0x18] sm:$0xff] %vm998, %v3481
        %p3486 = scmp.eq.s32.totalorder %s38, 1
        // Predicated region
        $region113: #{tpu_custom_call.1} parent=95 // pred_check
          %p3487 = pneg %p3486
        $region114: #{tpu_custom_call.1} parent=95 // pred_check_branch
          %3489 = sbr.rel (%p3487) target = $region116
        $region115: #{tpu_custom_call.1} parent=95 // pred_region
          %v3490 = vld [vmem:[#allocation2] sm:$0xff]
          %v3491 = vld [vmem:[#allocation2 + $0x8] sm:$0xff]
          %v3492 = vld [vmem:[#allocation2 + $0x10] sm:$0xff]
          %v3493 = vld [vmem:[#allocation2 + $0x18] sm:$0xff]
          %3494 = vst.msk [vmem:[#allocation9] sm:$0xff] %vm998, %v3490
          %3495 = vst.msk [vmem:[#allocation9 + $0x8] sm:$0xff] %vm998, %v3491
          %3496 = vst.msk [vmem:[#allocation9 + $0x10] sm:$0xff] %vm998, %v3492
          %3497 = vst.msk [vmem:[#allocation9 + $0x18] sm:$0xff] %vm998, %v3493
        $region116: #{tpu_custom_call.1} parent=95 // pred_fallthru
          _
        // Predicated region
        $region117: #{tpu_custom_call.1} parent=95 // pred_check
          %p3498 = pneg %p552
        $region118: #{tpu_custom_call.1} parent=95 // pred_check_branch
          %3500 = sbr.rel (%p3498) target = $region120
        $region119: #{tpu_custom_call.1} parent=95 // pred_region
          %s3501 = smul.u32 4, %s37
          %s3503 = ssub.s32 512, 512
          %3504 = vsyncadd [#allocation5], %s3503
          %s3505 = smul.addr %s3501, 128
          %s3506 = scalar_lea.hbm %s19, %s3505
          %s3507 = sshll.u32 [#allocation9], 4
          %s3508 = int_to_ptr.vmem [resolvable:$true] %s3507
          %3513 = dma.vmem_to_hbm [thread:$0]  %s3508, 512, %s3506, [#allocation5], 128, 128, 8
        $region120: #{tpu_custom_call.1} parent=95 // pred_fallthru
          _
        // Predicated region
        $region121: #{tpu_custom_call.1} parent=95 // pred_check
          %p3514 = pneg %p552
        $region122: #{tpu_custom_call.1} parent=95 // pred_check_branch
          %3516 = sbr.rel (%p3514) target = $region124
        $region123: #{tpu_custom_call.1} parent=95 // pred_region
          %3517 = dma.done [#allocation5], 512
        $region124: #{tpu_custom_call.1} parent=95 // pred_fallthru
          _
      $region96: #{tpu_custom_call.1} parent=5 // pred_fallthru
        _
      %p3518 = scmp.le.s32.totalorder 2, %s28
      // Predicated region
      $region125: #{tpu_custom_call.1} parent=5 // pred_check
        %p3519 = pneg %p3518
      $region126: #{tpu_custom_call.1} parent=5 // pred_check_branch
        %3521 = sbr.rel (%p3519) target = $region128
      $region127: #{tpu_custom_call.1} parent=5 // pred_region
        %s3522 = ssub.s32 %s28, 2
      $region128: #{tpu_custom_call.1} parent=5 // pred_fallthru
        _
    $region6: #{tpu_custom_call.1} parent=1 // loop_footer
      %s32 = sadd.s32 1, %s28
    $region7: #{tpu_custom_call.1} parent=1 // loop_footer_branch
      %27 = sbr.rel target = $region3
    $region8: #{tpu_custom_call.1} parent=1 // loop_exit
      _
    %3523 = vsyncpa [#allocation4], 1
    %s3524 = scalar_lea.sflag [#allocation4], 1
    %3525 = vsyncpa %s3524, 1
    %3526 = vsyncpa [#allocation7], 1
    %3527 = vsyncpa [#allocation5], 1
    %s3528 = scalar_lea.sflag [#allocation5], 1
    %3529 = vsyncpa %s3528, 1

</llo_original>
